<compile_context>
chip_gen: v7x
topology: tpu7x:2x2x1
jax: 0.10.0
libtpu: 0.0.40
codegen_flags: <defaults>
</compile_context>

<pallas_src>
import math
from functools import partial

import jax
import jax.numpy as jnp
from jax import lax
from jax.experimental import pallas as pl
from jax.experimental.pallas import tpu as pltpu

K = 7        # depthwise kernel size
P = 3        # depthwise padding
_INV_SQRT2 = 1.0 / math.sqrt(2.0)


def _make_tap_masks(H, W):
    """(K*K, 1, H*W) f32 masks: mask[t, 0, h*W+w] = 1 iff tap (dh, dw) =
    divmod(t, K) reads an in-image pixel for output position (h, w)."""
    hh = jnp.arange(H)[:, None]
    ww = jnp.arange(W)[None, :]
    rows = []
    for dh in range(K):
        for dw in range(K):
            ok = ((hh + dh - P >= 0) & (hh + dh - P < H) &
                  (ww + dw - P >= 0) & (ww + dw - P < W))
            rows.append(ok.astype(jnp.float32).reshape(1, H * W))
    return jnp.stack(rows, axis=0)


def _auto_batch_block(B, C):
    """Smallest divisor of B such that bt*C fills all 8 sublanes of a vreg."""
    divisors = [d for d in range(1, B + 1) if B % d == 0]
    for d in divisors:
        if (d * C) % 8 == 0:
            return d
    for d in divisors:
        if d * C >= 8:
            return d
    return B


def _danb_kernel(x_ref, w1_ref, b1_ref, wA_ref, dbA_ref, wB_ref, dbB_ref,
                 mask_ref, w2_ref, b2_ref, o_ref, *, Wimg, pad):
    M, HW = x_ref.shape[1], x_ref.shape[2]

    x = x_ref[0]                                        # (M, HW), lane-dense

    # ---- 1x1 conv #1: block-diagonal matmul on the (otherwise idle) MXU ----
    y = jnp.dot(w1_ref[...], x, preferred_element_type=jnp.float32,
                precision=lax.Precision.HIGHEST) + b1_ref[...]

    # Zero lane-padding so every depthwise tap is a static in-bounds slice.
    zpad = jnp.zeros((M, pad), jnp.float32)
    y_wide = jnp.concatenate([zpad, y, zpad], axis=1)   # (M, HW + 2*pad)

    # ---- 7x7 depthwise conv (groups = C, two maps per channel) -------------
    # Per tap: lane-shifted window * per-tap validity mask (lane vector) *
    # per-row weight column.  All bt*C maps share every vector op, so the VPU
    # works on full (M, HW) tiles; weights/masks come from VMEM (no per-tap
    # SMEM scalar splats on the scalar slot).
    accA = jnp.zeros((M, HW), jnp.float32)
    accB = jnp.zeros((M, HW), jnp.float32)
    for t in range(K * K):
        dh, dw = divmod(t, K)
        s = (dh - P) * Wimg + (dw - P)
        win = y_wide[:, pad + s: pad + s + HW]          # (M, HW)
        mwin = win * mask_ref[t]                        # (1, HW) lane mask
        accA = accA + mwin * wA_ref[t]                  # (M, 1) weight column
        accB = accB + mwin * wB_ref[t]
    accA = accA + dbA_ref[...]
    accB = accB + dbB_ref[...]

    # ---- gated activation: exact-erf gelu(A) * sigmoid(B) (erf/exp -> EUP) --
    gelu = 0.5 * accA * (1.0 + lax.erf(accA * _INV_SQRT2))
    g = gelu * jax.nn.sigmoid(accB)

    # ---- 1x1 conv #2: second block-diagonal MXU matmul, lane-dense store ----
    out = jnp.dot(w2_ref[...], g, preferred_element_type=jnp.float32,
                  precision=lax.Precision.HIGHEST) + b2_ref[...]
    o_ref[0] = out.astype(o_ref.dtype)


def dual_adaptive_neural_block(x_nchw, params, *, batch_block=None):
    """x_nchw: (B, C, H, W) f32 (PyTorch layout).  Returns (B, C, H, W) f32.

    params = (w1 (C,C), b1 (C,), wA (C,K*K), dbA (C,), wB (C,K*K), dbB (C,),
              w2 (C,C), b2 (C,)) - repacked PyTorch weights (see __main__).
    """
    B, C, H, W = x_nchw.shape
    HW = H * W
    w1, b1, wA, dbA, wB, dbB, w2, b2 = params

    bt = _auto_batch_block(B, C) if batch_block is None else batch_block
    assert B % bt == 0, (B, bt)
    M = bt * C          # rows per grid step: bt images x C channels (image-major)
    G = B // bt         # grid length ("parallel": v7x splits it over its 2 TCs)

    # Pure reshape - no transposes, no extra HBM layout passes.
    x_flat = x_nchw.reshape(G, M, HW)

    f32 = jnp.float32
    eye = jnp.eye(bt, dtype=f32)
    w1_bd = jnp.kron(eye, w1.astype(f32))                     # (M, M)
    w2_bd = jnp.kron(eye, w2.astype(f32))                     # (M, M)
    b1c = jnp.tile(b1.astype(f32), bt)[:, None]               # (M, 1)
    b2c = jnp.tile(b2.astype(f32), bt)[:, None]
    dbAc = jnp.tile(dbA.astype(f32), bt)[:, None]
    dbBc = jnp.tile(dbB.astype(f32), bt)[:, None]
    wA_tab = jnp.tile(wA.T.astype(f32), (1, bt))[:, :, None]  # (K*K, M, 1)
    wB_tab = jnp.tile(wB.T.astype(f32), (1, bt))[:, :, None]
    mask_tab = _make_tap_masks(H, W)                          # (K*K, 1, HW)

    pad = P * W + P     # max |lane shift| of a tap -> every slice stays in-bounds

    def full_spec(a):
        nd = a.ndim
        return pl.BlockSpec(a.shape, lambda b, _n=nd: (0,) * _n)

    kernel = partial(_danb_kernel, Wimg=W, pad=pad)

    out_flat = pl.pallas_call(
        kernel,
        out_shape=jax.ShapeDtypeStruct((G, M, HW), f32),
        grid_spec=pltpu.PrefetchScalarGridSpec(
            num_scalar_prefetch=0,
            grid=(G,),
            in_specs=[
                pl.BlockSpec((1, M, HW), lambda b: (b, 0, 0)),   # x
                full_spec(w1_bd), full_spec(b1c),
                full_spec(wA_tab), full_spec(dbAc),
                full_spec(wB_tab), full_spec(dbBc),
                full_spec(mask_tab),
                full_spec(w2_bd), full_spec(b2c),
            ],
            out_specs=pl.BlockSpec((1, M, HW), lambda b: (b, 0, 0)),
        ),
        compiler_params=pltpu.CompilerParams(
            dimension_semantics=("parallel",)),
    )(x_flat, w1_bd, b1c, wA_tab, dbAc, wB_tab, dbBc, mask_tab, w2_bd, b2c)

    return out_flat.reshape(B, C, H, W)


def _reference_nchw(x, w_pw1, b_pw1, w_dw, b_dw, w_pw2, b_pw2):
    """Pure-JAX mirror of the PyTorch forward, for verification."""
    dn = lambda lhs, rhs: lax.conv_dimension_numbers(
        lhs.shape, rhs.shape, ("NCHW", "OIHW", "NCHW"))
    prec = lax.Precision.HIGHEST
    y = lax.conv_general_dilated(x, w_pw1, (1, 1), "VALID",
                                 dimension_numbers=dn(x, w_pw1), precision=prec)
    y = y + b_pw1[None, :, None, None]
    y2 = lax.conv_general_dilated(y, w_dw, (1, 1), ((P, P), (P, P)),
                                  dimension_numbers=dn(y, w_dw),
                                  feature_group_count=y.shape[1], precision=prec)
    y2 = y2 + b_dw[None, :, None, None]
    Bb, C2, H, W = y2.shape
    C = C2 // 2
    y2 = y2.reshape(Bb, C, 2, H, W)
    x0, x1 = y2[:, :, 0], y2[:, :, 1]
    g = jax.nn.gelu(x0, approximate=False) * jax.nn.sigmoid(x1)
    out = lax.conv_general_dilated(g, w_pw2, (1, 1), "VALID",
                                   dimension_numbers=dn(g, w_pw2), precision=prec)
    return out + b_pw2[None, :, None, None]


if __name__ == "__main__":
    B, C, H, W = 2, 4, 16, 16   # embed_dim = 4

    key = jax.random.PRNGKey(0)
    ks = jax.random.split(key, 7)
    # Parameters in PyTorch shapes (deterministic synthetic init).
    w_pw1 = jax.random.normal(ks[0], (C, C, 1, 1), jnp.float32) * 0.2
    b_pw1 = jax.random.normal(ks[1], (C,), jnp.float32) * 0.1
    w_dw = jax.random.normal(ks[2], (2 * C, 1, K, K), jnp.float32) * 0.1
    b_dw = jax.random.normal(ks[3], (2 * C,), jnp.float32) * 0.1
    w_pw2 = jax.random.normal(ks[4], (C, C, 1, 1), jnp.float32) * 0.2
    b_pw2 = jax.random.normal(ks[5], (C,), jnp.float32) * 0.1
    x = jax.random.normal(ks[6], (B, C, H, W), jnp.float32)

    # Repack PyTorch weights for the kernel.
    w1 = w_pw1[:, :, 0, 0]                       # (Cout, Cin)
    b1 = b_pw1
    # grouped conv: out channels 2c (GELU map) / 2c+1 (sigmoid map) read chan c
    wA = w_dw[0::2, 0].reshape(C, K * K)
    wB = w_dw[1::2, 0].reshape(C, K * K)
    dbA = b_dw[0::2]
    dbB = b_dw[1::2]
    w2 = w_pw2[:, :, 0, 0]
    b2 = b_pw2

    out = dual_adaptive_neural_block(x, (w1, b1, wA, dbA, wB, dbB, w2, b2))
    out = jax.block_until_ready(out)

    ref = _reference_nchw(x, w_pw1, b_pw1, w_dw, b_dw, w_pw2, b_pw2)
    assert out.shape == (B, C, H, W)
    max_err = float(jnp.max(jnp.abs(out - ref)))
    assert max_err < 1e-3, max_err
    print("KERNEL_OK")
</pallas_src>

<mosaic_0001>
module attributes {stable_mosaic.version = 11 : i64} {
  func.func @_danb_kernel(%arg0: i32, %arg1: memref<1x8x256xf32, #tpu.memory_space<vmem>>, %arg2: memref<8x8xf32, #tpu.memory_space<vmem>>, %arg3: memref<8x1xf32, #tpu.memory_space<vmem>>, %arg4: memref<49x8x1xf32, #tpu.memory_space<vmem>>, %arg5: memref<8x1xf32, #tpu.memory_space<vmem>>, %arg6: memref<49x8x1xf32, #tpu.memory_space<vmem>>, %arg7: memref<8x1xf32, #tpu.memory_space<vmem>>, %arg8: memref<49x1x256xf32, #tpu.memory_space<vmem>>, %arg9: memref<8x8xf32, #tpu.memory_space<vmem>>, %arg10: memref<8x1xf32, #tpu.memory_space<vmem>>, %arg11: memref<1x8x256xf32, #tpu.memory_space<vmem>>) attributes {dimension_semantics = [#tpu.dimension_semantics<parallel>], iteration_bounds = array<i64: 1>, scalar_prefetch = 0 : i64, scratch_operands = 0 : i64, tpu.core_type = #tpu.core_type<tc>, window_params = [{transform_indices = @transform_0, window_bounds = array<i64: 1, 8, 256>}, {pipeline_mode = #tpu.pipeline_mode<synchronous>, transform_indices = @transform_1, window_bounds = array<i64: 8, 8>}, {pipeline_mode = #tpu.pipeline_mode<synchronous>, transform_indices = @transform_2, window_bounds = array<i64: 8, 1>}, {pipeline_mode = #tpu.pipeline_mode<synchronous>, transform_indices = @transform_3, window_bounds = array<i64: 49, 8, 1>}, {pipeline_mode = #tpu.pipeline_mode<synchronous>, transform_indices = @transform_4, window_bounds = array<i64: 8, 1>}, {pipeline_mode = #tpu.pipeline_mode<synchronous>, transform_indices = @transform_5, window_bounds = array<i64: 49, 8, 1>}, {pipeline_mode = #tpu.pipeline_mode<synchronous>, transform_indices = @transform_6, window_bounds = array<i64: 8, 1>}, {pipeline_mode = #tpu.pipeline_mode<synchronous>, transform_indices = @transform_7, window_bounds = array<i64: 49, 1, 256>}, {pipeline_mode = #tpu.pipeline_mode<synchronous>, transform_indices = @transform_8, window_bounds = array<i64: 8, 8>}, {pipeline_mode = #tpu.pipeline_mode<synchronous>, transform_indices = @transform_9, window_bounds = array<i64: 8, 1>}, {transform_indices = @transform_10, window_bounds = array<i64: 1, 8, 256>}]} {
    %c0 = arith.constant 0 : index
    %c0_0 = arith.constant 0 : index
    %c0_1 = arith.constant 0 : index
    %0 = vector.load %arg1[%c0, %c0_0, %c0_1] : memref<1x8x256xf32, #tpu.memory_space<vmem>>, vector<1x8x256xf32>
    %1 = vector.shape_cast %0 : vector<1x8x256xf32> to vector<8x256xf32>
    %c0_2 = arith.constant 0 : index
    %c0_3 = arith.constant 0 : index
    %2 = vector.load %arg2[%c0_2, %c0_3] : memref<8x8xf32, #tpu.memory_space<vmem>>, vector<8x8xf32>
    %cst = arith.constant dense<0.000000e+00> : vector<8x256xf32>
    %3 = tpu.matmul %2, %1, %cst {dimension_numbers = #tpu.dot_dimension_numbers<[1], [0], [0], [1], [0, 0, 1, 1], [], []>, precision = #tpu.contract_precision<fp32>} : vector<8x8xf32>, vector<8x256xf32>, vector<8x256xf32> -> vector<8x256xf32>
    %c0_4 = arith.constant 0 : index
    %c0_5 = arith.constant 0 : index
    %4 = vector.load %arg3[%c0_4, %c0_5] : memref<8x1xf32, #tpu.memory_space<vmem>>, vector<8x1xf32>
    %5 = vector.broadcast %4 : vector<8x1xf32> to vector<8x256xf32>
    %6 = arith.addf %3, %5 : vector<8x256xf32>
    %cst_6 = arith.constant 0.000000e+00 : f32
    %7 = vector.broadcast %cst_6 : f32 to vector<8x51xf32>
    %8 = tpu.concatenate %7, %6, %7 in 1 : vector<8x51xf32>, vector<8x256xf32>, vector<8x51xf32> -> vector<8x358xf32>
    %cst_7 = arith.constant 0.000000e+00 : f32
    %9 = vector.broadcast %cst_7 : f32 to vector<8x256xf32>
    %cst_8 = arith.constant 0.000000e+00 : f32
    %10 = vector.broadcast %cst_8 : f32 to vector<8x256xf32>
    %11 = vector.extract_strided_slice %8 {offsets = [0, 0], sizes = [8, 256], strides = [1, 1]} : vector<8x358xf32> to vector<8x256xf32>
    %c0_9 = arith.constant 0 : index
    %c0_10 = arith.constant 0 : index
    %c0_11 = arith.constant 0 : index
    %12 = vector.load %arg8[%c0_9, %c0_10, %c0_11] : memref<49x1x256xf32, #tpu.memory_space<vmem>>, vector<1x1x256xf32>
    %13 = vector.shape_cast %12 : vector<1x1x256xf32> to vector<1x256xf32>
    %14 = vector.broadcast %13 : vector<1x256xf32> to vector<8x256xf32>
    %15 = arith.mulf %11, %14 : vector<8x256xf32>
    %c0_12 = arith.constant 0 : index
    %c0_13 = arith.constant 0 : index
    %c0_14 = arith.constant 0 : index
    %16 = vector.load %arg4[%c0_12, %c0_13, %c0_14] : memref<49x8x1xf32, #tpu.memory_space<vmem>>, vector<1x8x1xf32>
    %17 = vector.shape_cast %16 : vector<1x8x1xf32> to vector<8x1xf32>
    %18 = vector.broadcast %17 : vector<8x1xf32> to vector<8x256xf32>
    %19 = arith.mulf %15, %18 : vector<8x256xf32>
    %20 = arith.addf %9, %19 : vector<8x256xf32>
    %c0_15 = arith.constant 0 : index
    %c0_16 = arith.constant 0 : index
    %c0_17 = arith.constant 0 : index
    %21 = vector.load %arg6[%c0_15, %c0_16, %c0_17] : memref<49x8x1xf32, #tpu.memory_space<vmem>>, vector<1x8x1xf32>
    %22 = vector.shape_cast %21 : vector<1x8x1xf32> to vector<8x1xf32>
    %23 = vector.broadcast %22 : vector<8x1xf32> to vector<8x256xf32>
    %24 = arith.mulf %15, %23 : vector<8x256xf32>
    %25 = arith.addf %10, %24 : vector<8x256xf32>
    %26 = vector.extract_strided_slice %8 {offsets = [0, 1], sizes = [8, 256], strides = [1, 1]} : vector<8x358xf32> to vector<8x256xf32>
    %c1 = arith.constant 1 : index
    %c0_18 = arith.constant 0 : index
    %c0_19 = arith.constant 0 : index
    %27 = vector.load %arg8[%c1, %c0_18, %c0_19] : memref<49x1x256xf32, #tpu.memory_space<vmem>>, vector<1x1x256xf32>
    %28 = vector.shape_cast %27 : vector<1x1x256xf32> to vector<1x256xf32>
    %29 = vector.broadcast %28 : vector<1x256xf32> to vector<8x256xf32>
    %30 = arith.mulf %26, %29 : vector<8x256xf32>
    %c1_20 = arith.constant 1 : index
    %c0_21 = arith.constant 0 : index
    %c0_22 = arith.constant 0 : index
    %31 = vector.load %arg4[%c1_20, %c0_21, %c0_22] : memref<49x8x1xf32, #tpu.memory_space<vmem>>, vector<1x8x1xf32>
    %32 = vector.shape_cast %31 : vector<1x8x1xf32> to vector<8x1xf32>
    %33 = vector.broadcast %32 : vector<8x1xf32> to vector<8x256xf32>
    %34 = arith.mulf %30, %33 : vector<8x256xf32>
    %35 = arith.addf %20, %34 : vector<8x256xf32>
    %c1_23 = arith.constant 1 : index
    %c0_24 = arith.constant 0 : index
    %c0_25 = arith.constant 0 : index
    %36 = vector.load %arg6[%c1_23, %c0_24, %c0_25] : memref<49x8x1xf32, #tpu.memory_space<vmem>>, vector<1x8x1xf32>
    %37 = vector.shape_cast %36 : vector<1x8x1xf32> to vector<8x1xf32>
    %38 = vector.broadcast %37 : vector<8x1xf32> to vector<8x256xf32>
    %39 = arith.mulf %30, %38 : vector<8x256xf32>
    %40 = arith.addf %25, %39 : vector<8x256xf32>
    %41 = vector.extract_strided_slice %8 {offsets = [0, 2], sizes = [8, 256], strides = [1, 1]} : vector<8x358xf32> to vector<8x256xf32>
    %c2 = arith.constant 2 : index
    %c0_26 = arith.constant 0 : index
    %c0_27 = arith.constant 0 : index
    %42 = vector.load %arg8[%c2, %c0_26, %c0_27] : memref<49x1x256xf32, #tpu.memory_space<vmem>>, vector<1x1x256xf32>
    %43 = vector.shape_cast %42 : vector<1x1x256xf32> to vector<1x256xf32>
    %44 = vector.broadcast %43 : vector<1x256xf32> to vector<8x256xf32>
    %45 = arith.mulf %41, %44 : vector<8x256xf32>
    %c2_28 = arith.constant 2 : index
    %c0_29 = arith.constant 0 : index
    %c0_30 = arith.constant 0 : index
    %46 = vector.load %arg4[%c2_28, %c0_29, %c0_30] : memref<49x8x1xf32, #tpu.memory_space<vmem>>, vector<1x8x1xf32>
    %47 = vector.shape_cast %46 : vector<1x8x1xf32> to vector<8x1xf32>
    %48 = vector.broadcast %47 : vector<8x1xf32> to vector<8x256xf32>
    %49 = arith.mulf %45, %48 : vector<8x256xf32>
    %50 = arith.addf %35, %49 : vector<8x256xf32>
    %c2_31 = arith.constant 2 : index
    %c0_32 = arith.constant 0 : index
    %c0_33 = arith.constant 0 : index
    %51 = vector.load %arg6[%c2_31, %c0_32, %c0_33] : memref<49x8x1xf32, #tpu.memory_space<vmem>>, vector<1x8x1xf32>
    %52 = vector.shape_cast %51 : vector<1x8x1xf32> to vector<8x1xf32>
    %53 = vector.broadcast %52 : vector<8x1xf32> to vector<8x256xf32>
    %54 = arith.mulf %45, %53 : vector<8x256xf32>
    %55 = arith.addf %40, %54 : vector<8x256xf32>
    %56 = vector.extract_strided_slice %8 {offsets = [0, 3], sizes = [8, 256], strides = [1, 1]} : vector<8x358xf32> to vector<8x256xf32>
    %c3 = arith.constant 3 : index
    %c0_34 = arith.constant 0 : index
    %c0_35 = arith.constant 0 : index
    %57 = vector.load %arg8[%c3, %c0_34, %c0_35] : memref<49x1x256xf32, #tpu.memory_space<vmem>>, vector<1x1x256xf32>
    %58 = vector.shape_cast %57 : vector<1x1x256xf32> to vector<1x256xf32>
    %59 = vector.broadcast %58 : vector<1x256xf32> to vector<8x256xf32>
    %60 = arith.mulf %56, %59 : vector<8x256xf32>
    %c3_36 = arith.constant 3 : index
    %c0_37 = arith.constant 0 : index
    %c0_38 = arith.constant 0 : index
    %61 = vector.load %arg4[%c3_36, %c0_37, %c0_38] : memref<49x8x1xf32, #tpu.memory_space<vmem>>, vector<1x8x1xf32>
    %62 = vector.shape_cast %61 : vector<1x8x1xf32> to vector<8x1xf32>
    %63 = vector.broadcast %62 : vector<8x1xf32> to vector<8x256xf32>
    %64 = arith.mulf %60, %63 : vector<8x256xf32>
    %65 = arith.addf %50, %64 : vector<8x256xf32>
    %c3_39 = arith.constant 3 : index
    %c0_40 = arith.constant 0 : index
    %c0_41 = arith.constant 0 : index
    %66 = vector.load %arg6[%c3_39, %c0_40, %c0_41] : memref<49x8x1xf32, #tpu.memory_space<vmem>>, vector<1x8x1xf32>
    %67 = vector.shape_cast %66 : vector<1x8x1xf32> to vector<8x1xf32>
    %68 = vector.broadcast %67 : vector<8x1xf32> to vector<8x256xf32>
    %69 = arith.mulf %60, %68 : vector<8x256xf32>
    %70 = arith.addf %55, %69 : vector<8x256xf32>
    %71 = vector.extract_strided_slice %8 {offsets = [0, 4], sizes = [8, 256], strides = [1, 1]} : vector<8x358xf32> to vector<8x256xf32>
    %c4 = arith.constant 4 : index
    %c0_42 = arith.constant 0 : index
    %c0_43 = arith.constant 0 : index
    %72 = vector.load %arg8[%c4, %c0_42, %c0_43] : memref<49x1x256xf32, #tpu.memory_space<vmem>>, vector<1x1x256xf32>
    %73 = vector.shape_cast %72 : vector<1x1x256xf32> to vector<1x256xf32>
    %74 = vector.broadcast %73 : vector<1x256xf32> to vector<8x256xf32>
    %75 = arith.mulf %71, %74 : vector<8x256xf32>
    %c4_44 = arith.constant 4 : index
    %c0_45 = arith.constant 0 : index
    %c0_46 = arith.constant 0 : index
    %76 = vector.load %arg4[%c4_44, %c0_45, %c0_46] : memref<49x8x1xf32, #tpu.memory_space<vmem>>, vector<1x8x1xf32>
    %77 = vector.shape_cast %76 : vector<1x8x1xf32> to vector<8x1xf32>
    %78 = vector.broadcast %77 : vector<8x1xf32> to vector<8x256xf32>
    %79 = arith.mulf %75, %78 : vector<8x256xf32>
    %80 = arith.addf %65, %79 : vector<8x256xf32>
    %c4_47 = arith.constant 4 : index
    %c0_48 = arith.constant 0 : index
    %c0_49 = arith.constant 0 : index
    %81 = vector.load %arg6[%c4_47, %c0_48, %c0_49] : memref<49x8x1xf32, #tpu.memory_space<vmem>>, vector<1x8x1xf32>
    %82 = vector.shape_cast %81 : vector<1x8x1xf32> to vector<8x1xf32>
    %83 = vector.broadcast %82 : vector<8x1xf32> to vector<8x256xf32>
    %84 = arith.mulf %75, %83 : vector<8x256xf32>
    %85 = arith.addf %70, %84 : vector<8x256xf32>
    %86 = vector.extract_strided_slice %8 {offsets = [0, 5], sizes = [8, 256], strides = [1, 1]} : vector<8x358xf32> to vector<8x256xf32>
    %c5 = arith.constant 5 : index
    %c0_50 = arith.constant 0 : index
    %c0_51 = arith.constant 0 : index
    %87 = vector.load %arg8[%c5, %c0_50, %c0_51] : memref<49x1x256xf32, #tpu.memory_space<vmem>>, vector<1x1x256xf32>
    %88 = vector.shape_cast %87 : vector<1x1x256xf32> to vector<1x256xf32>
    %89 = vector.broadcast %88 : vector<1x256xf32> to vector<8x256xf32>
    %90 = arith.mulf %86, %89 : vector<8x256xf32>
    %c5_52 = arith.constant 5 : index
    %c0_53 = arith.constant 0 : index
    %c0_54 = arith.constant 0 : index
    %91 = vector.load %arg4[%c5_52, %c0_53, %c0_54] : memref<49x8x1xf32, #tpu.memory_space<vmem>>, vector<1x8x1xf32>
    %92 = vector.shape_cast %91 : vector<1x8x1xf32> to vector<8x1xf32>
    %93 = vector.broadcast %92 : vector<8x1xf32> to vector<8x256xf32>
    %94 = arith.mulf %90, %93 : vector<8x256xf32>
    %95 = arith.addf %80, %94 : vector<8x256xf32>
    %c5_55 = arith.constant 5 : index
    %c0_56 = arith.constant 0 : index
    %c0_57 = arith.constant 0 : index
    %96 = vector.load %arg6[%c5_55, %c0_56, %c0_57] : memref<49x8x1xf32, #tpu.memory_space<vmem>>, vector<1x8x1xf32>
    %97 = vector.shape_cast %96 : vector<1x8x1xf32> to vector<8x1xf32>
    %98 = vector.broadcast %97 : vector<8x1xf32> to vector<8x256xf32>
    %99 = arith.mulf %90, %98 : vector<8x256xf32>
    %100 = arith.addf %85, %99 : vector<8x256xf32>
    %101 = vector.extract_strided_slice %8 {offsets = [0, 6], sizes = [8, 256], strides = [1, 1]} : vector<8x358xf32> to vector<8x256xf32>
    %c6 = arith.constant 6 : index
    %c0_58 = arith.constant 0 : index
    %c0_59 = arith.constant 0 : index
    %102 = vector.load %arg8[%c6, %c0_58, %c0_59] : memref<49x1x256xf32, #tpu.memory_space<vmem>>, vector<1x1x256xf32>
    %103 = vector.shape_cast %102 : vector<1x1x256xf32> to vector<1x256xf32>
    %104 = vector.broadcast %103 : vector<1x256xf32> to vector<8x256xf32>
    %105 = arith.mulf %101, %104 : vector<8x256xf32>
    %c6_60 = arith.constant 6 : index
    %c0_61 = arith.constant 0 : index
    %c0_62 = arith.constant 0 : index
    %106 = vector.load %arg4[%c6_60, %c0_61, %c0_62] : memref<49x8x1xf32, #tpu.memory_space<vmem>>, vector<1x8x1xf32>
    %107 = vector.shape_cast %106 : vector<1x8x1xf32> to vector<8x1xf32>
    %108 = vector.broadcast %107 : vector<8x1xf32> to vector<8x256xf32>
    %109 = arith.mulf %105, %108 : vector<8x256xf32>
    %110 = arith.addf %95, %109 : vector<8x256xf32>
    %c6_63 = arith.constant 6 : index
    %c0_64 = arith.constant 0 : index
    %c0_65 = arith.constant 0 : index
    %111 = vector.load %arg6[%c6_63, %c0_64, %c0_65] : memref<49x8x1xf32, #tpu.memory_space<vmem>>, vector<1x8x1xf32>
    %112 = vector.shape_cast %111 : vector<1x8x1xf32> to vector<8x1xf32>
    %113 = vector.broadcast %112 : vector<8x1xf32> to vector<8x256xf32>
    %114 = arith.mulf %105, %113 : vector<8x256xf32>
    %115 = arith.addf %100, %114 : vector<8x256xf32>
    %116 = vector.extract_strided_slice %8 {offsets = [0, 16], sizes = [8, 256], strides = [1, 1]} : vector<8x358xf32> to vector<8x256xf32>
    %c7 = arith.constant 7 : index
    %c0_66 = arith.constant 0 : index
    %c0_67 = arith.constant 0 : index
    %117 = vector.load %arg8[%c7, %c0_66, %c0_67] : memref<49x1x256xf32, #tpu.memory_space<vmem>>, vector<1x1x256xf32>
    %118 = vector.shape_cast %117 : vector<1x1x256xf32> to vector<1x256xf32>
    %119 = vector.broadcast %118 : vector<1x256xf32> to vector<8x256xf32>
    %120 = arith.mulf %116, %119 : vector<8x256xf32>
    %c7_68 = arith.constant 7 : index
    %c0_69 = arith.constant 0 : index
    %c0_70 = arith.constant 0 : index
    %121 = vector.load %arg4[%c7_68, %c0_69, %c0_70] : memref<49x8x1xf32, #tpu.memory_space<vmem>>, vector<1x8x1xf32>
    %122 = vector.shape_cast %121 : vector<1x8x1xf32> to vector<8x1xf32>
    %123 = vector.broadcast %122 : vector<8x1xf32> to vector<8x256xf32>
    %124 = arith.mulf %120, %123 : vector<8x256xf32>
    %125 = arith.addf %110, %124 : vector<8x256xf32>
    %c7_71 = arith.constant 7 : index
    %c0_72 = arith.constant 0 : index
    %c0_73 = arith.constant 0 : index
    %126 = vector.load %arg6[%c7_71, %c0_72, %c0_73] : memref<49x8x1xf32, #tpu.memory_space<vmem>>, vector<1x8x1xf32>
    %127 = vector.shape_cast %126 : vector<1x8x1xf32> to vector<8x1xf32>
    %128 = vector.broadcast %127 : vector<8x1xf32> to vector<8x256xf32>
    %129 = arith.mulf %120, %128 : vector<8x256xf32>
    %130 = arith.addf %115, %129 : vector<8x256xf32>
    %131 = vector.extract_strided_slice %8 {offsets = [0, 17], sizes = [8, 256], strides = [1, 1]} : vector<8x358xf32> to vector<8x256xf32>
    %c8 = arith.constant 8 : index
    %c0_74 = arith.constant 0 : index
    %c0_75 = arith.constant 0 : index
    %132 = vector.load %arg8[%c8, %c0_74, %c0_75] : memref<49x1x256xf32, #tpu.memory_space<vmem>>, vector<1x1x256xf32>
    %133 = vector.shape_cast %132 : vector<1x1x256xf32> to vector<1x256xf32>
    %134 = vector.broadcast %133 : vector<1x256xf32> to vector<8x256xf32>
    %135 = arith.mulf %131, %134 : vector<8x256xf32>
    %c8_76 = arith.constant 8 : index
    %c0_77 = arith.constant 0 : index
    %c0_78 = arith.constant 0 : index
    %136 = vector.load %arg4[%c8_76, %c0_77, %c0_78] : memref<49x8x1xf32, #tpu.memory_space<vmem>>, vector<1x8x1xf32>
    %137 = vector.shape_cast %136 : vector<1x8x1xf32> to vector<8x1xf32>
    %138 = vector.broadcast %137 : vector<8x1xf32> to vector<8x256xf32>
    %139 = arith.mulf %135, %138 : vector<8x256xf32>
    %140 = arith.addf %125, %139 : vector<8x256xf32>
    %c8_79 = arith.constant 8 : index
    %c0_80 = arith.constant 0 : index
    %c0_81 = arith.constant 0 : index
    %141 = vector.load %arg6[%c8_79, %c0_80, %c0_81] : memref<49x8x1xf32, #tpu.memory_space<vmem>>, vector<1x8x1xf32>
    %142 = vector.shape_cast %141 : vector<1x8x1xf32> to vector<8x1xf32>
    %143 = vector.broadcast %142 : vector<8x1xf32> to vector<8x256xf32>
    %144 = arith.mulf %135, %143 : vector<8x256xf32>
    %145 = arith.addf %130, %144 : vector<8x256xf32>
    %146 = vector.extract_strided_slice %8 {offsets = [0, 18], sizes = [8, 256], strides = [1, 1]} : vector<8x358xf32> to vector<8x256xf32>
    %c9 = arith.constant 9 : index
    %c0_82 = arith.constant 0 : index
    %c0_83 = arith.constant 0 : index
    %147 = vector.load %arg8[%c9, %c0_82, %c0_83] : memref<49x1x256xf32, #tpu.memory_space<vmem>>, vector<1x1x256xf32>
    %148 = vector.shape_cast %147 : vector<1x1x256xf32> to vector<1x256xf32>
    %149 = vector.broadcast %148 : vector<1x256xf32> to vector<8x256xf32>
    %150 = arith.mulf %146, %149 : vector<8x256xf32>
    %c9_84 = arith.constant 9 : index
    %c0_85 = arith.constant 0 : index
    %c0_86 = arith.constant 0 : index
    %151 = vector.load %arg4[%c9_84, %c0_85, %c0_86] : memref<49x8x1xf32, #tpu.memory_space<vmem>>, vector<1x8x1xf32>
    %152 = vector.shape_cast %151 : vector<1x8x1xf32> to vector<8x1xf32>
    %153 = vector.broadcast %152 : vector<8x1xf32> to vector<8x256xf32>
    %154 = arith.mulf %150, %153 : vector<8x256xf32>
    %155 = arith.addf %140, %154 : vector<8x256xf32>
    %c9_87 = arith.constant 9 : index
    %c0_88 = arith.constant 0 : index
    %c0_89 = arith.constant 0 : index
    %156 = vector.load %arg6[%c9_87, %c0_88, %c0_89] : memref<49x8x1xf32, #tpu.memory_space<vmem>>, vector<1x8x1xf32>
    %157 = vector.shape_cast %156 : vector<1x8x1xf32> to vector<8x1xf32>
    %158 = vector.broadcast %157 : vector<8x1xf32> to vector<8x256xf32>
    %159 = arith.mulf %150, %158 : vector<8x256xf32>
    %160 = arith.addf %145, %159 : vector<8x256xf32>
    %161 = vector.extract_strided_slice %8 {offsets = [0, 19], sizes = [8, 256], strides = [1, 1]} : vector<8x358xf32> to vector<8x256xf32>
    %c10 = arith.constant 10 : index
    %c0_90 = arith.constant 0 : index
    %c0_91 = arith.constant 0 : index
    %162 = vector.load %arg8[%c10, %c0_90, %c0_91] : memref<49x1x256xf32, #tpu.memory_space<vmem>>, vector<1x1x256xf32>
    %163 = vector.shape_cast %162 : vector<1x1x256xf32> to vector<1x256xf32>
    %164 = vector.broadcast %163 : vector<1x256xf32> to vector<8x256xf32>
    %165 = arith.mulf %161, %164 : vector<8x256xf32>
    %c10_92 = arith.constant 10 : index
    %c0_93 = arith.constant 0 : index
    %c0_94 = arith.constant 0 : index
    %166 = vector.load %arg4[%c10_92, %c0_93, %c0_94] : memref<49x8x1xf32, #tpu.memory_space<vmem>>, vector<1x8x1xf32>
    %167 = vector.shape_cast %166 : vector<1x8x1xf32> to vector<8x1xf32>
    %168 = vector.broadcast %167 : vector<8x1xf32> to vector<8x256xf32>
    %169 = arith.mulf %165, %168 : vector<8x256xf32>
    %170 = arith.addf %155, %169 : vector<8x256xf32>
    %c10_95 = arith.constant 10 : index
    %c0_96 = arith.constant 0 : index
    %c0_97 = arith.constant 0 : index
    %171 = vector.load %arg6[%c10_95, %c0_96, %c0_97] : memref<49x8x1xf32, #tpu.memory_space<vmem>>, vector<1x8x1xf32>
    %172 = vector.shape_cast %171 : vector<1x8x1xf32> to vector<8x1xf32>
    %173 = vector.broadcast %172 : vector<8x1xf32> to vector<8x256xf32>
    %174 = arith.mulf %165, %173 : vector<8x256xf32>
    %175 = arith.addf %160, %174 : vector<8x256xf32>
    %176 = vector.extract_strided_slice %8 {offsets = [0, 20], sizes = [8, 256], strides = [1, 1]} : vector<8x358xf32> to vector<8x256xf32>
    %c11 = arith.constant 11 : index
    %c0_98 = arith.constant 0 : index
    %c0_99 = arith.constant 0 : index
    %177 = vector.load %arg8[%c11, %c0_98, %c0_99] : memref<49x1x256xf32, #tpu.memory_space<vmem>>, vector<1x1x256xf32>
    %178 = vector.shape_cast %177 : vector<1x1x256xf32> to vector<1x256xf32>
    %179 = vector.broadcast %178 : vector<1x256xf32> to vector<8x256xf32>
    %180 = arith.mulf %176, %179 : vector<8x256xf32>
    %c11_100 = arith.constant 11 : index
    %c0_101 = arith.constant 0 : index
    %c0_102 = arith.constant 0 : index
    %181 = vector.load %arg4[%c11_100, %c0_101, %c0_102] : memref<49x8x1xf32, #tpu.memory_space<vmem>>, vector<1x8x1xf32>
    %182 = vector.shape_cast %181 : vector<1x8x1xf32> to vector<8x1xf32>
    %183 = vector.broadcast %182 : vector<8x1xf32> to vector<8x256xf32>
    %184 = arith.mulf %180, %183 : vector<8x256xf32>
    %185 = arith.addf %170, %184 : vector<8x256xf32>
    %c11_103 = arith.constant 11 : index
    %c0_104 = arith.constant 0 : index
    %c0_105 = arith.constant 0 : index
    %186 = vector.load %arg6[%c11_103, %c0_104, %c0_105] : memref<49x8x1xf32, #tpu.memory_space<vmem>>, vector<1x8x1xf32>
    %187 = vector.shape_cast %186 : vector<1x8x1xf32> to vector<8x1xf32>
    %188 = vector.broadcast %187 : vector<8x1xf32> to vector<8x256xf32>
    %189 = arith.mulf %180, %188 : vector<8x256xf32>
    %190 = arith.addf %175, %189 : vector<8x256xf32>
    %191 = vector.extract_strided_slice %8 {offsets = [0, 21], sizes = [8, 256], strides = [1, 1]} : vector<8x358xf32> to vector<8x256xf32>
    %c12 = arith.constant 12 : index
    %c0_106 = arith.constant 0 : index
    %c0_107 = arith.constant 0 : index
    %192 = vector.load %arg8[%c12, %c0_106, %c0_107] : memref<49x1x256xf32, #tpu.memory_space<vmem>>, vector<1x1x256xf32>
    %193 = vector.shape_cast %192 : vector<1x1x256xf32> to vector<1x256xf32>
    %194 = vector.broadcast %193 : vector<1x256xf32> to vector<8x256xf32>
    %195 = arith.mulf %191, %194 : vector<8x256xf32>
    %c12_108 = arith.constant 12 : index
    %c0_109 = arith.constant 0 : index
    %c0_110 = arith.constant 0 : index
    %196 = vector.load %arg4[%c12_108, %c0_109, %c0_110] : memref<49x8x1xf32, #tpu.memory_space<vmem>>, vector<1x8x1xf32>
    %197 = vector.shape_cast %196 : vector<1x8x1xf32> to vector<8x1xf32>
    %198 = vector.broadcast %197 : vector<8x1xf32> to vector<8x256xf32>
    %199 = arith.mulf %195, %198 : vector<8x256xf32>
    %200 = arith.addf %185, %199 : vector<8x256xf32>
    %c12_111 = arith.constant 12 : index
    %c0_112 = arith.constant 0 : index
    %c0_113 = arith.constant 0 : index
    %201 = vector.load %arg6[%c12_111, %c0_112, %c0_113] : memref<49x8x1xf32, #tpu.memory_space<vmem>>, vector<1x8x1xf32>
    %202 = vector.shape_cast %201 : vector<1x8x1xf32> to vector<8x1xf32>
    %203 = vector.broadcast %202 : vector<8x1xf32> to vector<8x256xf32>
    %204 = arith.mulf %195, %203 : vector<8x256xf32>
    %205 = arith.addf %190, %204 : vector<8x256xf32>
    %206 = vector.extract_strided_slice %8 {offsets = [0, 22], sizes = [8, 256], strides = [1, 1]} : vector<8x358xf32> to vector<8x256xf32>
    %c13 = arith.constant 13 : index
    %c0_114 = arith.constant 0 : index
    %c0_115 = arith.constant 0 : index
    %207 = vector.load %arg8[%c13, %c0_114, %c0_115] : memref<49x1x256xf32, #tpu.memory_space<vmem>>, vector<1x1x256xf32>
    %208 = vector.shape_cast %207 : vector<1x1x256xf32> to vector<1x256xf32>
    %209 = vector.broadcast %208 : vector<1x256xf32> to vector<8x256xf32>
    %210 = arith.mulf %206, %209 : vector<8x256xf32>
    %c13_116 = arith.constant 13 : index
    %c0_117 = arith.constant 0 : index
    %c0_118 = arith.constant 0 : index
    %211 = vector.load %arg4[%c13_116, %c0_117, %c0_118] : memref<49x8x1xf32, #tpu.memory_space<vmem>>, vector<1x8x1xf32>
    %212 = vector.shape_cast %211 : vector<1x8x1xf32> to vector<8x1xf32>
    %213 = vector.broadcast %212 : vector<8x1xf32> to vector<8x256xf32>
    %214 = arith.mulf %210, %213 : vector<8x256xf32>
    %215 = arith.addf %200, %214 : vector<8x256xf32>
    %c13_119 = arith.constant 13 : index
    %c0_120 = arith.constant 0 : index
    %c0_121 = arith.constant 0 : index
    %216 = vector.load %arg6[%c13_119, %c0_120, %c0_121] : memref<49x8x1xf32, #tpu.memory_space<vmem>>, vector<1x8x1xf32>
    %217 = vector.shape_cast %216 : vector<1x8x1xf32> to vector<8x1xf32>
    %218 = vector.broadcast %217 : vector<8x1xf32> to vector<8x256xf32>
    %219 = arith.mulf %210, %218 : vector<8x256xf32>
    %220 = arith.addf %205, %219 : vector<8x256xf32>
    %221 = vector.extract_strided_slice %8 {offsets = [0, 32], sizes = [8, 256], strides = [1, 1]} : vector<8x358xf32> to vector<8x256xf32>
    %c14 = arith.constant 14 : index
    %c0_122 = arith.constant 0 : index
    %c0_123 = arith.constant 0 : index
    %222 = vector.load %arg8[%c14, %c0_122, %c0_123] : memref<49x1x256xf32, #tpu.memory_space<vmem>>, vector<1x1x256xf32>
    %223 = vector.shape_cast %222 : vector<1x1x256xf32> to vector<1x256xf32>
    %224 = vector.broadcast %223 : vector<1x256xf32> to vector<8x256xf32>
    %225 = arith.mulf %221, %224 : vector<8x256xf32>
    %c14_124 = arith.constant 14 : index
    %c0_125 = arith.constant 0 : index
    %c0_126 = arith.constant 0 : index
    %226 = vector.load %arg4[%c14_124, %c0_125, %c0_126] : memref<49x8x1xf32, #tpu.memory_space<vmem>>, vector<1x8x1xf32>
    %227 = vector.shape_cast %226 : vector<1x8x1xf32> to vector<8x1xf32>
    %228 = vector.broadcast %227 : vector<8x1xf32> to vector<8x256xf32>
    %229 = arith.mulf %225, %228 : vector<8x256xf32>
    %230 = arith.addf %215, %229 : vector<8x256xf32>
    %c14_127 = arith.constant 14 : index
    %c0_128 = arith.constant 0 : index
    %c0_129 = arith.constant 0 : index
    %231 = vector.load %arg6[%c14_127, %c0_128, %c0_129] : memref<49x8x1xf32, #tpu.memory_space<vmem>>, vector<1x8x1xf32>
    %232 = vector.shape_cast %231 : vector<1x8x1xf32> to vector<8x1xf32>
    %233 = vector.broadcast %232 : vector<8x1xf32> to vector<8x256xf32>
    %234 = arith.mulf %225, %233 : vector<8x256xf32>
    %235 = arith.addf %220, %234 : vector<8x256xf32>
    %236 = vector.extract_strided_slice %8 {offsets = [0, 33], sizes = [8, 256], strides = [1, 1]} : vector<8x358xf32> to vector<8x256xf32>
    %c15 = arith.constant 15 : index
    %c0_130 = arith.constant 0 : index
    %c0_131 = arith.constant 0 : index
    %237 = vector.load %arg8[%c15, %c0_130, %c0_131] : memref<49x1x256xf32, #tpu.memory_space<vmem>>, vector<1x1x256xf32>
    %238 = vector.shape_cast %237 : vector<1x1x256xf32> to vector<1x256xf32>
    %239 = vector.broadcast %238 : vector<1x256xf32> to vector<8x256xf32>
    %240 = arith.mulf %236, %239 : vector<8x256xf32>
    %c15_132 = arith.constant 15 : index
    %c0_133 = arith.constant 0 : index
    %c0_134 = arith.constant 0 : index
    %241 = vector.load %arg4[%c15_132, %c0_133, %c0_134] : memref<49x8x1xf32, #tpu.memory_space<vmem>>, vector<1x8x1xf32>
    %242 = vector.shape_cast %241 : vector<1x8x1xf32> to vector<8x1xf32>
    %243 = vector.broadcast %242 : vector<8x1xf32> to vector<8x256xf32>
    %244 = arith.mulf %240, %243 : vector<8x256xf32>
    %245 = arith.addf %230, %244 : vector<8x256xf32>
    %c15_135 = arith.constant 15 : index
    %c0_136 = arith.constant 0 : index
    %c0_137 = arith.constant 0 : index
    %246 = vector.load %arg6[%c15_135, %c0_136, %c0_137] : memref<49x8x1xf32, #tpu.memory_space<vmem>>, vector<1x8x1xf32>
    %247 = vector.shape_cast %246 : vector<1x8x1xf32> to vector<8x1xf32>
    %248 = vector.broadcast %247 : vector<8x1xf32> to vector<8x256xf32>
    %249 = arith.mulf %240, %248 : vector<8x256xf32>
    %250 = arith.addf %235, %249 : vector<8x256xf32>
    %251 = vector.extract_strided_slice %8 {offsets = [0, 34], sizes = [8, 256], strides = [1, 1]} : vector<8x358xf32> to vector<8x256xf32>
    %c16 = arith.constant 16 : index
    %c0_138 = arith.constant 0 : index
    %c0_139 = arith.constant 0 : index
    %252 = vector.load %arg8[%c16, %c0_138, %c0_139] : memref<49x1x256xf32, #tpu.memory_space<vmem>>, vector<1x1x256xf32>
    %253 = vector.shape_cast %252 : vector<1x1x256xf32> to vector<1x256xf32>
    %254 = vector.broadcast %253 : vector<1x256xf32> to vector<8x256xf32>
    %255 = arith.mulf %251, %254 : vector<8x256xf32>
    %c16_140 = arith.constant 16 : index
    %c0_141 = arith.constant 0 : index
    %c0_142 = arith.constant 0 : index
    %256 = vector.load %arg4[%c16_140, %c0_141, %c0_142] : memref<49x8x1xf32, #tpu.memory_space<vmem>>, vector<1x8x1xf32>
    %257 = vector.shape_cast %256 : vector<1x8x1xf32> to vector<8x1xf32>
    %258 = vector.broadcast %257 : vector<8x1xf32> to vector<8x256xf32>
    %259 = arith.mulf %255, %258 : vector<8x256xf32>
    %260 = arith.addf %245, %259 : vector<8x256xf32>
    %c16_143 = arith.constant 16 : index
    %c0_144 = arith.constant 0 : index
    %c0_145 = arith.constant 0 : index
    %261 = vector.load %arg6[%c16_143, %c0_144, %c0_145] : memref<49x8x1xf32, #tpu.memory_space<vmem>>, vector<1x8x1xf32>
    %262 = vector.shape_cast %261 : vector<1x8x1xf32> to vector<8x1xf32>
    %263 = vector.broadcast %262 : vector<8x1xf32> to vector<8x256xf32>
    %264 = arith.mulf %255, %263 : vector<8x256xf32>
    %265 = arith.addf %250, %264 : vector<8x256xf32>
    %266 = vector.extract_strided_slice %8 {offsets = [0, 35], sizes = [8, 256], strides = [1, 1]} : vector<8x358xf32> to vector<8x256xf32>
    %c17 = arith.constant 17 : index
    %c0_146 = arith.constant 0 : index
    %c0_147 = arith.constant 0 : index
    %267 = vector.load %arg8[%c17, %c0_146, %c0_147] : memref<49x1x256xf32, #tpu.memory_space<vmem>>, vector<1x1x256xf32>
    %268 = vector.shape_cast %267 : vector<1x1x256xf32> to vector<1x256xf32>
    %269 = vector.broadcast %268 : vector<1x256xf32> to vector<8x256xf32>
    %270 = arith.mulf %266, %269 : vector<8x256xf32>
    %c17_148 = arith.constant 17 : index
    %c0_149 = arith.constant 0 : index
    %c0_150 = arith.constant 0 : index
    %271 = vector.load %arg4[%c17_148, %c0_149, %c0_150] : memref<49x8x1xf32, #tpu.memory_space<vmem>>, vector<1x8x1xf32>
    %272 = vector.shape_cast %271 : vector<1x8x1xf32> to vector<8x1xf32>
    %273 = vector.broadcast %272 : vector<8x1xf32> to vector<8x256xf32>
    %274 = arith.mulf %270, %273 : vector<8x256xf32>
    %275 = arith.addf %260, %274 : vector<8x256xf32>
    %c17_151 = arith.constant 17 : index
    %c0_152 = arith.constant 0 : index
    %c0_153 = arith.constant 0 : index
    %276 = vector.load %arg6[%c17_151, %c0_152, %c0_153] : memref<49x8x1xf32, #tpu.memory_space<vmem>>, vector<1x8x1xf32>
    %277 = vector.shape_cast %276 : vector<1x8x1xf32> to vector<8x1xf32>
    %278 = vector.broadcast %277 : vector<8x1xf32> to vector<8x256xf32>
    %279 = arith.mulf %270, %278 : vector<8x256xf32>
    %280 = arith.addf %265, %279 : vector<8x256xf32>
    %281 = vector.extract_strided_slice %8 {offsets = [0, 36], sizes = [8, 256], strides = [1, 1]} : vector<8x358xf32> to vector<8x256xf32>
    %c18 = arith.constant 18 : index
    %c0_154 = arith.constant 0 : index
    %c0_155 = arith.constant 0 : index
    %282 = vector.load %arg8[%c18, %c0_154, %c0_155] : memref<49x1x256xf32, #tpu.memory_space<vmem>>, vector<1x1x256xf32>
    %283 = vector.shape_cast %282 : vector<1x1x256xf32> to vector<1x256xf32>
    %284 = vector.broadcast %283 : vector<1x256xf32> to vector<8x256xf32>
    %285 = arith.mulf %281, %284 : vector<8x256xf32>
    %c18_156 = arith.constant 18 : index
    %c0_157 = arith.constant 0 : index
    %c0_158 = arith.constant 0 : index
    %286 = vector.load %arg4[%c18_156, %c0_157, %c0_158] : memref<49x8x1xf32, #tpu.memory_space<vmem>>, vector<1x8x1xf32>
    %287 = vector.shape_cast %286 : vector<1x8x1xf32> to vector<8x1xf32>
    %288 = vector.broadcast %287 : vector<8x1xf32> to vector<8x256xf32>
    %289 = arith.mulf %285, %288 : vector<8x256xf32>
    %290 = arith.addf %275, %289 : vector<8x256xf32>
    %c18_159 = arith.constant 18 : index
    %c0_160 = arith.constant 0 : index
    %c0_161 = arith.constant 0 : index
    %291 = vector.load %arg6[%c18_159, %c0_160, %c0_161] : memref<49x8x1xf32, #tpu.memory_space<vmem>>, vector<1x8x1xf32>
    %292 = vector.shape_cast %291 : vector<1x8x1xf32> to vector<8x1xf32>
    %293 = vector.broadcast %292 : vector<8x1xf32> to vector<8x256xf32>
    %294 = arith.mulf %285, %293 : vector<8x256xf32>
    %295 = arith.addf %280, %294 : vector<8x256xf32>
    %296 = vector.extract_strided_slice %8 {offsets = [0, 37], sizes = [8, 256], strides = [1, 1]} : vector<8x358xf32> to vector<8x256xf32>
    %c19 = arith.constant 19 : index
    %c0_162 = arith.constant 0 : index
    %c0_163 = arith.constant 0 : index
    %297 = vector.load %arg8[%c19, %c0_162, %c0_163] : memref<49x1x256xf32, #tpu.memory_space<vmem>>, vector<1x1x256xf32>
    %298 = vector.shape_cast %297 : vector<1x1x256xf32> to vector<1x256xf32>
    %299 = vector.broadcast %298 : vector<1x256xf32> to vector<8x256xf32>
    %300 = arith.mulf %296, %299 : vector<8x256xf32>
    %c19_164 = arith.constant 19 : index
    %c0_165 = arith.constant 0 : index
    %c0_166 = arith.constant 0 : index
    %301 = vector.load %arg4[%c19_164, %c0_165, %c0_166] : memref<49x8x1xf32, #tpu.memory_space<vmem>>, vector<1x8x1xf32>
    %302 = vector.shape_cast %301 : vector<1x8x1xf32> to vector<8x1xf32>
    %303 = vector.broadcast %302 : vector<8x1xf32> to vector<8x256xf32>
    %304 = arith.mulf %300, %303 : vector<8x256xf32>
    %305 = arith.addf %290, %304 : vector<8x256xf32>
    %c19_167 = arith.constant 19 : index
    %c0_168 = arith.constant 0 : index
    %c0_169 = arith.constant 0 : index
    %306 = vector.load %arg6[%c19_167, %c0_168, %c0_169] : memref<49x8x1xf32, #tpu.memory_space<vmem>>, vector<1x8x1xf32>
    %307 = vector.shape_cast %306 : vector<1x8x1xf32> to vector<8x1xf32>
    %308 = vector.broadcast %307 : vector<8x1xf32> to vector<8x256xf32>
    %309 = arith.mulf %300, %308 : vector<8x256xf32>
    %310 = arith.addf %295, %309 : vector<8x256xf32>
    %311 = vector.extract_strided_slice %8 {offsets = [0, 38], sizes = [8, 256], strides = [1, 1]} : vector<8x358xf32> to vector<8x256xf32>
    %c20 = arith.constant 20 : index
    %c0_170 = arith.constant 0 : index
    %c0_171 = arith.constant 0 : index
    %312 = vector.load %arg8[%c20, %c0_170, %c0_171] : memref<49x1x256xf32, #tpu.memory_space<vmem>>, vector<1x1x256xf32>
    %313 = vector.shape_cast %312 : vector<1x1x256xf32> to vector<1x256xf32>
    %314 = vector.broadcast %313 : vector<1x256xf32> to vector<8x256xf32>
    %315 = arith.mulf %311, %314 : vector<8x256xf32>
    %c20_172 = arith.constant 20 : index
    %c0_173 = arith.constant 0 : index
    %c0_174 = arith.constant 0 : index
    %316 = vector.load %arg4[%c20_172, %c0_173, %c0_174] : memref<49x8x1xf32, #tpu.memory_space<vmem>>, vector<1x8x1xf32>
    %317 = vector.shape_cast %316 : vector<1x8x1xf32> to vector<8x1xf32>
    %318 = vector.broadcast %317 : vector<8x1xf32> to vector<8x256xf32>
    %319 = arith.mulf %315, %318 : vector<8x256xf32>
    %320 = arith.addf %305, %319 : vector<8x256xf32>
    %c20_175 = arith.constant 20 : index
    %c0_176 = arith.constant 0 : index
    %c0_177 = arith.constant 0 : index
    %321 = vector.load %arg6[%c20_175, %c0_176, %c0_177] : memref<49x8x1xf32, #tpu.memory_space<vmem>>, vector<1x8x1xf32>
    %322 = vector.shape_cast %321 : vector<1x8x1xf32> to vector<8x1xf32>
    %323 = vector.broadcast %322 : vector<8x1xf32> to vector<8x256xf32>
    %324 = arith.mulf %315, %323 : vector<8x256xf32>
    %325 = arith.addf %310, %324 : vector<8x256xf32>
    %326 = vector.extract_strided_slice %8 {offsets = [0, 48], sizes = [8, 256], strides = [1, 1]} : vector<8x358xf32> to vector<8x256xf32>
    %c21 = arith.constant 21 : index
    %c0_178 = arith.constant 0 : index
    %c0_179 = arith.constant 0 : index
    %327 = vector.load %arg8[%c21, %c0_178, %c0_179] : memref<49x1x256xf32, #tpu.memory_space<vmem>>, vector<1x1x256xf32>
    %328 = vector.shape_cast %327 : vector<1x1x256xf32> to vector<1x256xf32>
    %329 = vector.broadcast %328 : vector<1x256xf32> to vector<8x256xf32>
    %330 = arith.mulf %326, %329 : vector<8x256xf32>
    %c21_180 = arith.constant 21 : index
    %c0_181 = arith.constant 0 : index
    %c0_182 = arith.constant 0 : index
    %331 = vector.load %arg4[%c21_180, %c0_181, %c0_182] : memref<49x8x1xf32, #tpu.memory_space<vmem>>, vector<1x8x1xf32>
    %332 = vector.shape_cast %331 : vector<1x8x1xf32> to vector<8x1xf32>
    %333 = vector.broadcast %332 : vector<8x1xf32> to vector<8x256xf32>
    %334 = arith.mulf %330, %333 : vector<8x256xf32>
    %335 = arith.addf %320, %334 : vector<8x256xf32>
    %c21_183 = arith.constant 21 : index
    %c0_184 = arith.constant 0 : index
    %c0_185 = arith.constant 0 : index
    %336 = vector.load %arg6[%c21_183, %c0_184, %c0_185] : memref<49x8x1xf32, #tpu.memory_space<vmem>>, vector<1x8x1xf32>
    %337 = vector.shape_cast %336 : vector<1x8x1xf32> to vector<8x1xf32>
    %338 = vector.broadcast %337 : vector<8x1xf32> to vector<8x256xf32>
    %339 = arith.mulf %330, %338 : vector<8x256xf32>
    %340 = arith.addf %325, %339 : vector<8x256xf32>
    %341 = vector.extract_strided_slice %8 {offsets = [0, 49], sizes = [8, 256], strides = [1, 1]} : vector<8x358xf32> to vector<8x256xf32>
    %c22 = arith.constant 22 : index
    %c0_186 = arith.constant 0 : index
    %c0_187 = arith.constant 0 : index
    %342 = vector.load %arg8[%c22, %c0_186, %c0_187] : memref<49x1x256xf32, #tpu.memory_space<vmem>>, vector<1x1x256xf32>
    %343 = vector.shape_cast %342 : vector<1x1x256xf32> to vector<1x256xf32>
    %344 = vector.broadcast %343 : vector<1x256xf32> to vector<8x256xf32>
    %345 = arith.mulf %341, %344 : vector<8x256xf32>
    %c22_188 = arith.constant 22 : index
    %c0_189 = arith.constant 0 : index
    %c0_190 = arith.constant 0 : index
    %346 = vector.load %arg4[%c22_188, %c0_189, %c0_190] : memref<49x8x1xf32, #tpu.memory_space<vmem>>, vector<1x8x1xf32>
    %347 = vector.shape_cast %346 : vector<1x8x1xf32> to vector<8x1xf32>
    %348 = vector.broadcast %347 : vector<8x1xf32> to vector<8x256xf32>
    %349 = arith.mulf %345, %348 : vector<8x256xf32>
    %350 = arith.addf %335, %349 : vector<8x256xf32>
    %c22_191 = arith.constant 22 : index
    %c0_192 = arith.constant 0 : index
    %c0_193 = arith.constant 0 : index
    %351 = vector.load %arg6[%c22_191, %c0_192, %c0_193] : memref<49x8x1xf32, #tpu.memory_space<vmem>>, vector<1x8x1xf32>
    %352 = vector.shape_cast %351 : vector<1x8x1xf32> to vector<8x1xf32>
    %353 = vector.broadcast %352 : vector<8x1xf32> to vector<8x256xf32>
    %354 = arith.mulf %345, %353 : vector<8x256xf32>
    %355 = arith.addf %340, %354 : vector<8x256xf32>
    %356 = vector.extract_strided_slice %8 {offsets = [0, 50], sizes = [8, 256], strides = [1, 1]} : vector<8x358xf32> to vector<8x256xf32>
    %c23 = arith.constant 23 : index
    %c0_194 = arith.constant 0 : index
    %c0_195 = arith.constant 0 : index
    %357 = vector.load %arg8[%c23, %c0_194, %c0_195] : memref<49x1x256xf32, #tpu.memory_space<vmem>>, vector<1x1x256xf32>
    %358 = vector.shape_cast %357 : vector<1x1x256xf32> to vector<1x256xf32>
    %359 = vector.broadcast %358 : vector<1x256xf32> to vector<8x256xf32>
    %360 = arith.mulf %356, %359 : vector<8x256xf32>
    %c23_196 = arith.constant 23 : index
    %c0_197 = arith.constant 0 : index
    %c0_198 = arith.constant 0 : index
    %361 = vector.load %arg4[%c23_196, %c0_197, %c0_198] : memref<49x8x1xf32, #tpu.memory_space<vmem>>, vector<1x8x1xf32>
    %362 = vector.shape_cast %361 : vector<1x8x1xf32> to vector<8x1xf32>
    %363 = vector.broadcast %362 : vector<8x1xf32> to vector<8x256xf32>
    %364 = arith.mulf %360, %363 : vector<8x256xf32>
    %365 = arith.addf %350, %364 : vector<8x256xf32>
    %c23_199 = arith.constant 23 : index
    %c0_200 = arith.constant 0 : index
    %c0_201 = arith.constant 0 : index
    %366 = vector.load %arg6[%c23_199, %c0_200, %c0_201] : memref<49x8x1xf32, #tpu.memory_space<vmem>>, vector<1x8x1xf32>
    %367 = vector.shape_cast %366 : vector<1x8x1xf32> to vector<8x1xf32>
    %368 = vector.broadcast %367 : vector<8x1xf32> to vector<8x256xf32>
    %369 = arith.mulf %360, %368 : vector<8x256xf32>
    %370 = arith.addf %355, %369 : vector<8x256xf32>
    %371 = vector.extract_strided_slice %8 {offsets = [0, 51], sizes = [8, 256], strides = [1, 1]} : vector<8x358xf32> to vector<8x256xf32>
    %c24 = arith.constant 24 : index
    %c0_202 = arith.constant 0 : index
    %c0_203 = arith.constant 0 : index
    %372 = vector.load %arg8[%c24, %c0_202, %c0_203] : memref<49x1x256xf32, #tpu.memory_space<vmem>>, vector<1x1x256xf32>
    %373 = vector.shape_cast %372 : vector<1x1x256xf32> to vector<1x256xf32>
    %374 = vector.broadcast %373 : vector<1x256xf32> to vector<8x256xf32>
    %375 = arith.mulf %371, %374 : vector<8x256xf32>
    %c24_204 = arith.constant 24 : index
    %c0_205 = arith.constant 0 : index
    %c0_206 = arith.constant 0 : index
    %376 = vector.load %arg4[%c24_204, %c0_205, %c0_206] : memref<49x8x1xf32, #tpu.memory_space<vmem>>, vector<1x8x1xf32>
    %377 = vector.shape_cast %376 : vector<1x8x1xf32> to vector<8x1xf32>
    %378 = vector.broadcast %377 : vector<8x1xf32> to vector<8x256xf32>
    %379 = arith.mulf %375, %378 : vector<8x256xf32>
    %380 = arith.addf %365, %379 : vector<8x256xf32>
    %c24_207 = arith.constant 24 : index
    %c0_208 = arith.constant 0 : index
    %c0_209 = arith.constant 0 : index
    %381 = vector.load %arg6[%c24_207, %c0_208, %c0_209] : memref<49x8x1xf32, #tpu.memory_space<vmem>>, vector<1x8x1xf32>
    %382 = vector.shape_cast %381 : vector<1x8x1xf32> to vector<8x1xf32>
    %383 = vector.broadcast %382 : vector<8x1xf32> to vector<8x256xf32>
    %384 = arith.mulf %375, %383 : vector<8x256xf32>
    %385 = arith.addf %370, %384 : vector<8x256xf32>
    %386 = vector.extract_strided_slice %8 {offsets = [0, 52], sizes = [8, 256], strides = [1, 1]} : vector<8x358xf32> to vector<8x256xf32>
    %c25 = arith.constant 25 : index
    %c0_210 = arith.constant 0 : index
    %c0_211 = arith.constant 0 : index
    %387 = vector.load %arg8[%c25, %c0_210, %c0_211] : memref<49x1x256xf32, #tpu.memory_space<vmem>>, vector<1x1x256xf32>
    %388 = vector.shape_cast %387 : vector<1x1x256xf32> to vector<1x256xf32>
    %389 = vector.broadcast %388 : vector<1x256xf32> to vector<8x256xf32>
    %390 = arith.mulf %386, %389 : vector<8x256xf32>
    %c25_212 = arith.constant 25 : index
    %c0_213 = arith.constant 0 : index
    %c0_214 = arith.constant 0 : index
    %391 = vector.load %arg4[%c25_212, %c0_213, %c0_214] : memref<49x8x1xf32, #tpu.memory_space<vmem>>, vector<1x8x1xf32>
    %392 = vector.shape_cast %391 : vector<1x8x1xf32> to vector<8x1xf32>
    %393 = vector.broadcast %392 : vector<8x1xf32> to vector<8x256xf32>
    %394 = arith.mulf %390, %393 : vector<8x256xf32>
    %395 = arith.addf %380, %394 : vector<8x256xf32>
    %c25_215 = arith.constant 25 : index
    %c0_216 = arith.constant 0 : index
    %c0_217 = arith.constant 0 : index
    %396 = vector.load %arg6[%c25_215, %c0_216, %c0_217] : memref<49x8x1xf32, #tpu.memory_space<vmem>>, vector<1x8x1xf32>
    %397 = vector.shape_cast %396 : vector<1x8x1xf32> to vector<8x1xf32>
    %398 = vector.broadcast %397 : vector<8x1xf32> to vector<8x256xf32>
    %399 = arith.mulf %390, %398 : vector<8x256xf32>
    %400 = arith.addf %385, %399 : vector<8x256xf32>
    %401 = vector.extract_strided_slice %8 {offsets = [0, 53], sizes = [8, 256], strides = [1, 1]} : vector<8x358xf32> to vector<8x256xf32>
    %c26 = arith.constant 26 : index
    %c0_218 = arith.constant 0 : index
    %c0_219 = arith.constant 0 : index
    %402 = vector.load %arg8[%c26, %c0_218, %c0_219] : memref<49x1x256xf32, #tpu.memory_space<vmem>>, vector<1x1x256xf32>
    %403 = vector.shape_cast %402 : vector<1x1x256xf32> to vector<1x256xf32>
    %404 = vector.broadcast %403 : vector<1x256xf32> to vector<8x256xf32>
    %405 = arith.mulf %401, %404 : vector<8x256xf32>
    %c26_220 = arith.constant 26 : index
    %c0_221 = arith.constant 0 : index
    %c0_222 = arith.constant 0 : index
    %406 = vector.load %arg4[%c26_220, %c0_221, %c0_222] : memref<49x8x1xf32, #tpu.memory_space<vmem>>, vector<1x8x1xf32>
    %407 = vector.shape_cast %406 : vector<1x8x1xf32> to vector<8x1xf32>
    %408 = vector.broadcast %407 : vector<8x1xf32> to vector<8x256xf32>
    %409 = arith.mulf %405, %408 : vector<8x256xf32>
    %410 = arith.addf %395, %409 : vector<8x256xf32>
    %c26_223 = arith.constant 26 : index
    %c0_224 = arith.constant 0 : index
    %c0_225 = arith.constant 0 : index
    %411 = vector.load %arg6[%c26_223, %c0_224, %c0_225] : memref<49x8x1xf32, #tpu.memory_space<vmem>>, vector<1x8x1xf32>
    %412 = vector.shape_cast %411 : vector<1x8x1xf32> to vector<8x1xf32>
    %413 = vector.broadcast %412 : vector<8x1xf32> to vector<8x256xf32>
    %414 = arith.mulf %405, %413 : vector<8x256xf32>
    %415 = arith.addf %400, %414 : vector<8x256xf32>
    %416 = vector.extract_strided_slice %8 {offsets = [0, 54], sizes = [8, 256], strides = [1, 1]} : vector<8x358xf32> to vector<8x256xf32>
    %c27 = arith.constant 27 : index
    %c0_226 = arith.constant 0 : index
    %c0_227 = arith.constant 0 : index
    %417 = vector.load %arg8[%c27, %c0_226, %c0_227] : memref<49x1x256xf32, #tpu.memory_space<vmem>>, vector<1x1x256xf32>
    %418 = vector.shape_cast %417 : vector<1x1x256xf32> to vector<1x256xf32>
    %419 = vector.broadcast %418 : vector<1x256xf32> to vector<8x256xf32>
    %420 = arith.mulf %416, %419 : vector<8x256xf32>
    %c27_228 = arith.constant 27 : index
    %c0_229 = arith.constant 0 : index
    %c0_230 = arith.constant 0 : index
    %421 = vector.load %arg4[%c27_228, %c0_229, %c0_230] : memref<49x8x1xf32, #tpu.memory_space<vmem>>, vector<1x8x1xf32>
    %422 = vector.shape_cast %421 : vector<1x8x1xf32> to vector<8x1xf32>
    %423 = vector.broadcast %422 : vector<8x1xf32> to vector<8x256xf32>
    %424 = arith.mulf %420, %423 : vector<8x256xf32>
    %425 = arith.addf %410, %424 : vector<8x256xf32>
    %c27_231 = arith.constant 27 : index
    %c0_232 = arith.constant 0 : index
    %c0_233 = arith.constant 0 : index
    %426 = vector.load %arg6[%c27_231, %c0_232, %c0_233] : memref<49x8x1xf32, #tpu.memory_space<vmem>>, vector<1x8x1xf32>
    %427 = vector.shape_cast %426 : vector<1x8x1xf32> to vector<8x1xf32>
    %428 = vector.broadcast %427 : vector<8x1xf32> to vector<8x256xf32>
    %429 = arith.mulf %420, %428 : vector<8x256xf32>
    %430 = arith.addf %415, %429 : vector<8x256xf32>
    %431 = vector.extract_strided_slice %8 {offsets = [0, 64], sizes = [8, 256], strides = [1, 1]} : vector<8x358xf32> to vector<8x256xf32>
    %c28 = arith.constant 28 : index
    %c0_234 = arith.constant 0 : index
    %c0_235 = arith.constant 0 : index
    %432 = vector.load %arg8[%c28, %c0_234, %c0_235] : memref<49x1x256xf32, #tpu.memory_space<vmem>>, vector<1x1x256xf32>
    %433 = vector.shape_cast %432 : vector<1x1x256xf32> to vector<1x256xf32>
    %434 = vector.broadcast %433 : vector<1x256xf32> to vector<8x256xf32>
    %435 = arith.mulf %431, %434 : vector<8x256xf32>
    %c28_236 = arith.constant 28 : index
    %c0_237 = arith.constant 0 : index
    %c0_238 = arith.constant 0 : index
    %436 = vector.load %arg4[%c28_236, %c0_237, %c0_238] : memref<49x8x1xf32, #tpu.memory_space<vmem>>, vector<1x8x1xf32>
    %437 = vector.shape_cast %436 : vector<1x8x1xf32> to vector<8x1xf32>
    %438 = vector.broadcast %437 : vector<8x1xf32> to vector<8x256xf32>
    %439 = arith.mulf %435, %438 : vector<8x256xf32>
    %440 = arith.addf %425, %439 : vector<8x256xf32>
    %c28_239 = arith.constant 28 : index
    %c0_240 = arith.constant 0 : index
    %c0_241 = arith.constant 0 : index
    %441 = vector.load %arg6[%c28_239, %c0_240, %c0_241] : memref<49x8x1xf32, #tpu.memory_space<vmem>>, vector<1x8x1xf32>
    %442 = vector.shape_cast %441 : vector<1x8x1xf32> to vector<8x1xf32>
    %443 = vector.broadcast %442 : vector<8x1xf32> to vector<8x256xf32>
    %444 = arith.mulf %435, %443 : vector<8x256xf32>
    %445 = arith.addf %430, %444 : vector<8x256xf32>
    %446 = vector.extract_strided_slice %8 {offsets = [0, 65], sizes = [8, 256], strides = [1, 1]} : vector<8x358xf32> to vector<8x256xf32>
    %c29 = arith.constant 29 : index
    %c0_242 = arith.constant 0 : index
    %c0_243 = arith.constant 0 : index
    %447 = vector.load %arg8[%c29, %c0_242, %c0_243] : memref<49x1x256xf32, #tpu.memory_space<vmem>>, vector<1x1x256xf32>
    %448 = vector.shape_cast %447 : vector<1x1x256xf32> to vector<1x256xf32>
    %449 = vector.broadcast %448 : vector<1x256xf32> to vector<8x256xf32>
    %450 = arith.mulf %446, %449 : vector<8x256xf32>
    %c29_244 = arith.constant 29 : index
    %c0_245 = arith.constant 0 : index
    %c0_246 = arith.constant 0 : index
    %451 = vector.load %arg4[%c29_244, %c0_245, %c0_246] : memref<49x8x1xf32, #tpu.memory_space<vmem>>, vector<1x8x1xf32>
    %452 = vector.shape_cast %451 : vector<1x8x1xf32> to vector<8x1xf32>
    %453 = vector.broadcast %452 : vector<8x1xf32> to vector<8x256xf32>
    %454 = arith.mulf %450, %453 : vector<8x256xf32>
    %455 = arith.addf %440, %454 : vector<8x256xf32>
    %c29_247 = arith.constant 29 : index
    %c0_248 = arith.constant 0 : index
    %c0_249 = arith.constant 0 : index
    %456 = vector.load %arg6[%c29_247, %c0_248, %c0_249] : memref<49x8x1xf32, #tpu.memory_space<vmem>>, vector<1x8x1xf32>
    %457 = vector.shape_cast %456 : vector<1x8x1xf32> to vector<8x1xf32>
    %458 = vector.broadcast %457 : vector<8x1xf32> to vector<8x256xf32>
    %459 = arith.mulf %450, %458 : vector<8x256xf32>
    %460 = arith.addf %445, %459 : vector<8x256xf32>
    %461 = vector.extract_strided_slice %8 {offsets = [0, 66], sizes = [8, 256], strides = [1, 1]} : vector<8x358xf32> to vector<8x256xf32>
    %c30 = arith.constant 30 : index
    %c0_250 = arith.constant 0 : index
    %c0_251 = arith.constant 0 : index
    %462 = vector.load %arg8[%c30, %c0_250, %c0_251] : memref<49x1x256xf32, #tpu.memory_space<vmem>>, vector<1x1x256xf32>
    %463 = vector.shape_cast %462 : vector<1x1x256xf32> to vector<1x256xf32>
    %464 = vector.broadcast %463 : vector<1x256xf32> to vector<8x256xf32>
    %465 = arith.mulf %461, %464 : vector<8x256xf32>
    %c30_252 = arith.constant 30 : index
    %c0_253 = arith.constant 0 : index
    %c0_254 = arith.constant 0 : index
    %466 = vector.load %arg4[%c30_252, %c0_253, %c0_254] : memref<49x8x1xf32, #tpu.memory_space<vmem>>, vector<1x8x1xf32>
    %467 = vector.shape_cast %466 : vector<1x8x1xf32> to vector<8x1xf32>
    %468 = vector.broadcast %467 : vector<8x1xf32> to vector<8x256xf32>
    %469 = arith.mulf %465, %468 : vector<8x256xf32>
    %470 = arith.addf %455, %469 : vector<8x256xf32>
    %c30_255 = arith.constant 30 : index
    %c0_256 = arith.constant 0 : index
    %c0_257 = arith.constant 0 : index
    %471 = vector.load %arg6[%c30_255, %c0_256, %c0_257] : memref<49x8x1xf32, #tpu.memory_space<vmem>>, vector<1x8x1xf32>
    %472 = vector.shape_cast %471 : vector<1x8x1xf32> to vector<8x1xf32>
    %473 = vector.broadcast %472 : vector<8x1xf32> to vector<8x256xf32>
    %474 = arith.mulf %465, %473 : vector<8x256xf32>
    %475 = arith.addf %460, %474 : vector<8x256xf32>
    %476 = vector.extract_strided_slice %8 {offsets = [0, 67], sizes = [8, 256], strides = [1, 1]} : vector<8x358xf32> to vector<8x256xf32>
    %c31 = arith.constant 31 : index
    %c0_258 = arith.constant 0 : index
    %c0_259 = arith.constant 0 : index
    %477 = vector.load %arg8[%c31, %c0_258, %c0_259] : memref<49x1x256xf32, #tpu.memory_space<vmem>>, vector<1x1x256xf32>
    %478 = vector.shape_cast %477 : vector<1x1x256xf32> to vector<1x256xf32>
    %479 = vector.broadcast %478 : vector<1x256xf32> to vector<8x256xf32>
    %480 = arith.mulf %476, %479 : vector<8x256xf32>
    %c31_260 = arith.constant 31 : index
    %c0_261 = arith.constant 0 : index
    %c0_262 = arith.constant 0 : index
    %481 = vector.load %arg4[%c31_260, %c0_261, %c0_262] : memref<49x8x1xf32, #tpu.memory_space<vmem>>, vector<1x8x1xf32>
    %482 = vector.shape_cast %481 : vector<1x8x1xf32> to vector<8x1xf32>
    %483 = vector.broadcast %482 : vector<8x1xf32> to vector<8x256xf32>
    %484 = arith.mulf %480, %483 : vector<8x256xf32>
    %485 = arith.addf %470, %484 : vector<8x256xf32>
    %c31_263 = arith.constant 31 : index
    %c0_264 = arith.constant 0 : index
    %c0_265 = arith.constant 0 : index
    %486 = vector.load %arg6[%c31_263, %c0_264, %c0_265] : memref<49x8x1xf32, #tpu.memory_space<vmem>>, vector<1x8x1xf32>
    %487 = vector.shape_cast %486 : vector<1x8x1xf32> to vector<8x1xf32>
    %488 = vector.broadcast %487 : vector<8x1xf32> to vector<8x256xf32>
    %489 = arith.mulf %480, %488 : vector<8x256xf32>
    %490 = arith.addf %475, %489 : vector<8x256xf32>
    %491 = vector.extract_strided_slice %8 {offsets = [0, 68], sizes = [8, 256], strides = [1, 1]} : vector<8x358xf32> to vector<8x256xf32>
    %c32 = arith.constant 32 : index
    %c0_266 = arith.constant 0 : index
    %c0_267 = arith.constant 0 : index
    %492 = vector.load %arg8[%c32, %c0_266, %c0_267] : memref<49x1x256xf32, #tpu.memory_space<vmem>>, vector<1x1x256xf32>
    %493 = vector.shape_cast %492 : vector<1x1x256xf32> to vector<1x256xf32>
    %494 = vector.broadcast %493 : vector<1x256xf32> to vector<8x256xf32>
    %495 = arith.mulf %491, %494 : vector<8x256xf32>
    %c32_268 = arith.constant 32 : index
    %c0_269 = arith.constant 0 : index
    %c0_270 = arith.constant 0 : index
    %496 = vector.load %arg4[%c32_268, %c0_269, %c0_270] : memref<49x8x1xf32, #tpu.memory_space<vmem>>, vector<1x8x1xf32>
    %497 = vector.shape_cast %496 : vector<1x8x1xf32> to vector<8x1xf32>
    %498 = vector.broadcast %497 : vector<8x1xf32> to vector<8x256xf32>
    %499 = arith.mulf %495, %498 : vector<8x256xf32>
    %500 = arith.addf %485, %499 : vector<8x256xf32>
    %c32_271 = arith.constant 32 : index
    %c0_272 = arith.constant 0 : index
    %c0_273 = arith.constant 0 : index
    %501 = vector.load %arg6[%c32_271, %c0_272, %c0_273] : memref<49x8x1xf32, #tpu.memory_space<vmem>>, vector<1x8x1xf32>
    %502 = vector.shape_cast %501 : vector<1x8x1xf32> to vector<8x1xf32>
    %503 = vector.broadcast %502 : vector<8x1xf32> to vector<8x256xf32>
    %504 = arith.mulf %495, %503 : vector<8x256xf32>
    %505 = arith.addf %490, %504 : vector<8x256xf32>
    %506 = vector.extract_strided_slice %8 {offsets = [0, 69], sizes = [8, 256], strides = [1, 1]} : vector<8x358xf32> to vector<8x256xf32>
    %c33 = arith.constant 33 : index
    %c0_274 = arith.constant 0 : index
    %c0_275 = arith.constant 0 : index
    %507 = vector.load %arg8[%c33, %c0_274, %c0_275] : memref<49x1x256xf32, #tpu.memory_space<vmem>>, vector<1x1x256xf32>
    %508 = vector.shape_cast %507 : vector<1x1x256xf32> to vector<1x256xf32>
    %509 = vector.broadcast %508 : vector<1x256xf32> to vector<8x256xf32>
    %510 = arith.mulf %506, %509 : vector<8x256xf32>
    %c33_276 = arith.constant 33 : index
    %c0_277 = arith.constant 0 : index
    %c0_278 = arith.constant 0 : index
    %511 = vector.load %arg4[%c33_276, %c0_277, %c0_278] : memref<49x8x1xf32, #tpu.memory_space<vmem>>, vector<1x8x1xf32>
    %512 = vector.shape_cast %511 : vector<1x8x1xf32> to vector<8x1xf32>
    %513 = vector.broadcast %512 : vector<8x1xf32> to vector<8x256xf32>
    %514 = arith.mulf %510, %513 : vector<8x256xf32>
    %515 = arith.addf %500, %514 : vector<8x256xf32>
    %c33_279 = arith.constant 33 : index
    %c0_280 = arith.constant 0 : index
    %c0_281 = arith.constant 0 : index
    %516 = vector.load %arg6[%c33_279, %c0_280, %c0_281] : memref<49x8x1xf32, #tpu.memory_space<vmem>>, vector<1x8x1xf32>
    %517 = vector.shape_cast %516 : vector<1x8x1xf32> to vector<8x1xf32>
    %518 = vector.broadcast %517 : vector<8x1xf32> to vector<8x256xf32>
    %519 = arith.mulf %510, %518 : vector<8x256xf32>
    %520 = arith.addf %505, %519 : vector<8x256xf32>
    %521 = vector.extract_strided_slice %8 {offsets = [0, 70], sizes = [8, 256], strides = [1, 1]} : vector<8x358xf32> to vector<8x256xf32>
    %c34 = arith.constant 34 : index
    %c0_282 = arith.constant 0 : index
    %c0_283 = arith.constant 0 : index
    %522 = vector.load %arg8[%c34, %c0_282, %c0_283] : memref<49x1x256xf32, #tpu.memory_space<vmem>>, vector<1x1x256xf32>
    %523 = vector.shape_cast %522 : vector<1x1x256xf32> to vector<1x256xf32>
    %524 = vector.broadcast %523 : vector<1x256xf32> to vector<8x256xf32>
    %525 = arith.mulf %521, %524 : vector<8x256xf32>
    %c34_284 = arith.constant 34 : index
    %c0_285 = arith.constant 0 : index
    %c0_286 = arith.constant 0 : index
    %526 = vector.load %arg4[%c34_284, %c0_285, %c0_286] : memref<49x8x1xf32, #tpu.memory_space<vmem>>, vector<1x8x1xf32>
    %527 = vector.shape_cast %526 : vector<1x8x1xf32> to vector<8x1xf32>
    %528 = vector.broadcast %527 : vector<8x1xf32> to vector<8x256xf32>
    %529 = arith.mulf %525, %528 : vector<8x256xf32>
    %530 = arith.addf %515, %529 : vector<8x256xf32>
    %c34_287 = arith.constant 34 : index
    %c0_288 = arith.constant 0 : index
    %c0_289 = arith.constant 0 : index
    %531 = vector.load %arg6[%c34_287, %c0_288, %c0_289] : memref<49x8x1xf32, #tpu.memory_space<vmem>>, vector<1x8x1xf32>
    %532 = vector.shape_cast %531 : vector<1x8x1xf32> to vector<8x1xf32>
    %533 = vector.broadcast %532 : vector<8x1xf32> to vector<8x256xf32>
    %534 = arith.mulf %525, %533 : vector<8x256xf32>
    %535 = arith.addf %520, %534 : vector<8x256xf32>
    %536 = vector.extract_strided_slice %8 {offsets = [0, 80], sizes = [8, 256], strides = [1, 1]} : vector<8x358xf32> to vector<8x256xf32>
    %c35 = arith.constant 35 : index
    %c0_290 = arith.constant 0 : index
    %c0_291 = arith.constant 0 : index
    %537 = vector.load %arg8[%c35, %c0_290, %c0_291] : memref<49x1x256xf32, #tpu.memory_space<vmem>>, vector<1x1x256xf32>
    %538 = vector.shape_cast %537 : vector<1x1x256xf32> to vector<1x256xf32>
    %539 = vector.broadcast %538 : vector<1x256xf32> to vector<8x256xf32>
    %540 = arith.mulf %536, %539 : vector<8x256xf32>
    %c35_292 = arith.constant 35 : index
    %c0_293 = arith.constant 0 : index
    %c0_294 = arith.constant 0 : index
    %541 = vector.load %arg4[%c35_292, %c0_293, %c0_294] : memref<49x8x1xf32, #tpu.memory_space<vmem>>, vector<1x8x1xf32>
    %542 = vector.shape_cast %541 : vector<1x8x1xf32> to vector<8x1xf32>
    %543 = vector.broadcast %542 : vector<8x1xf32> to vector<8x256xf32>
    %544 = arith.mulf %540, %543 : vector<8x256xf32>
    %545 = arith.addf %530, %544 : vector<8x256xf32>
    %c35_295 = arith.constant 35 : index
    %c0_296 = arith.constant 0 : index
    %c0_297 = arith.constant 0 : index
    %546 = vector.load %arg6[%c35_295, %c0_296, %c0_297] : memref<49x8x1xf32, #tpu.memory_space<vmem>>, vector<1x8x1xf32>
    %547 = vector.shape_cast %546 : vector<1x8x1xf32> to vector<8x1xf32>
    %548 = vector.broadcast %547 : vector<8x1xf32> to vector<8x256xf32>
    %549 = arith.mulf %540, %548 : vector<8x256xf32>
    %550 = arith.addf %535, %549 : vector<8x256xf32>
    %551 = vector.extract_strided_slice %8 {offsets = [0, 81], sizes = [8, 256], strides = [1, 1]} : vector<8x358xf32> to vector<8x256xf32>
    %c36 = arith.constant 36 : index
    %c0_298 = arith.constant 0 : index
    %c0_299 = arith.constant 0 : index
    %552 = vector.load %arg8[%c36, %c0_298, %c0_299] : memref<49x1x256xf32, #tpu.memory_space<vmem>>, vector<1x1x256xf32>
    %553 = vector.shape_cast %552 : vector<1x1x256xf32> to vector<1x256xf32>
    %554 = vector.broadcast %553 : vector<1x256xf32> to vector<8x256xf32>
    %555 = arith.mulf %551, %554 : vector<8x256xf32>
    %c36_300 = arith.constant 36 : index
    %c0_301 = arith.constant 0 : index
    %c0_302 = arith.constant 0 : index
    %556 = vector.load %arg4[%c36_300, %c0_301, %c0_302] : memref<49x8x1xf32, #tpu.memory_space<vmem>>, vector<1x8x1xf32>
    %557 = vector.shape_cast %556 : vector<1x8x1xf32> to vector<8x1xf32>
    %558 = vector.broadcast %557 : vector<8x1xf32> to vector<8x256xf32>
    %559 = arith.mulf %555, %558 : vector<8x256xf32>
    %560 = arith.addf %545, %559 : vector<8x256xf32>
    %c36_303 = arith.constant 36 : index
    %c0_304 = arith.constant 0 : index
    %c0_305 = arith.constant 0 : index
    %561 = vector.load %arg6[%c36_303, %c0_304, %c0_305] : memref<49x8x1xf32, #tpu.memory_space<vmem>>, vector<1x8x1xf32>
    %562 = vector.shape_cast %561 : vector<1x8x1xf32> to vector<8x1xf32>
    %563 = vector.broadcast %562 : vector<8x1xf32> to vector<8x256xf32>
    %564 = arith.mulf %555, %563 : vector<8x256xf32>
    %565 = arith.addf %550, %564 : vector<8x256xf32>
    %566 = vector.extract_strided_slice %8 {offsets = [0, 82], sizes = [8, 256], strides = [1, 1]} : vector<8x358xf32> to vector<8x256xf32>
    %c37 = arith.constant 37 : index
    %c0_306 = arith.constant 0 : index
    %c0_307 = arith.constant 0 : index
    %567 = vector.load %arg8[%c37, %c0_306, %c0_307] : memref<49x1x256xf32, #tpu.memory_space<vmem>>, vector<1x1x256xf32>
    %568 = vector.shape_cast %567 : vector<1x1x256xf32> to vector<1x256xf32>
    %569 = vector.broadcast %568 : vector<1x256xf32> to vector<8x256xf32>
    %570 = arith.mulf %566, %569 : vector<8x256xf32>
    %c37_308 = arith.constant 37 : index
    %c0_309 = arith.constant 0 : index
    %c0_310 = arith.constant 0 : index
    %571 = vector.load %arg4[%c37_308, %c0_309, %c0_310] : memref<49x8x1xf32, #tpu.memory_space<vmem>>, vector<1x8x1xf32>
    %572 = vector.shape_cast %571 : vector<1x8x1xf32> to vector<8x1xf32>
    %573 = vector.broadcast %572 : vector<8x1xf32> to vector<8x256xf32>
    %574 = arith.mulf %570, %573 : vector<8x256xf32>
    %575 = arith.addf %560, %574 : vector<8x256xf32>
    %c37_311 = arith.constant 37 : index
    %c0_312 = arith.constant 0 : index
    %c0_313 = arith.constant 0 : index
    %576 = vector.load %arg6[%c37_311, %c0_312, %c0_313] : memref<49x8x1xf32, #tpu.memory_space<vmem>>, vector<1x8x1xf32>
    %577 = vector.shape_cast %576 : vector<1x8x1xf32> to vector<8x1xf32>
    %578 = vector.broadcast %577 : vector<8x1xf32> to vector<8x256xf32>
    %579 = arith.mulf %570, %578 : vector<8x256xf32>
    %580 = arith.addf %565, %579 : vector<8x256xf32>
    %581 = vector.extract_strided_slice %8 {offsets = [0, 83], sizes = [8, 256], strides = [1, 1]} : vector<8x358xf32> to vector<8x256xf32>
    %c38 = arith.constant 38 : index
    %c0_314 = arith.constant 0 : index
    %c0_315 = arith.constant 0 : index
    %582 = vector.load %arg8[%c38, %c0_314, %c0_315] : memref<49x1x256xf32, #tpu.memory_space<vmem>>, vector<1x1x256xf32>
    %583 = vector.shape_cast %582 : vector<1x1x256xf32> to vector<1x256xf32>
    %584 = vector.broadcast %583 : vector<1x256xf32> to vector<8x256xf32>
    %585 = arith.mulf %581, %584 : vector<8x256xf32>
    %c38_316 = arith.constant 38 : index
    %c0_317 = arith.constant 0 : index
    %c0_318 = arith.constant 0 : index
    %586 = vector.load %arg4[%c38_316, %c0_317, %c0_318] : memref<49x8x1xf32, #tpu.memory_space<vmem>>, vector<1x8x1xf32>
    %587 = vector.shape_cast %586 : vector<1x8x1xf32> to vector<8x1xf32>
    %588 = vector.broadcast %587 : vector<8x1xf32> to vector<8x256xf32>
    %589 = arith.mulf %585, %588 : vector<8x256xf32>
    %590 = arith.addf %575, %589 : vector<8x256xf32>
    %c38_319 = arith.constant 38 : index
    %c0_320 = arith.constant 0 : index
    %c0_321 = arith.constant 0 : index
    %591 = vector.load %arg6[%c38_319, %c0_320, %c0_321] : memref<49x8x1xf32, #tpu.memory_space<vmem>>, vector<1x8x1xf32>
    %592 = vector.shape_cast %591 : vector<1x8x1xf32> to vector<8x1xf32>
    %593 = vector.broadcast %592 : vector<8x1xf32> to vector<8x256xf32>
    %594 = arith.mulf %585, %593 : vector<8x256xf32>
    %595 = arith.addf %580, %594 : vector<8x256xf32>
    %596 = vector.extract_strided_slice %8 {offsets = [0, 84], sizes = [8, 256], strides = [1, 1]} : vector<8x358xf32> to vector<8x256xf32>
    %c39 = arith.constant 39 : index
    %c0_322 = arith.constant 0 : index
    %c0_323 = arith.constant 0 : index
    %597 = vector.load %arg8[%c39, %c0_322, %c0_323] : memref<49x1x256xf32, #tpu.memory_space<vmem>>, vector<1x1x256xf32>
    %598 = vector.shape_cast %597 : vector<1x1x256xf32> to vector<1x256xf32>
    %599 = vector.broadcast %598 : vector<1x256xf32> to vector<8x256xf32>
    %600 = arith.mulf %596, %599 : vector<8x256xf32>
    %c39_324 = arith.constant 39 : index
    %c0_325 = arith.constant 0 : index
    %c0_326 = arith.constant 0 : index
    %601 = vector.load %arg4[%c39_324, %c0_325, %c0_326] : memref<49x8x1xf32, #tpu.memory_space<vmem>>, vector<1x8x1xf32>
    %602 = vector.shape_cast %601 : vector<1x8x1xf32> to vector<8x1xf32>
    %603 = vector.broadcast %602 : vector<8x1xf32> to vector<8x256xf32>
    %604 = arith.mulf %600, %603 : vector<8x256xf32>
    %605 = arith.addf %590, %604 : vector<8x256xf32>
    %c39_327 = arith.constant 39 : index
    %c0_328 = arith.constant 0 : index
    %c0_329 = arith.constant 0 : index
    %606 = vector.load %arg6[%c39_327, %c0_328, %c0_329] : memref<49x8x1xf32, #tpu.memory_space<vmem>>, vector<1x8x1xf32>
    %607 = vector.shape_cast %606 : vector<1x8x1xf32> to vector<8x1xf32>
    %608 = vector.broadcast %607 : vector<8x1xf32> to vector<8x256xf32>
    %609 = arith.mulf %600, %608 : vector<8x256xf32>
    %610 = arith.addf %595, %609 : vector<8x256xf32>
    %611 = vector.extract_strided_slice %8 {offsets = [0, 85], sizes = [8, 256], strides = [1, 1]} : vector<8x358xf32> to vector<8x256xf32>
    %c40 = arith.constant 40 : index
    %c0_330 = arith.constant 0 : index
    %c0_331 = arith.constant 0 : index
    %612 = vector.load %arg8[%c40, %c0_330, %c0_331] : memref<49x1x256xf32, #tpu.memory_space<vmem>>, vector<1x1x256xf32>
    %613 = vector.shape_cast %612 : vector<1x1x256xf32> to vector<1x256xf32>
    %614 = vector.broadcast %613 : vector<1x256xf32> to vector<8x256xf32>
    %615 = arith.mulf %611, %614 : vector<8x256xf32>
    %c40_332 = arith.constant 40 : index
    %c0_333 = arith.constant 0 : index
    %c0_334 = arith.constant 0 : index
    %616 = vector.load %arg4[%c40_332, %c0_333, %c0_334] : memref<49x8x1xf32, #tpu.memory_space<vmem>>, vector<1x8x1xf32>
    %617 = vector.shape_cast %616 : vector<1x8x1xf32> to vector<8x1xf32>
    %618 = vector.broadcast %617 : vector<8x1xf32> to vector<8x256xf32>
    %619 = arith.mulf %615, %618 : vector<8x256xf32>
    %620 = arith.addf %605, %619 : vector<8x256xf32>
    %c40_335 = arith.constant 40 : index
    %c0_336 = arith.constant 0 : index
    %c0_337 = arith.constant 0 : index
    %621 = vector.load %arg6[%c40_335, %c0_336, %c0_337] : memref<49x8x1xf32, #tpu.memory_space<vmem>>, vector<1x8x1xf32>
    %622 = vector.shape_cast %621 : vector<1x8x1xf32> to vector<8x1xf32>
    %623 = vector.broadcast %622 : vector<8x1xf32> to vector<8x256xf32>
    %624 = arith.mulf %615, %623 : vector<8x256xf32>
    %625 = arith.addf %610, %624 : vector<8x256xf32>
    %626 = vector.extract_strided_slice %8 {offsets = [0, 86], sizes = [8, 256], strides = [1, 1]} : vector<8x358xf32> to vector<8x256xf32>
    %c41 = arith.constant 41 : index
    %c0_338 = arith.constant 0 : index
    %c0_339 = arith.constant 0 : index
    %627 = vector.load %arg8[%c41, %c0_338, %c0_339] : memref<49x1x256xf32, #tpu.memory_space<vmem>>, vector<1x1x256xf32>
    %628 = vector.shape_cast %627 : vector<1x1x256xf32> to vector<1x256xf32>
    %629 = vector.broadcast %628 : vector<1x256xf32> to vector<8x256xf32>
    %630 = arith.mulf %626, %629 : vector<8x256xf32>
    %c41_340 = arith.constant 41 : index
    %c0_341 = arith.constant 0 : index
    %c0_342 = arith.constant 0 : index
    %631 = vector.load %arg4[%c41_340, %c0_341, %c0_342] : memref<49x8x1xf32, #tpu.memory_space<vmem>>, vector<1x8x1xf32>
    %632 = vector.shape_cast %631 : vector<1x8x1xf32> to vector<8x1xf32>
    %633 = vector.broadcast %632 : vector<8x1xf32> to vector<8x256xf32>
    %634 = arith.mulf %630, %633 : vector<8x256xf32>
    %635 = arith.addf %620, %634 : vector<8x256xf32>
    %c41_343 = arith.constant 41 : index
    %c0_344 = arith.constant 0 : index
    %c0_345 = arith.constant 0 : index
    %636 = vector.load %arg6[%c41_343, %c0_344, %c0_345] : memref<49x8x1xf32, #tpu.memory_space<vmem>>, vector<1x8x1xf32>
    %637 = vector.shape_cast %636 : vector<1x8x1xf32> to vector<8x1xf32>
    %638 = vector.broadcast %637 : vector<8x1xf32> to vector<8x256xf32>
    %639 = arith.mulf %630, %638 : vector<8x256xf32>
    %640 = arith.addf %625, %639 : vector<8x256xf32>
    %641 = vector.extract_strided_slice %8 {offsets = [0, 96], sizes = [8, 256], strides = [1, 1]} : vector<8x358xf32> to vector<8x256xf32>
    %c42 = arith.constant 42 : index
    %c0_346 = arith.constant 0 : index
    %c0_347 = arith.constant 0 : index
    %642 = vector.load %arg8[%c42, %c0_346, %c0_347] : memref<49x1x256xf32, #tpu.memory_space<vmem>>, vector<1x1x256xf32>
    %643 = vector.shape_cast %642 : vector<1x1x256xf32> to vector<1x256xf32>
    %644 = vector.broadcast %643 : vector<1x256xf32> to vector<8x256xf32>
    %645 = arith.mulf %641, %644 : vector<8x256xf32>
    %c42_348 = arith.constant 42 : index
    %c0_349 = arith.constant 0 : index
    %c0_350 = arith.constant 0 : index
    %646 = vector.load %arg4[%c42_348, %c0_349, %c0_350] : memref<49x8x1xf32, #tpu.memory_space<vmem>>, vector<1x8x1xf32>
    %647 = vector.shape_cast %646 : vector<1x8x1xf32> to vector<8x1xf32>
    %648 = vector.broadcast %647 : vector<8x1xf32> to vector<8x256xf32>
    %649 = arith.mulf %645, %648 : vector<8x256xf32>
    %650 = arith.addf %635, %649 : vector<8x256xf32>
    %c42_351 = arith.constant 42 : index
    %c0_352 = arith.constant 0 : index
    %c0_353 = arith.constant 0 : index
    %651 = vector.load %arg6[%c42_351, %c0_352, %c0_353] : memref<49x8x1xf32, #tpu.memory_space<vmem>>, vector<1x8x1xf32>
    %652 = vector.shape_cast %651 : vector<1x8x1xf32> to vector<8x1xf32>
    %653 = vector.broadcast %652 : vector<8x1xf32> to vector<8x256xf32>
    %654 = arith.mulf %645, %653 : vector<8x256xf32>
    %655 = arith.addf %640, %654 : vector<8x256xf32>
    %656 = vector.extract_strided_slice %8 {offsets = [0, 97], sizes = [8, 256], strides = [1, 1]} : vector<8x358xf32> to vector<8x256xf32>
    %c43 = arith.constant 43 : index
    %c0_354 = arith.constant 0 : index
    %c0_355 = arith.constant 0 : index
    %657 = vector.load %arg8[%c43, %c0_354, %c0_355] : memref<49x1x256xf32, #tpu.memory_space<vmem>>, vector<1x1x256xf32>
    %658 = vector.shape_cast %657 : vector<1x1x256xf32> to vector<1x256xf32>
    %659 = vector.broadcast %658 : vector<1x256xf32> to vector<8x256xf32>
    %660 = arith.mulf %656, %659 : vector<8x256xf32>
    %c43_356 = arith.constant 43 : index
    %c0_357 = arith.constant 0 : index
    %c0_358 = arith.constant 0 : index
    %661 = vector.load %arg4[%c43_356, %c0_357, %c0_358] : memref<49x8x1xf32, #tpu.memory_space<vmem>>, vector<1x8x1xf32>
    %662 = vector.shape_cast %661 : vector<1x8x1xf32> to vector<8x1xf32>
    %663 = vector.broadcast %662 : vector<8x1xf32> to vector<8x256xf32>
    %664 = arith.mulf %660, %663 : vector<8x256xf32>
    %665 = arith.addf %650, %664 : vector<8x256xf32>
    %c43_359 = arith.constant 43 : index
    %c0_360 = arith.constant 0 : index
    %c0_361 = arith.constant 0 : index
    %666 = vector.load %arg6[%c43_359, %c0_360, %c0_361] : memref<49x8x1xf32, #tpu.memory_space<vmem>>, vector<1x8x1xf32>
    %667 = vector.shape_cast %666 : vector<1x8x1xf32> to vector<8x1xf32>
    %668 = vector.broadcast %667 : vector<8x1xf32> to vector<8x256xf32>
    %669 = arith.mulf %660, %668 : vector<8x256xf32>
    %670 = arith.addf %655, %669 : vector<8x256xf32>
    %671 = vector.extract_strided_slice %8 {offsets = [0, 98], sizes = [8, 256], strides = [1, 1]} : vector<8x358xf32> to vector<8x256xf32>
    %c44 = arith.constant 44 : index
    %c0_362 = arith.constant 0 : index
    %c0_363 = arith.constant 0 : index
    %672 = vector.load %arg8[%c44, %c0_362, %c0_363] : memref<49x1x256xf32, #tpu.memory_space<vmem>>, vector<1x1x256xf32>
    %673 = vector.shape_cast %672 : vector<1x1x256xf32> to vector<1x256xf32>
    %674 = vector.broadcast %673 : vector<1x256xf32> to vector<8x256xf32>
    %675 = arith.mulf %671, %674 : vector<8x256xf32>
    %c44_364 = arith.constant 44 : index
    %c0_365 = arith.constant 0 : index
    %c0_366 = arith.constant 0 : index
    %676 = vector.load %arg4[%c44_364, %c0_365, %c0_366] : memref<49x8x1xf32, #tpu.memory_space<vmem>>, vector<1x8x1xf32>
    %677 = vector.shape_cast %676 : vector<1x8x1xf32> to vector<8x1xf32>
    %678 = vector.broadcast %677 : vector<8x1xf32> to vector<8x256xf32>
    %679 = arith.mulf %675, %678 : vector<8x256xf32>
    %680 = arith.addf %665, %679 : vector<8x256xf32>
    %c44_367 = arith.constant 44 : index
    %c0_368 = arith.constant 0 : index
    %c0_369 = arith.constant 0 : index
    %681 = vector.load %arg6[%c44_367, %c0_368, %c0_369] : memref<49x8x1xf32, #tpu.memory_space<vmem>>, vector<1x8x1xf32>
    %682 = vector.shape_cast %681 : vector<1x8x1xf32> to vector<8x1xf32>
    %683 = vector.broadcast %682 : vector<8x1xf32> to vector<8x256xf32>
    %684 = arith.mulf %675, %683 : vector<8x256xf32>
    %685 = arith.addf %670, %684 : vector<8x256xf32>
    %686 = vector.extract_strided_slice %8 {offsets = [0, 99], sizes = [8, 256], strides = [1, 1]} : vector<8x358xf32> to vector<8x256xf32>
    %c45 = arith.constant 45 : index
    %c0_370 = arith.constant 0 : index
    %c0_371 = arith.constant 0 : index
    %687 = vector.load %arg8[%c45, %c0_370, %c0_371] : memref<49x1x256xf32, #tpu.memory_space<vmem>>, vector<1x1x256xf32>
    %688 = vector.shape_cast %687 : vector<1x1x256xf32> to vector<1x256xf32>
    %689 = vector.broadcast %688 : vector<1x256xf32> to vector<8x256xf32>
    %690 = arith.mulf %686, %689 : vector<8x256xf32>
    %c45_372 = arith.constant 45 : index
    %c0_373 = arith.constant 0 : index
    %c0_374 = arith.constant 0 : index
    %691 = vector.load %arg4[%c45_372, %c0_373, %c0_374] : memref<49x8x1xf32, #tpu.memory_space<vmem>>, vector<1x8x1xf32>
    %692 = vector.shape_cast %691 : vector<1x8x1xf32> to vector<8x1xf32>
    %693 = vector.broadcast %692 : vector<8x1xf32> to vector<8x256xf32>
    %694 = arith.mulf %690, %693 : vector<8x256xf32>
    %695 = arith.addf %680, %694 : vector<8x256xf32>
    %c45_375 = arith.constant 45 : index
    %c0_376 = arith.constant 0 : index
    %c0_377 = arith.constant 0 : index
    %696 = vector.load %arg6[%c45_375, %c0_376, %c0_377] : memref<49x8x1xf32, #tpu.memory_space<vmem>>, vector<1x8x1xf32>
    %697 = vector.shape_cast %696 : vector<1x8x1xf32> to vector<8x1xf32>
    %698 = vector.broadcast %697 : vector<8x1xf32> to vector<8x256xf32>
    %699 = arith.mulf %690, %698 : vector<8x256xf32>
    %700 = arith.addf %685, %699 : vector<8x256xf32>
    %701 = vector.extract_strided_slice %8 {offsets = [0, 100], sizes = [8, 256], strides = [1, 1]} : vector<8x358xf32> to vector<8x256xf32>
    %c46 = arith.constant 46 : index
    %c0_378 = arith.constant 0 : index
    %c0_379 = arith.constant 0 : index
    %702 = vector.load %arg8[%c46, %c0_378, %c0_379] : memref<49x1x256xf32, #tpu.memory_space<vmem>>, vector<1x1x256xf32>
    %703 = vector.shape_cast %702 : vector<1x1x256xf32> to vector<1x256xf32>
    %704 = vector.broadcast %703 : vector<1x256xf32> to vector<8x256xf32>
    %705 = arith.mulf %701, %704 : vector<8x256xf32>
    %c46_380 = arith.constant 46 : index
    %c0_381 = arith.constant 0 : index
    %c0_382 = arith.constant 0 : index
    %706 = vector.load %arg4[%c46_380, %c0_381, %c0_382] : memref<49x8x1xf32, #tpu.memory_space<vmem>>, vector<1x8x1xf32>
    %707 = vector.shape_cast %706 : vector<1x8x1xf32> to vector<8x1xf32>
    %708 = vector.broadcast %707 : vector<8x1xf32> to vector<8x256xf32>
    %709 = arith.mulf %705, %708 : vector<8x256xf32>
    %710 = arith.addf %695, %709 : vector<8x256xf32>
    %c46_383 = arith.constant 46 : index
    %c0_384 = arith.constant 0 : index
    %c0_385 = arith.constant 0 : index
    %711 = vector.load %arg6[%c46_383, %c0_384, %c0_385] : memref<49x8x1xf32, #tpu.memory_space<vmem>>, vector<1x8x1xf32>
    %712 = vector.shape_cast %711 : vector<1x8x1xf32> to vector<8x1xf32>
    %713 = vector.broadcast %712 : vector<8x1xf32> to vector<8x256xf32>
    %714 = arith.mulf %705, %713 : vector<8x256xf32>
    %715 = arith.addf %700, %714 : vector<8x256xf32>
    %716 = vector.extract_strided_slice %8 {offsets = [0, 101], sizes = [8, 256], strides = [1, 1]} : vector<8x358xf32> to vector<8x256xf32>
    %c47 = arith.constant 47 : index
    %c0_386 = arith.constant 0 : index
    %c0_387 = arith.constant 0 : index
    %717 = vector.load %arg8[%c47, %c0_386, %c0_387] : memref<49x1x256xf32, #tpu.memory_space<vmem>>, vector<1x1x256xf32>
    %718 = vector.shape_cast %717 : vector<1x1x256xf32> to vector<1x256xf32>
    %719 = vector.broadcast %718 : vector<1x256xf32> to vector<8x256xf32>
    %720 = arith.mulf %716, %719 : vector<8x256xf32>
    %c47_388 = arith.constant 47 : index
    %c0_389 = arith.constant 0 : index
    %c0_390 = arith.constant 0 : index
    %721 = vector.load %arg4[%c47_388, %c0_389, %c0_390] : memref<49x8x1xf32, #tpu.memory_space<vmem>>, vector<1x8x1xf32>
    %722 = vector.shape_cast %721 : vector<1x8x1xf32> to vector<8x1xf32>
    %723 = vector.broadcast %722 : vector<8x1xf32> to vector<8x256xf32>
    %724 = arith.mulf %720, %723 : vector<8x256xf32>
    %725 = arith.addf %710, %724 : vector<8x256xf32>
    %c47_391 = arith.constant 47 : index
    %c0_392 = arith.constant 0 : index
    %c0_393 = arith.constant 0 : index
    %726 = vector.load %arg6[%c47_391, %c0_392, %c0_393] : memref<49x8x1xf32, #tpu.memory_space<vmem>>, vector<1x8x1xf32>
    %727 = vector.shape_cast %726 : vector<1x8x1xf32> to vector<8x1xf32>
    %728 = vector.broadcast %727 : vector<8x1xf32> to vector<8x256xf32>
    %729 = arith.mulf %720, %728 : vector<8x256xf32>
    %730 = arith.addf %715, %729 : vector<8x256xf32>
    %731 = vector.extract_strided_slice %8 {offsets = [0, 102], sizes = [8, 256], strides = [1, 1]} : vector<8x358xf32> to vector<8x256xf32>
    %c48 = arith.constant 48 : index
    %c0_394 = arith.constant 0 : index
    %c0_395 = arith.constant 0 : index
    %732 = vector.load %arg8[%c48, %c0_394, %c0_395] : memref<49x1x256xf32, #tpu.memory_space<vmem>>, vector<1x1x256xf32>
    %733 = vector.shape_cast %732 : vector<1x1x256xf32> to vector<1x256xf32>
    %734 = vector.broadcast %733 : vector<1x256xf32> to vector<8x256xf32>
    %735 = arith.mulf %731, %734 : vector<8x256xf32>
    %c48_396 = arith.constant 48 : index
    %c0_397 = arith.constant 0 : index
    %c0_398 = arith.constant 0 : index
    %736 = vector.load %arg4[%c48_396, %c0_397, %c0_398] : memref<49x8x1xf32, #tpu.memory_space<vmem>>, vector<1x8x1xf32>
    %737 = vector.shape_cast %736 : vector<1x8x1xf32> to vector<8x1xf32>
    %738 = vector.broadcast %737 : vector<8x1xf32> to vector<8x256xf32>
    %739 = arith.mulf %735, %738 : vector<8x256xf32>
    %740 = arith.addf %725, %739 : vector<8x256xf32>
    %c48_399 = arith.constant 48 : index
    %c0_400 = arith.constant 0 : index
    %c0_401 = arith.constant 0 : index
    %741 = vector.load %arg6[%c48_399, %c0_400, %c0_401] : memref<49x8x1xf32, #tpu.memory_space<vmem>>, vector<1x8x1xf32>
    %742 = vector.shape_cast %741 : vector<1x8x1xf32> to vector<8x1xf32>
    %743 = vector.broadcast %742 : vector<8x1xf32> to vector<8x256xf32>
    %744 = arith.mulf %735, %743 : vector<8x256xf32>
    %745 = arith.addf %730, %744 : vector<8x256xf32>
    %c0_402 = arith.constant 0 : index
    %c0_403 = arith.constant 0 : index
    %746 = vector.load %arg5[%c0_402, %c0_403] : memref<8x1xf32, #tpu.memory_space<vmem>>, vector<8x1xf32>
    %747 = vector.broadcast %746 : vector<8x1xf32> to vector<8x256xf32>
    %748 = arith.addf %740, %747 : vector<8x256xf32>
    %c0_404 = arith.constant 0 : index
    %c0_405 = arith.constant 0 : index
    %749 = vector.load %arg7[%c0_404, %c0_405] : memref<8x1xf32, #tpu.memory_space<vmem>>, vector<8x1xf32>
    %750 = vector.broadcast %749 : vector<8x1xf32> to vector<8x256xf32>
    %751 = arith.addf %745, %750 : vector<8x256xf32>
    %cst_406 = arith.constant 5.000000e-01 : f32
    %752 = vector.broadcast %cst_406 : f32 to vector<8x256xf32>
    %753 = arith.mulf %752, %748 : vector<8x256xf32>
    %cst_407 = arith.constant 0.707106769 : f32
    %754 = vector.broadcast %cst_407 : f32 to vector<8x256xf32>
    %755 = arith.mulf %748, %754 : vector<8x256xf32>
    %756 = math.erf %755 : vector<8x256xf32>
    %cst_408 = arith.constant 1.000000e+00 : f32
    %757 = vector.broadcast %cst_408 : f32 to vector<8x256xf32>
    %758 = arith.addf %757, %756 : vector<8x256xf32>
    %759 = arith.mulf %753, %758 : vector<8x256xf32>
    %760 = arith.negf %751 : vector<8x256xf32>
    %761 = math.exp %760 : vector<8x256xf32>
    %cst_409 = arith.constant 1.000000e+00 : f32
    %762 = vector.broadcast %cst_409 : f32 to vector<8x256xf32>
    %763 = arith.addf %762, %761 : vector<8x256xf32>
    %764 = arith.divf %762, %763 : vector<8x256xf32>
    %765 = arith.mulf %759, %764 : vector<8x256xf32>
    %c0_410 = arith.constant 0 : index
    %c0_411 = arith.constant 0 : index
    %766 = vector.load %arg9[%c0_410, %c0_411] : memref<8x8xf32, #tpu.memory_space<vmem>>, vector<8x8xf32>
    %cst_412 = arith.constant dense<0.000000e+00> : vector<8x256xf32>
    %767 = tpu.matmul %766, %765, %cst_412 {dimension_numbers = #tpu.dot_dimension_numbers<[1], [0], [0], [1], [0, 0, 1, 1], [], []>, precision = #tpu.contract_precision<fp32>} : vector<8x8xf32>, vector<8x256xf32>, vector<8x256xf32> -> vector<8x256xf32>
    %c0_413 = arith.constant 0 : index
    %c0_414 = arith.constant 0 : index
    %768 = vector.load %arg10[%c0_413, %c0_414] : memref<8x1xf32, #tpu.memory_space<vmem>>, vector<8x1xf32>
    %769 = vector.broadcast %768 : vector<8x1xf32> to vector<8x256xf32>
    %770 = arith.addf %767, %769 : vector<8x256xf32>
    %c0_415 = arith.constant 0 : index
    %c0_416 = arith.constant 0 : index
    %c0_417 = arith.constant 0 : index
    %771 = vector.load %arg11[%c0_415, %c0_416, %c0_417] : memref<1x8x256xf32, #tpu.memory_space<vmem>>, vector<1x8x256xf32>
    %772 = vector.shape_cast %771 : vector<1x8x256xf32> to vector<8x256xf32>
    %773 = vector.shape_cast %770 : vector<8x256xf32> to vector<1x8x256xf32>
    tpu.vector_store %arg11[%c0_415, %c0_416, %c0_417], %773 {strides = array<i32>} : memref<1x8x256xf32, #tpu.memory_space<vmem>>, vector<1x8x256xf32>,
    return
  }
  func.func @transform_0(%arg0: i32) -> (i32, i32, i32) {
    %c0_i32 = arith.constant 0 : i32
    %c0_i32_0 = arith.constant 0 : i32
    %c0_i32_1 = arith.constant 0 : i32
    return %arg0, %c0_i32, %c0_i32_0 : i32, i32, i32
  }
  func.func @transform_1(%arg0: i32) -> (i32, i32) {
    %c0_i32 = arith.constant 0 : i32
    %c0_i32_0 = arith.constant 0 : i32
    %c0_i32_1 = arith.constant 0 : i32
    return %c0_i32, %c0_i32_0 : i32, i32
  }
  func.func @transform_2(%arg0: i32) -> (i32, i32) {
    %c0_i32 = arith.constant 0 : i32
    %c0_i32_0 = arith.constant 0 : i32
    %c0_i32_1 = arith.constant 0 : i32
    return %c0_i32, %c0_i32_0 : i32, i32
  }
  func.func @transform_3(%arg0: i32) -> (i32, i32, i32) {
    %c0_i32 = arith.constant 0 : i32
    %c0_i32_0 = arith.constant 0 : i32
    %c0_i32_1 = arith.constant 0 : i32
    %c0_i32_2 = arith.constant 0 : i32
    return %c0_i32, %c0_i32_0, %c0_i32_1 : i32, i32, i32
  }
  func.func @transform_4(%arg0: i32) -> (i32, i32) {
    %c0_i32 = arith.constant 0 : i32
    %c0_i32_0 = arith.constant 0 : i32
    %c0_i32_1 = arith.constant 0 : i32
    return %c0_i32, %c0_i32_0 : i32, i32
  }
  func.func @transform_5(%arg0: i32) -> (i32, i32, i32) {
    %c0_i32 = arith.constant 0 : i32
    %c0_i32_0 = arith.constant 0 : i32
    %c0_i32_1 = arith.constant 0 : i32
    %c0_i32_2 = arith.constant 0 : i32
    return %c0_i32, %c0_i32_0, %c0_i32_1 : i32, i32, i32
  }
  func.func @transform_6(%arg0: i32) -> (i32, i32) {
    %c0_i32 = arith.constant 0 : i32
    %c0_i32_0 = arith.constant 0 : i32
    %c0_i32_1 = arith.constant 0 : i32
    return %c0_i32, %c0_i32_0 : i32, i32
  }
  func.func @transform_7(%arg0: i32) -> (i32, i32, i32) {
    %c0_i32 = arith.constant 0 : i32
    %c0_i32_0 = arith.constant 0 : i32
    %c0_i32_1 = arith.constant 0 : i32
    %c0_i32_2 = arith.constant 0 : i32
    return %c0_i32, %c0_i32_0, %c0_i32_1 : i32, i32, i32
  }
  func.func @transform_8(%arg0: i32) -> (i32, i32) {
    %c0_i32 = arith.constant 0 : i32
    %c0_i32_0 = arith.constant 0 : i32
    %c0_i32_1 = arith.constant 0 : i32
    return %c0_i32, %c0_i32_0 : i32, i32
  }
  func.func @transform_9(%arg0: i32) -> (i32, i32) {
    %c0_i32 = arith.constant 0 : i32
    %c0_i32_0 = arith.constant 0 : i32
    %c0_i32_1 = arith.constant 0 : i32
    return %c0_i32, %c0_i32_0 : i32, i32
  }
  func.func @transform_10(%arg0: i32) -> (i32, i32, i32) {
    %c0_i32 = arith.constant 0 : i32
    %c0_i32_0 = arith.constant 0 : i32
    %c0_i32_1 = arith.constant 0 : i32
    return %arg0, %c0_i32, %c0_i32_0 : i32, i32, i32
  }
}

</mosaic_0001>

<llo_original>
// kernel: tpu_custom_call.1
$region0: #{tpu_custom_call.1}
  #allocation0 [shape = 'u32[]', space=smem, size = 0x4, offset = 0x4, fixed_abs, tag = 'smem constant byte address 0x4 - core index']
  #allocation1 [shape = 'u32[144,128]{1,0:T(1,128)}', space=vmem, size = 0x12000, scoped, tag = 'internal scratch']
  %s0 = inlined_call_operand.vmem [shape: f32[1,8,256], index: 0, kind: input, shape index: {}]
  %s1 = inlined_call_operand.vmem [shape: f32[8,8], index: 1, kind: input, shape index: {}]
  %s2 = inlined_call_operand.vmem [shape: f32[8,1], index: 2, kind: input, shape index: {}]
  %s3 = inlined_call_operand.vmem [shape: f32[49,8,1], index: 3, kind: input, shape index: {}]
  %s4 = inlined_call_operand.vmem [shape: f32[8,1], index: 4, kind: input, shape index: {}]
  %s5 = inlined_call_operand.vmem [shape: f32[49,8,1], index: 5, kind: input, shape index: {}]
  %s6 = inlined_call_operand.vmem [shape: f32[8,1], index: 6, kind: input, shape index: {}]
  %s7 = inlined_call_operand.vmem [shape: f32[49,1,256], index: 7, kind: input, shape index: {}]
  %s8 = inlined_call_operand.vmem [shape: f32[8,8], index: 8, kind: input, shape index: {}]
  %s9 = inlined_call_operand.vmem [shape: f32[8,1], index: 9, kind: input, shape index: {}]
  %s10 = inlined_call_operand.hbm [shape: f32[1,8,256], index: 10, kind: output, shape index: {}]
  %s11 = sld [smem:[#allocation0]]
  $region50: #{tpu_custom_call.1} parent=0
    _
  %s13 = ssub.s32 1, %s11
  %s14 = scalar_select 0, %s13, %s11
  $region1: #{tpu_custom_call.1} parent=0
    #allocation2 [shape = 'u8[8192]{0}', space=vmem, size = 0x2000, scoped, tag = 'output window, operand 0, single buffered']
    #allocation3 [shape = 's32[1]{0}', space=sflag, size = 0x4, scoped, tag = 'scoped memory for tpu_custom_call.1']
    %15 = vsyncpa [#allocation3], 0
    // Predicated region
    $region2: #{tpu_custom_call.1} parent=1 // pred_check
      _
    $region3: #{tpu_custom_call.1} parent=1 // pred_check_branch
      %17 = sbr.rel (0) target = $region5
    $region4: #{tpu_custom_call.1} parent=1 // pred_region
      _
    $region5: #{tpu_custom_call.1} parent=1 // pred_fallthru
      _
    // Predicated region
    $region6: #{tpu_custom_call.1} parent=1 // pred_check
      _
    $region7: #{tpu_custom_call.1} parent=1 // pred_check_branch
      %19 = sbr.rel (0) target = $region9
    $region8: #{tpu_custom_call.1} parent=1 // pred_region
      _
    $region9: #{tpu_custom_call.1} parent=1 // pred_fallthru
      _
    // Predicated region
    $region10: #{tpu_custom_call.1} parent=1 // pred_check
      _
    $region11: #{tpu_custom_call.1} parent=1 // pred_check_branch
      %21 = sbr.rel (0) target = $region13
    $region12: #{tpu_custom_call.1} parent=1 // pred_region
      _
    $region13: #{tpu_custom_call.1} parent=1 // pred_fallthru
      _
    // Predicated region
    $region14: #{tpu_custom_call.1} parent=1 // pred_check
      _
    $region15: #{tpu_custom_call.1} parent=1 // pred_check_branch
      %23 = sbr.rel (0) target = $region17
    $region16: #{tpu_custom_call.1} parent=1 // pred_region
      _
    $region17: #{tpu_custom_call.1} parent=1 // pred_fallthru
      _
    // Predicated region
    $region18: #{tpu_custom_call.1} parent=1 // pred_check
      _
    $region19: #{tpu_custom_call.1} parent=1 // pred_check_branch
      %25 = sbr.rel (0) target = $region21
    $region20: #{tpu_custom_call.1} parent=1 // pred_region
      _
    $region21: #{tpu_custom_call.1} parent=1 // pred_fallthru
      _
    // Predicated region
    $region22: #{tpu_custom_call.1} parent=1 // pred_check
      _
    $region23: #{tpu_custom_call.1} parent=1 // pred_check_branch
      %27 = sbr.rel (0) target = $region25
    $region24: #{tpu_custom_call.1} parent=1 // pred_region
      _
    $region25: #{tpu_custom_call.1} parent=1 // pred_fallthru
      _
    // Predicated region
    $region26: #{tpu_custom_call.1} parent=1 // pred_check
      _
    $region27: #{tpu_custom_call.1} parent=1 // pred_check_branch
      %29 = sbr.rel (0) target = $region29
    $region28: #{tpu_custom_call.1} parent=1 // pred_region
      _
    $region29: #{tpu_custom_call.1} parent=1 // pred_fallthru
      _
    // Predicated region
    $region30: #{tpu_custom_call.1} parent=1 // pred_check
      _
    $region31: #{tpu_custom_call.1} parent=1 // pred_check_branch
      %31 = sbr.rel (0) target = $region33
    $region32: #{tpu_custom_call.1} parent=1 // pred_region
      _
    $region33: #{tpu_custom_call.1} parent=1 // pred_fallthru
      _
    // Predicated region
    $region34: #{tpu_custom_call.1} parent=1 // pred_check
      _
    $region35: #{tpu_custom_call.1} parent=1 // pred_check_branch
      %33 = sbr.rel (0) target = $region37
    $region36: #{tpu_custom_call.1} parent=1 // pred_region
      _
    $region37: #{tpu_custom_call.1} parent=1 // pred_fallthru
      _
    // Predicated region
    $region38: #{tpu_custom_call.1} parent=1 // pred_check
      _
    $region39: #{tpu_custom_call.1} parent=1 // pred_check_branch
      %35 = sbr.rel (0) target = $region41
    $region40: #{tpu_custom_call.1} parent=1 // pred_region
      _
    $region41: #{tpu_custom_call.1} parent=1 // pred_fallthru
      _
    %v36 = vld [vmem:[%s0] sm:$0xff]
    %v37 = vld [vmem:[%s0 + $0x8] sm:$0xff]
    %v38 = vld [vmem:[%s1] sm:$0xff]
    %v39 = vld [vmem:[%s2] sm:$0xff]
    %41 = vset.pattern.permute.xlu0 0
    %42 = vperm.xlu0 %41, %v39
    %v43 = vpop.permute.xlu0 %42
    %vm45 = vcmask 64512
    %v47 = vsel %vm45, %v38, 0
    %v49 = vand.u32 %v37, 4294901760
    %50 = vmatprep.subr.mxu0 %v49
    %v51 = vand.u32 %v36, 4294901760
    %52 = vmatpush1.msra.mxu0 %v51
    %53 = vmatprep.subr.mxu0 0.0
    %54 = vmatpush1.msra.mxu0 0.0
    %55 = vmatprep.subr.mxu0 0.0
    %56 = vmatpush1.msra.mxu0 0.0
    %57 = vmatprep.subr.mxu0 0.0
    %58 = vmatpush1.msra.mxu0 0.0
    %59 = vmatprep.subr.mxu0 0.0
    %60 = vmatpush1.msra.mxu0 0.0
    %61 = vmatprep.subr.mxu0 0.0
    %62 = vmatpush1.msra.mxu0 0.0
    %63 = vmatprep.subr.mxu0 0.0
    %64 = vmatpush1.msra.mxu0 0.0
    %65 = vmatprep.subr.mxu0 0.0
    %66 = vmatpush1.msra.mxu0 0.0
    %67 = vmatprep.subr.mxu0 0.0
    %68 = vmatpush1.msra.mxu0 0.0
    %69 = vmatprep.subr.mxu0 0.0
    %70 = vmatpush1.msra.mxu0 0.0
    %71 = vmatprep.subr.mxu0 0.0
    %72 = vmatpush1.msra.mxu0 0.0
    %73 = vmatprep.subr.mxu0 0.0
    %74 = vmatpush1.msra.mxu0 0.0
    %75 = vmatprep.subr.mxu0 0.0
    %76 = vmatpush1.msra.mxu0 0.0
    %77 = vmatprep.subr.mxu0 0.0
    %78 = vmatpush1.msra.mxu0 0.0
    %79 = vmatprep.subr.mxu0 0.0
    %80 = vmatpush1.msra.mxu0 0.0
    %81 = vmatprep.subr.mxu0 0.0
    %82 = vmatpush1.msra.mxu0 0.0
    %83 = vmatprep.subr.mxu0 0.0
    %84 = vmatpush1.msra.mxu0 0.0
    %85 = vmatprep.subr.mxu0 0.0
    %86 = vmatpush1.msra.mxu0 0.0
    %87 = vmatprep.subr.mxu0 0.0
    %88 = vmatpush1.msra.mxu0 0.0
    %89 = vmatprep.subr.mxu0 0.0
    %90 = vmatpush1.msra.mxu0 0.0
    %91 = vmatprep.subr.mxu0 0.0
    %92 = vmatpush1.msra.mxu0 0.0
    %93 = vmatprep.subr.mxu0 0.0
    %94 = vmatpush1.msra.mxu0 0.0
    %95 = vmatprep.subr.mxu0 0.0
    %96 = vmatpush1.msra.mxu0 0.0
    %97 = vmatprep.subr.mxu0 0.0
    %98 = vmatpush1.msra.mxu0 0.0
    %99 = vmatprep.subr.mxu0 0.0
    %100 = vmatpush1.msra.mxu0 0.0
    %101 = vmatprep.subr.mxu0 0.0
    %102 = vmatpush1.msra.mxu0 0.0
    %103 = vmatprep.subr.mxu0 0.0
    %104 = vmatpush1.msra.mxu0 0.0
    %105 = vmatprep.subr.mxu0 0.0
    %106 = vmatpush1.msra.mxu0 0.0
    %107 = vmatprep.subr.mxu0 0.0
    %108 = vmatpush1.msra.mxu0 0.0
    %109 = vmatprep.subr.mxu0 0.0
    %110 = vmatpush1.msra.mxu0 0.0
    %111 = vmatprep.subr.mxu0 0.0
    %112 = vmatpush1.msra.mxu0 0.0
    %113 = vmatprep.subr.mxu0 0.0
    %114 = vmatpush1.msra.mxu0 0.0
    %115 = vmatprep.mubr.f32.mxu0 0.0
    %v116 = vand.u32 %v47, 4294901760
    %v117 = vsub.f32 %v47, %v116
    %v118 = vand.u32 %v117, 4294901760
    %v119 = vsub.f32 %v117, %v118
    %v120 = vand.u32 %v119, 4294901760
    %121 = vmatmul.mubr.f32.gmra.mrb[0].mxu0 %v120
    %v122 = vpop.f32.mrb[0].mxu0
    %v123 = vadd.f32 %v43, %v122
    %v124 = vpop.f32.mrb[0].mxu0
    %v125 = vadd.f32 %v43, %v124
    %126 = vdwg.mxu0
    %v127 = vand.u32 %v37, 4294901760
    %v128 = vsub.f32 %v37, %v127
    %v129 = vand.u32 %v128, 4294901760
    %v130 = vsub.f32 %v128, %v129
    %v131 = vand.u32 %v130, 4294901760
    %132 = vmatprep.subr.mxu0 %v131
    %v133 = vand.u32 %v36, 4294901760
    %v134 = vsub.f32 %v36, %v133
    %v135 = vand.u32 %v134, 4294901760
    %v136 = vsub.f32 %v134, %v135
    %v137 = vand.u32 %v136, 4294901760
    %138 = vmatpush1.msra.mxu0 %v137
    %139 = vmatprep.subr.mxu0 0.0
    %140 = vmatpush1.msra.mxu0 0.0
    %141 = vmatprep.subr.mxu0 0.0
    %142 = vmatpush1.msra.mxu0 0.0
    %143 = vmatprep.subr.mxu0 0.0
    %144 = vmatpush1.msra.mxu0 0.0
    %145 = vmatprep.subr.mxu0 0.0
    %146 = vmatpush1.msra.mxu0 0.0
    %147 = vmatprep.subr.mxu0 0.0
    %148 = vmatpush1.msra.mxu0 0.0
    %149 = vmatprep.subr.mxu0 0.0
    %150 = vmatpush1.msra.mxu0 0.0
    %151 = vmatprep.subr.mxu0 0.0
    %152 = vmatpush1.msra.mxu0 0.0
    %153 = vmatprep.subr.mxu0 0.0
    %154 = vmatpush1.msra.mxu0 0.0
    %155 = vmatprep.subr.mxu0 0.0
    %156 = vmatpush1.msra.mxu0 0.0
    %157 = vmatprep.subr.mxu0 0.0
    %158 = vmatpush1.msra.mxu0 0.0
    %159 = vmatprep.subr.mxu0 0.0
    %160 = vmatpush1.msra.mxu0 0.0
    %161 = vmatprep.subr.mxu0 0.0
    %162 = vmatpush1.msra.mxu0 0.0
    %163 = vmatprep.subr.mxu0 0.0
    %164 = vmatpush1.msra.mxu0 0.0
    %165 = vmatprep.subr.mxu0 0.0
    %166 = vmatpush1.msra.mxu0 0.0
    %167 = vmatprep.subr.mxu0 0.0
    %168 = vmatpush1.msra.mxu0 0.0
    %169 = vmatprep.subr.mxu0 0.0
    %170 = vmatpush1.msra.mxu0 0.0
    %171 = vmatprep.subr.mxu0 0.0
    %172 = vmatpush1.msra.mxu0 0.0
    %173 = vmatprep.subr.mxu0 0.0
    %174 = vmatpush1.msra.mxu0 0.0
    %175 = vmatprep.subr.mxu0 0.0
    %176 = vmatpush1.msra.mxu0 0.0
    %177 = vmatprep.subr.mxu0 0.0
    %178 = vmatpush1.msra.mxu0 0.0
    %179 = vmatprep.subr.mxu0 0.0
    %180 = vmatpush1.msra.mxu0 0.0
    %181 = vmatprep.subr.mxu0 0.0
    %182 = vmatpush1.msra.mxu0 0.0
    %183 = vmatprep.subr.mxu0 0.0
    %184 = vmatpush1.msra.mxu0 0.0
    %185 = vmatprep.subr.mxu0 0.0
    %186 = vmatpush1.msra.mxu0 0.0
    %187 = vmatprep.subr.mxu0 0.0
    %188 = vmatpush1.msra.mxu0 0.0
    %189 = vmatprep.subr.mxu0 0.0
    %190 = vmatpush1.msra.mxu0 0.0
    %191 = vmatprep.subr.mxu0 0.0
    %192 = vmatpush1.msra.mxu0 0.0
    %193 = vmatprep.subr.mxu0 0.0
    %194 = vmatpush1.msra.mxu0 0.0
    %195 = vmatprep.subr.mxu0 0.0
    %196 = vmatpush1.msra.mxu0 0.0
    %197 = vmatprep.subr.mxu0 0.0
    %198 = vmatpush1.msra.mxu0 0.0
    %199 = vmatprep.subr.mxu0 0.0
    %200 = vmatpush1.msra.mxu0 0.0
    %201 = vmatprep.mubr.f32.mxu0 0.0
    %v202 = vand.u32 %v47, 4294901760
    %203 = vmatmul.mubr.f32.gmra.mrb[0].mxu0 %v202
    %v204 = vpop.f32.mrb[0].mxu0
    %v205 = vadd.f32 %v123, %v204
    %v206 = vpop.f32.mrb[0].mxu0
    %v207 = vadd.f32 %v125, %v206
    %208 = vdwg.mxu0
    %v209 = vand.u32 %v37, 4294901760
    %v210 = vsub.f32 %v37, %v209
    %211 = vmatprep.subr.mxu0 %v210
    %v212 = vand.u32 %v36, 4294901760
    %v213 = vsub.f32 %v36, %v212
    %214 = vmatpush1.msra.mxu0 %v213
    %215 = vmatprep.subr.mxu0 0.0
    %216 = vmatpush1.msra.mxu0 0.0
    %217 = vmatprep.subr.mxu0 0.0
    %218 = vmatpush1.msra.mxu0 0.0
    %219 = vmatprep.subr.mxu0 0.0
    %220 = vmatpush1.msra.mxu0 0.0
    %221 = vmatprep.subr.mxu0 0.0
    %222 = vmatpush1.msra.mxu0 0.0
    %223 = vmatprep.subr.mxu0 0.0
    %224 = vmatpush1.msra.mxu0 0.0
    %225 = vmatprep.subr.mxu0 0.0
    %226 = vmatpush1.msra.mxu0 0.0
    %227 = vmatprep.subr.mxu0 0.0
    %228 = vmatpush1.msra.mxu0 0.0
    %229 = vmatprep.subr.mxu0 0.0
    %230 = vmatpush1.msra.mxu0 0.0
    %231 = vmatprep.subr.mxu0 0.0
    %232 = vmatpush1.msra.mxu0 0.0
    %233 = vmatprep.subr.mxu0 0.0
    %234 = vmatpush1.msra.mxu0 0.0
    %235 = vmatprep.subr.mxu0 0.0
    %236 = vmatpush1.msra.mxu0 0.0
    %237 = vmatprep.subr.mxu0 0.0
    %238 = vmatpush1.msra.mxu0 0.0
    %239 = vmatprep.subr.mxu0 0.0
    %240 = vmatpush1.msra.mxu0 0.0
    %241 = vmatprep.subr.mxu0 0.0
    %242 = vmatpush1.msra.mxu0 0.0
    %243 = vmatprep.subr.mxu0 0.0
    %244 = vmatpush1.msra.mxu0 0.0
    %245 = vmatprep.subr.mxu0 0.0
    %246 = vmatpush1.msra.mxu0 0.0
    %247 = vmatprep.subr.mxu0 0.0
    %248 = vmatpush1.msra.mxu0 0.0
    %249 = vmatprep.subr.mxu0 0.0
    %250 = vmatpush1.msra.mxu0 0.0
    %251 = vmatprep.subr.mxu0 0.0
    %252 = vmatpush1.msra.mxu0 0.0
    %253 = vmatprep.subr.mxu0 0.0
    %254 = vmatpush1.msra.mxu0 0.0
    %255 = vmatprep.subr.mxu0 0.0
    %256 = vmatpush1.msra.mxu0 0.0
    %257 = vmatprep.subr.mxu0 0.0
    %258 = vmatpush1.msra.mxu0 0.0
    %259 = vmatprep.subr.mxu0 0.0
    %260 = vmatpush1.msra.mxu0 0.0
    %261 = vmatprep.subr.mxu0 0.0
    %262 = vmatpush1.msra.mxu0 0.0
    %263 = vmatprep.subr.mxu0 0.0
    %264 = vmatpush1.msra.mxu0 0.0
    %265 = vmatprep.subr.mxu0 0.0
    %266 = vmatpush1.msra.mxu0 0.0
    %267 = vmatprep.subr.mxu0 0.0
    %268 = vmatpush1.msra.mxu0 0.0
    %269 = vmatprep.subr.mxu0 0.0
    %270 = vmatpush1.msra.mxu0 0.0
    %271 = vmatprep.subr.mxu0 0.0
    %272 = vmatpush1.msra.mxu0 0.0
    %273 = vmatprep.subr.mxu0 0.0
    %274 = vmatpush1.msra.mxu0 0.0
    %275 = vmatprep.subr.mxu0 0.0
    %276 = vmatpush1.msra.mxu0 0.0
    %277 = vmatprep.mubr.f32.mxu0 0.0
    %v278 = vand.u32 %v47, 4294901760
    %v279 = vsub.f32 %v47, %v278
    %280 = vmatmul.mubr.f32.gmra.mrb[0].mxu0 %v279
    %v281 = vpop.f32.mrb[0].mxu0
    %v282 = vadd.f32 %v205, %v281
    %v283 = vpop.f32.mrb[0].mxu0
    %v284 = vadd.f32 %v207, %v283
    %285 = vdwg.mxu0
    %v286 = vand.u32 %v37, 4294901760
    %287 = vmatprep.subr.mxu0 %v286
    %v288 = vand.u32 %v36, 4294901760
    %289 = vmatpush1.msra.mxu0 %v288
    %290 = vmatprep.subr.mxu0 0.0
    %291 = vmatpush1.msra.mxu0 0.0
    %292 = vmatprep.subr.mxu0 0.0
    %293 = vmatpush1.msra.mxu0 0.0
    %294 = vmatprep.subr.mxu0 0.0
    %295 = vmatpush1.msra.mxu0 0.0
    %296 = vmatprep.subr.mxu0 0.0
    %297 = vmatpush1.msra.mxu0 0.0
    %298 = vmatprep.subr.mxu0 0.0
    %299 = vmatpush1.msra.mxu0 0.0
    %300 = vmatprep.subr.mxu0 0.0
    %301 = vmatpush1.msra.mxu0 0.0
    %302 = vmatprep.subr.mxu0 0.0
    %303 = vmatpush1.msra.mxu0 0.0
    %304 = vmatprep.subr.mxu0 0.0
    %305 = vmatpush1.msra.mxu0 0.0
    %306 = vmatprep.subr.mxu0 0.0
    %307 = vmatpush1.msra.mxu0 0.0
    %308 = vmatprep.subr.mxu0 0.0
    %309 = vmatpush1.msra.mxu0 0.0
    %310 = vmatprep.subr.mxu0 0.0
    %311 = vmatpush1.msra.mxu0 0.0
    %312 = vmatprep.subr.mxu0 0.0
    %313 = vmatpush1.msra.mxu0 0.0
    %314 = vmatprep.subr.mxu0 0.0
    %315 = vmatpush1.msra.mxu0 0.0
    %316 = vmatprep.subr.mxu0 0.0
    %317 = vmatpush1.msra.mxu0 0.0
    %318 = vmatprep.subr.mxu0 0.0
    %319 = vmatpush1.msra.mxu0 0.0
    %320 = vmatprep.subr.mxu0 0.0
    %321 = vmatpush1.msra.mxu0 0.0
    %322 = vmatprep.subr.mxu0 0.0
    %323 = vmatpush1.msra.mxu0 0.0
    %324 = vmatprep.subr.mxu0 0.0
    %325 = vmatpush1.msra.mxu0 0.0
    %326 = vmatprep.subr.mxu0 0.0
    %327 = vmatpush1.msra.mxu0 0.0
    %328 = vmatprep.subr.mxu0 0.0
    %329 = vmatpush1.msra.mxu0 0.0
    %330 = vmatprep.subr.mxu0 0.0
    %331 = vmatpush1.msra.mxu0 0.0
    %332 = vmatprep.subr.mxu0 0.0
    %333 = vmatpush1.msra.mxu0 0.0
    %334 = vmatprep.subr.mxu0 0.0
    %335 = vmatpush1.msra.mxu0 0.0
    %336 = vmatprep.subr.mxu0 0.0
    %337 = vmatpush1.msra.mxu0 0.0
    %338 = vmatprep.subr.mxu0 0.0
    %339 = vmatpush1.msra.mxu0 0.0
    %340 = vmatprep.subr.mxu0 0.0
    %341 = vmatpush1.msra.mxu0 0.0
    %342 = vmatprep.subr.mxu0 0.0
    %343 = vmatpush1.msra.mxu0 0.0
    %344 = vmatprep.subr.mxu0 0.0
    %345 = vmatpush1.msra.mxu0 0.0
    %346 = vmatprep.subr.mxu0 0.0
    %347 = vmatpush1.msra.mxu0 0.0
    %348 = vmatprep.subr.mxu0 0.0
    %349 = vmatpush1.msra.mxu0 0.0
    %350 = vmatprep.subr.mxu0 0.0
    %351 = vmatpush1.msra.mxu0 0.0
    %352 = vmatprep.mubr.f32.mxu0 0.0
    %v353 = vand.u32 %v47, 4294901760
    %v354 = vsub.f32 %v47, %v353
    %v355 = vand.u32 %v354, 4294901760
    %356 = vmatmul.mubr.f32.gmra.mrb[0].mxu0 %v355
    %v357 = vpop.f32.mrb[0].mxu0
    %v358 = vadd.f32 %v282, %v357
    %v359 = vpop.f32.mrb[0].mxu0
    %v360 = vadd.f32 %v284, %v359
    %361 = vdwg.mxu0
    %v362 = vand.u32 %v37, 4294901760
    %v363 = vsub.f32 %v37, %v362
    %v364 = vand.u32 %v363, 4294901760
    %365 = vmatprep.subr.mxu0 %v364
    %v366 = vand.u32 %v36, 4294901760
    %v367 = vsub.f32 %v36, %v366
    %v368 = vand.u32 %v367, 4294901760
    %369 = vmatpush1.msra.mxu0 %v368
    %370 = vmatprep.subr.mxu0 0.0
    %371 = vmatpush1.msra.mxu0 0.0
    %372 = vmatprep.subr.mxu0 0.0
    %373 = vmatpush1.msra.mxu0 0.0
    %374 = vmatprep.subr.mxu0 0.0
    %375 = vmatpush1.msra.mxu0 0.0
    %376 = vmatprep.subr.mxu0 0.0
    %377 = vmatpush1.msra.mxu0 0.0
    %378 = vmatprep.subr.mxu0 0.0
    %379 = vmatpush1.msra.mxu0 0.0
    %380 = vmatprep.subr.mxu0 0.0
    %381 = vmatpush1.msra.mxu0 0.0
    %382 = vmatprep.subr.mxu0 0.0
    %383 = vmatpush1.msra.mxu0 0.0
    %384 = vmatprep.subr.mxu0 0.0
    %385 = vmatpush1.msra.mxu0 0.0
    %386 = vmatprep.subr.mxu0 0.0
    %387 = vmatpush1.msra.mxu0 0.0
    %388 = vmatprep.subr.mxu0 0.0
    %389 = vmatpush1.msra.mxu0 0.0
    %390 = vmatprep.subr.mxu0 0.0
    %391 = vmatpush1.msra.mxu0 0.0
    %392 = vmatprep.subr.mxu0 0.0
    %393 = vmatpush1.msra.mxu0 0.0
    %394 = vmatprep.subr.mxu0 0.0
    %395 = vmatpush1.msra.mxu0 0.0
    %396 = vmatprep.subr.mxu0 0.0
    %397 = vmatpush1.msra.mxu0 0.0
    %398 = vmatprep.subr.mxu0 0.0
    %399 = vmatpush1.msra.mxu0 0.0
    %400 = vmatprep.subr.mxu0 0.0
    %401 = vmatpush1.msra.mxu0 0.0
    %402 = vmatprep.subr.mxu0 0.0
    %403 = vmatpush1.msra.mxu0 0.0
    %404 = vmatprep.subr.mxu0 0.0
    %405 = vmatpush1.msra.mxu0 0.0
    %406 = vmatprep.subr.mxu0 0.0
    %407 = vmatpush1.msra.mxu0 0.0
    %408 = vmatprep.subr.mxu0 0.0
    %409 = vmatpush1.msra.mxu0 0.0
    %410 = vmatprep.subr.mxu0 0.0
    %411 = vmatpush1.msra.mxu0 0.0
    %412 = vmatprep.subr.mxu0 0.0
    %413 = vmatpush1.msra.mxu0 0.0
    %414 = vmatprep.subr.mxu0 0.0
    %415 = vmatpush1.msra.mxu0 0.0
    %416 = vmatprep.subr.mxu0 0.0
    %417 = vmatpush1.msra.mxu0 0.0
    %418 = vmatprep.subr.mxu0 0.0
    %419 = vmatpush1.msra.mxu0 0.0
    %420 = vmatprep.subr.mxu0 0.0
    %421 = vmatpush1.msra.mxu0 0.0
    %422 = vmatprep.subr.mxu0 0.0
    %423 = vmatpush1.msra.mxu0 0.0
    %424 = vmatprep.subr.mxu0 0.0
    %425 = vmatpush1.msra.mxu0 0.0
    %426 = vmatprep.subr.mxu0 0.0
    %427 = vmatpush1.msra.mxu0 0.0
    %428 = vmatprep.subr.mxu0 0.0
    %429 = vmatpush1.msra.mxu0 0.0
    %430 = vmatprep.subr.mxu0 0.0
    %431 = vmatpush1.msra.mxu0 0.0
    %432 = vmatprep.mubr.f32.mxu0 0.0
    %v433 = vand.u32 %v47, 4294901760
    %434 = vmatmul.mubr.f32.gmra.mrb[0].mxu0 %v433
    %v435 = vpop.f32.mrb[0].mxu0
    %v436 = vadd.f32 %v358, %v435
    %v437 = vpop.f32.mrb[0].mxu0
    %v438 = vadd.f32 %v360, %v437
    %439 = vdwg.mxu0
    %v440 = vand.u32 %v37, 4294901760
    %441 = vmatprep.subr.mxu0 %v440
    %v442 = vand.u32 %v36, 4294901760
    %443 = vmatpush1.msra.mxu0 %v442
    %444 = vmatprep.subr.mxu0 0.0
    %445 = vmatpush1.msra.mxu0 0.0
    %446 = vmatprep.subr.mxu0 0.0
    %447 = vmatpush1.msra.mxu0 0.0
    %448 = vmatprep.subr.mxu0 0.0
    %449 = vmatpush1.msra.mxu0 0.0
    %450 = vmatprep.subr.mxu0 0.0
    %451 = vmatpush1.msra.mxu0 0.0
    %452 = vmatprep.subr.mxu0 0.0
    %453 = vmatpush1.msra.mxu0 0.0
    %454 = vmatprep.subr.mxu0 0.0
    %455 = vmatpush1.msra.mxu0 0.0
    %456 = vmatprep.subr.mxu0 0.0
    %457 = vmatpush1.msra.mxu0 0.0
    %458 = vmatprep.subr.mxu0 0.0
    %459 = vmatpush1.msra.mxu0 0.0
    %460 = vmatprep.subr.mxu0 0.0
    %461 = vmatpush1.msra.mxu0 0.0
    %462 = vmatprep.subr.mxu0 0.0
    %463 = vmatpush1.msra.mxu0 0.0
    %464 = vmatprep.subr.mxu0 0.0
    %465 = vmatpush1.msra.mxu0 0.0
    %466 = vmatprep.subr.mxu0 0.0
    %467 = vmatpush1.msra.mxu0 0.0
    %468 = vmatprep.subr.mxu0 0.0
    %469 = vmatpush1.msra.mxu0 0.0
    %470 = vmatprep.subr.mxu0 0.0
    %471 = vmatpush1.msra.mxu0 0.0
    %472 = vmatprep.subr.mxu0 0.0
    %473 = vmatpush1.msra.mxu0 0.0
    %474 = vmatprep.subr.mxu0 0.0
    %475 = vmatpush1.msra.mxu0 0.0
    %476 = vmatprep.subr.mxu0 0.0
    %477 = vmatpush1.msra.mxu0 0.0
    %478 = vmatprep.subr.mxu0 0.0
    %479 = vmatpush1.msra.mxu0 0.0
    %480 = vmatprep.subr.mxu0 0.0
    %481 = vmatpush1.msra.mxu0 0.0
    %482 = vmatprep.subr.mxu0 0.0
    %483 = vmatpush1.msra.mxu0 0.0
    %484 = vmatprep.subr.mxu0 0.0
    %485 = vmatpush1.msra.mxu0 0.0
    %486 = vmatprep.subr.mxu0 0.0
    %487 = vmatpush1.msra.mxu0 0.0
    %488 = vmatprep.subr.mxu0 0.0
    %489 = vmatpush1.msra.mxu0 0.0
    %490 = vmatprep.subr.mxu0 0.0
    %491 = vmatpush1.msra.mxu0 0.0
    %492 = vmatprep.subr.mxu0 0.0
    %493 = vmatpush1.msra.mxu0 0.0
    %494 = vmatprep.subr.mxu0 0.0
    %495 = vmatpush1.msra.mxu0 0.0
    %496 = vmatprep.subr.mxu0 0.0
    %497 = vmatpush1.msra.mxu0 0.0
    %498 = vmatprep.subr.mxu0 0.0
    %499 = vmatpush1.msra.mxu0 0.0
    %500 = vmatprep.subr.mxu0 0.0
    %501 = vmatpush1.msra.mxu0 0.0
    %502 = vmatprep.subr.mxu0 0.0
    %503 = vmatpush1.msra.mxu0 0.0
    %504 = vmatprep.subr.mxu0 0.0
    %505 = vmatpush1.msra.mxu0 0.0
    %506 = vmatprep.mubr.f32.mxu0 0.0
    %v507 = vand.u32 %v47, 4294901760
    %508 = vmatmul.mubr.f32.gmra.mrb[0].mxu0 %v507
    %v509 = vpop.f32.mrb[0].mxu0
    %v510 = vadd.f32 %v436, %v509
    %v511 = vpop.f32.mrb[0].mxu0
    %v512 = vadd.f32 %v438, %v511
    %513 = vdwg.mxu0
    %516 = vrot.lane.b32.xlu0 %v510, 51
    %v517 = vpop.permute.xlu0 %516
    %518 = vrot.lane.b32.xlu0 %v512, 51
    %v519 = vpop.permute.xlu0 %518
    %vm520 = vcmask 416768
    %v521 = vsel %vm520, %v517, %v519
    %v525 = vsel %vm520, 0.0, %v517
    %v526 = vsel %vm520, %v519, 0.0
    %v527 = vld [vmem:[%s7] sm:$0x3]
    %v529 = vlaneseq
    %v530 = vshrl.u32 %v529, 7
    %v531 = vsub.s32 0, %v530
    %v532 = vrot.slane %v527, %v531
    %v533 = vlaneseq
    %v534 = vshrl.u32 %v533, 7
    %v535 = vsub.s32 1, %v534
    %v536 = vrot.slane %v527, %v535
    %v539 = vmul.f32 %v525, %v532
    %v540 = vmul.f32 %v521, %v536
    %v541 = vld [vmem:[%s3] sm:$0xff]
    %543 = vset.pattern.permute.xlu0 0
    %544 = vperm.xlu0 %543, %v541
    %v545 = vpop.permute.xlu0 %544
    %v547 = vmul.f32 %v539, %v545
    %v548 = vmul.f32 %v540, %v545
    %v549 = vadd.f32 %v547, 0.0
    %v550 = vadd.f32 %v548, 0.0
    %v551 = vld [vmem:[%s5] sm:$0xff]
    %553 = vset.pattern.permute.xlu0 0
    %554 = vperm.xlu0 %553, %v551
    %v555 = vpop.permute.xlu0 %554
    %v557 = vmul.f32 %v539, %v555
    %v558 = vmul.f32 %v540, %v555
    %v559 = vadd.f32 %v557, 0.0
    %v560 = vadd.f32 %v558, 0.0
    %s561 = scalar_lea.vmem %s7, 2
    %v562 = vld [vmem:[%s561] sm:$0x3]
    %v564 = vlaneseq
    %v565 = vshrl.u32 %v564, 7
    %v566 = vsub.s32 0, %v565
    %v567 = vrot.slane %v562, %v566
    %v568 = vlaneseq
    %v569 = vshrl.u32 %v568, 7
    %v570 = vsub.s32 1, %v569
    %v571 = vrot.slane %v562, %v570
    %572 = vrot.lane.b32.xlu0 %v567, 1
    %v573 = vpop.permute.xlu0 %572
    %574 = vrot.lane.b32.xlu0 %v571, 1
    %v575 = vpop.permute.xlu0 %574
    %vm576 = vcmask 7168
    %v577 = vsel %vm576, %v573, %v575
    %v581 = vmul.f32 %v525, %v573
    %v582 = vmul.f32 %v521, %v577
    %v583 = vmul.f32 %v526, %v575
    %s584 = scalar_lea.vmem %s3, 8
    %v585 = vld [vmem:[%s584] sm:$0xff]
    %587 = vset.pattern.permute.xlu0 0
    %588 = vperm.xlu0 %587, %v585
    %v589 = vpop.permute.xlu0 %588
    %v591 = vmul.f32 %v581, %v589
    %v592 = vmul.f32 %v582, %v589
    %v593 = vmul.f32 %v583, %v589
    %597 = vrot.lane.b32.xlu0 %v591, 127
    %v598 = vpop.permute.xlu0 %597
    %599 = vrot.lane.b32.xlu0 %v592, 127
    %v600 = vpop.permute.xlu0 %599
    %601 = vrot.lane.b32.xlu0 %v593, 127
    %v602 = vpop.permute.xlu0 %601
    %vm603 = vcmask 1039360
    %v604 = vsel %vm603, %v598, %v600
    %v605 = vsel %vm603, %v600, %v602
    %v608 = vadd.f32 %v549, %v604
    %v609 = vadd.f32 %v550, %v605
    %s610 = scalar_lea.vmem %s5, 8
    %v611 = vld [vmem:[%s610] sm:$0xff]
    %613 = vset.pattern.permute.xlu0 0
    %614 = vperm.xlu0 %613, %v611
    %v615 = vpop.permute.xlu0 %614
    %v617 = vmul.f32 %v581, %v615
    %v618 = vmul.f32 %v582, %v615
    %v619 = vmul.f32 %v583, %v615
    %623 = vrot.lane.b32.xlu0 %v617, 127
    %v624 = vpop.permute.xlu0 %623
    %625 = vrot.lane.b32.xlu0 %v618, 127
    %v626 = vpop.permute.xlu0 %625
    %627 = vrot.lane.b32.xlu0 %v619, 127
    %v628 = vpop.permute.xlu0 %627
    %v629 = vsel %vm603, %v624, %v626
    %v630 = vsel %vm603, %v626, %v628
    %v633 = vadd.f32 %v559, %v629
    %v634 = vadd.f32 %v560, %v630
    %s635 = scalar_lea.vmem %s7, 4
    %v636 = vld [vmem:[%s635] sm:$0x3]
    %v638 = vlaneseq
    %v639 = vshrl.u32 %v638, 7
    %v640 = vsub.s32 0, %v639
    %v641 = vrot.slane %v636, %v640
    %v642 = vlaneseq
    %v643 = vshrl.u32 %v642, 7
    %v644 = vsub.s32 1, %v643
    %v645 = vrot.slane %v636, %v644
    %646 = vrot.lane.b32.xlu0 %v641, 2
    %v647 = vpop.permute.xlu0 %646
    %648 = vrot.lane.b32.xlu0 %v645, 2
    %v649 = vpop.permute.xlu0 %648
    %vm650 = vcmask 15360
    %v651 = vsel %vm650, %v647, %v649
    %v655 = vmul.f32 %v525, %v647
    %v656 = vmul.f32 %v521, %v651
    %v657 = vmul.f32 %v526, %v649
    %s658 = scalar_lea.vmem %s3, 16
    %v659 = vld [vmem:[%s658] sm:$0xff]
    %661 = vset.pattern.permute.xlu0 0
    %662 = vperm.xlu0 %661, %v659
    %v663 = vpop.permute.xlu0 %662
    %v665 = vmul.f32 %v655, %v663
    %v666 = vmul.f32 %v656, %v663
    %v667 = vmul.f32 %v657, %v663
    %671 = vrot.lane.b32.xlu0 %v665, 126
    %v672 = vpop.permute.xlu0 %671
    %673 = vrot.lane.b32.xlu0 %v666, 126
    %v674 = vpop.permute.xlu0 %673
    %675 = vrot.lane.b32.xlu0 %v667, 126
    %v676 = vpop.permute.xlu0 %675
    %vm677 = vcmask 1031168
    %v678 = vsel %vm677, %v672, %v674
    %v679 = vsel %vm677, %v674, %v676
    %v682 = vadd.f32 %v608, %v678
    %v683 = vadd.f32 %v609, %v679
    %s684 = scalar_lea.vmem %s5, 16
    %v685 = vld [vmem:[%s684] sm:$0xff]
    %687 = vset.pattern.permute.xlu0 0
    %688 = vperm.xlu0 %687, %v685
    %v689 = vpop.permute.xlu0 %688
    %v691 = vmul.f32 %v655, %v689
    %v692 = vmul.f32 %v656, %v689
    %v693 = vmul.f32 %v657, %v689
    %697 = vrot.lane.b32.xlu0 %v691, 126
    %v698 = vpop.permute.xlu0 %697
    %699 = vrot.lane.b32.xlu0 %v692, 126
    %v700 = vpop.permute.xlu0 %699
    %701 = vrot.lane.b32.xlu0 %v693, 126
    %v702 = vpop.permute.xlu0 %701
    %v703 = vsel %vm677, %v698, %v700
    %v704 = vsel %vm677, %v700, %v702
    %v707 = vadd.f32 %v633, %v703
    %v708 = vadd.f32 %v634, %v704
    %s709 = scalar_lea.vmem %s7, 6
    %v710 = vld [vmem:[%s709] sm:$0x3]
    %v712 = vlaneseq
    %v713 = vshrl.u32 %v712, 7
    %v714 = vsub.s32 0, %v713
    %v715 = vrot.slane %v710, %v714
    %v716 = vlaneseq
    %v717 = vshrl.u32 %v716, 7
    %v718 = vsub.s32 1, %v717
    %v719 = vrot.slane %v710, %v718
    %720 = vrot.lane.b32.xlu0 %v715, 3
    %v721 = vpop.permute.xlu0 %720
    %722 = vrot.lane.b32.xlu0 %v719, 3
    %v723 = vpop.permute.xlu0 %722
    %vm724 = vcmask 23552
    %v725 = vsel %vm724, %v721, %v723
    %v729 = vmul.f32 %v525, %v721
    %v730 = vmul.f32 %v521, %v725
    %v731 = vmul.f32 %v526, %v723
    %s732 = scalar_lea.vmem %s3, 24
    %v733 = vld [vmem:[%s732] sm:$0xff]
    %735 = vset.pattern.permute.xlu0 0
    %736 = vperm.xlu0 %735, %v733
    %v737 = vpop.permute.xlu0 %736
    %v739 = vmul.f32 %v729, %v737
    %v740 = vmul.f32 %v730, %v737
    %v741 = vmul.f32 %v731, %v737
    %745 = vrot.lane.b32.xlu0 %v739, 125
    %v746 = vpop.permute.xlu0 %745
    %747 = vrot.lane.b32.xlu0 %v740, 125
    %v748 = vpop.permute.xlu0 %747
    %749 = vrot.lane.b32.xlu0 %v741, 125
    %v750 = vpop.permute.xlu0 %749
    %vm751 = vcmask 1022976
    %v752 = vsel %vm751, %v746, %v748
    %v753 = vsel %vm751, %v748, %v750
    %v756 = vadd.f32 %v682, %v752
    %v757 = vadd.f32 %v683, %v753
    %s758 = scalar_lea.vmem %s5, 24
    %v759 = vld [vmem:[%s758] sm:$0xff]
    %761 = vset.pattern.permute.xlu0 0
    %762 = vperm.xlu0 %761, %v759
    %v763 = vpop.permute.xlu0 %762
    %v765 = vmul.f32 %v729, %v763
    %v766 = vmul.f32 %v730, %v763
    %v767 = vmul.f32 %v731, %v763
    %771 = vrot.lane.b32.xlu0 %v765, 125
    %v772 = vpop.permute.xlu0 %771
    %773 = vrot.lane.b32.xlu0 %v766, 125
    %v774 = vpop.permute.xlu0 %773
    %775 = vrot.lane.b32.xlu0 %v767, 125
    %v776 = vpop.permute.xlu0 %775
    %v777 = vsel %vm751, %v772, %v774
    %v778 = vsel %vm751, %v774, %v776
    %v781 = vadd.f32 %v707, %v777
    %v782 = vadd.f32 %v708, %v778
    %s783 = scalar_lea.vmem %s7, 8
    %v784 = vld [vmem:[%s783] sm:$0x3]
    %v786 = vlaneseq
    %v787 = vshrl.u32 %v786, 7
    %v788 = vsub.s32 0, %v787
    %v789 = vrot.slane %v784, %v788
    %v790 = vlaneseq
    %v791 = vshrl.u32 %v790, 7
    %v792 = vsub.s32 1, %v791
    %v793 = vrot.slane %v784, %v792
    %794 = vrot.lane.b32.xlu0 %v789, 4
    %v795 = vpop.permute.xlu0 %794
    %796 = vrot.lane.b32.xlu0 %v793, 4
    %v797 = vpop.permute.xlu0 %796
    %vm798 = vcmask 31744
    %v799 = vsel %vm798, %v795, %v797
    %v803 = vmul.f32 %v525, %v795
    %v804 = vmul.f32 %v521, %v799
    %v805 = vmul.f32 %v526, %v797
    %s806 = scalar_lea.vmem %s3, 32
    %v807 = vld [vmem:[%s806] sm:$0xff]
    %809 = vset.pattern.permute.xlu0 0
    %810 = vperm.xlu0 %809, %v807
    %v811 = vpop.permute.xlu0 %810
    %v813 = vmul.f32 %v803, %v811
    %v814 = vmul.f32 %v804, %v811
    %v815 = vmul.f32 %v805, %v811
    %819 = vrot.lane.b32.xlu0 %v813, 124
    %v820 = vpop.permute.xlu0 %819
    %821 = vrot.lane.b32.xlu0 %v814, 124
    %v822 = vpop.permute.xlu0 %821
    %823 = vrot.lane.b32.xlu0 %v815, 124
    %v824 = vpop.permute.xlu0 %823
    %vm825 = vcmask 1014784
    %v826 = vsel %vm825, %v820, %v822
    %v827 = vsel %vm825, %v822, %v824
    %v830 = vadd.f32 %v756, %v826
    %v831 = vadd.f32 %v757, %v827
    %s832 = scalar_lea.vmem %s5, 32
    %v833 = vld [vmem:[%s832] sm:$0xff]
    %835 = vset.pattern.permute.xlu0 0
    %836 = vperm.xlu0 %835, %v833
    %v837 = vpop.permute.xlu0 %836
    %v839 = vmul.f32 %v803, %v837
    %v840 = vmul.f32 %v804, %v837
    %v841 = vmul.f32 %v805, %v837
    %845 = vrot.lane.b32.xlu0 %v839, 124
    %v846 = vpop.permute.xlu0 %845
    %847 = vrot.lane.b32.xlu0 %v840, 124
    %v848 = vpop.permute.xlu0 %847
    %849 = vrot.lane.b32.xlu0 %v841, 124
    %v850 = vpop.permute.xlu0 %849
    %v851 = vsel %vm825, %v846, %v848
    %v852 = vsel %vm825, %v848, %v850
    %v855 = vadd.f32 %v781, %v851
    %v856 = vadd.f32 %v782, %v852
    %s857 = scalar_lea.vmem %s7, 10
    %v858 = vld [vmem:[%s857] sm:$0x3]
    %v860 = vlaneseq
    %v861 = vshrl.u32 %v860, 7
    %v862 = vsub.s32 0, %v861
    %v863 = vrot.slane %v858, %v862
    %v864 = vlaneseq
    %v865 = vshrl.u32 %v864, 7
    %v866 = vsub.s32 1, %v865
    %v867 = vrot.slane %v858, %v866
    %868 = vrot.lane.b32.xlu0 %v863, 5
    %v869 = vpop.permute.xlu0 %868
    %870 = vrot.lane.b32.xlu0 %v867, 5
    %v871 = vpop.permute.xlu0 %870
    %vm872 = vcmask 39936
    %v873 = vsel %vm872, %v869, %v871
    %v877 = vmul.f32 %v525, %v869
    %v878 = vmul.f32 %v521, %v873
    %v879 = vmul.f32 %v526, %v871
    %s880 = scalar_lea.vmem %s3, 40
    %v881 = vld [vmem:[%s880] sm:$0xff]
    %883 = vset.pattern.permute.xlu0 0
    %884 = vperm.xlu0 %883, %v881
    %v885 = vpop.permute.xlu0 %884
    %v887 = vmul.f32 %v877, %v885
    %v888 = vmul.f32 %v878, %v885
    %v889 = vmul.f32 %v879, %v885
    %893 = vrot.lane.b32.xlu0 %v887, 123
    %v894 = vpop.permute.xlu0 %893
    %895 = vrot.lane.b32.xlu0 %v888, 123
    %v896 = vpop.permute.xlu0 %895
    %897 = vrot.lane.b32.xlu0 %v889, 123
    %v898 = vpop.permute.xlu0 %897
    %vm899 = vcmask 1006592
    %v900 = vsel %vm899, %v894, %v896
    %v901 = vsel %vm899, %v896, %v898
    %v904 = vadd.f32 %v830, %v900
    %v905 = vadd.f32 %v831, %v901
    %s906 = scalar_lea.vmem %s5, 40
    %v907 = vld [vmem:[%s906] sm:$0xff]
    %909 = vset.pattern.permute.xlu0 0
    %910 = vperm.xlu0 %909, %v907
    %v911 = vpop.permute.xlu0 %910
    %v913 = vmul.f32 %v877, %v911
    %v914 = vmul.f32 %v878, %v911
    %v915 = vmul.f32 %v879, %v911
    %919 = vrot.lane.b32.xlu0 %v913, 123
    %v920 = vpop.permute.xlu0 %919
    %921 = vrot.lane.b32.xlu0 %v914, 123
    %v922 = vpop.permute.xlu0 %921
    %923 = vrot.lane.b32.xlu0 %v915, 123
    %v924 = vpop.permute.xlu0 %923
    %v925 = vsel %vm899, %v920, %v922
    %v926 = vsel %vm899, %v922, %v924
    %v929 = vadd.f32 %v855, %v925
    %v930 = vadd.f32 %v856, %v926
    %s931 = scalar_lea.vmem %s7, 12
    %v932 = vld [vmem:[%s931] sm:$0x3]
    %v934 = vlaneseq
    %v935 = vshrl.u32 %v934, 7
    %v936 = vsub.s32 0, %v935
    %v937 = vrot.slane %v932, %v936
    %v938 = vlaneseq
    %v939 = vshrl.u32 %v938, 7
    %v940 = vsub.s32 1, %v939
    %v941 = vrot.slane %v932, %v940
    %942 = vrot.lane.b32.xlu0 %v937, 6
    %v943 = vpop.permute.xlu0 %942
    %944 = vrot.lane.b32.xlu0 %v941, 6
    %v945 = vpop.permute.xlu0 %944
    %vm946 = vcmask 48128
    %v947 = vsel %vm946, %v943, %v945
    %v951 = vmul.f32 %v525, %v943
    %v952 = vmul.f32 %v521, %v947
    %v953 = vmul.f32 %v526, %v945
    %s954 = scalar_lea.vmem %s3, 48
    %v955 = vld [vmem:[%s954] sm:$0xff]
    %957 = vset.pattern.permute.xlu0 0
    %958 = vperm.xlu0 %957, %v955
    %v959 = vpop.permute.xlu0 %958
    %v961 = vmul.f32 %v951, %v959
    %v962 = vmul.f32 %v952, %v959
    %v963 = vmul.f32 %v953, %v959
    %967 = vrot.lane.b32.xlu0 %v961, 122
    %v968 = vpop.permute.xlu0 %967
    %969 = vrot.lane.b32.xlu0 %v962, 122
    %v970 = vpop.permute.xlu0 %969
    %971 = vrot.lane.b32.xlu0 %v963, 122
    %v972 = vpop.permute.xlu0 %971
    %vm973 = vcmask 998400
    %v974 = vsel %vm973, %v968, %v970
    %v975 = vsel %vm973, %v970, %v972
    %v978 = vadd.f32 %v904, %v974
    %v979 = vadd.f32 %v905, %v975
    %s980 = scalar_lea.vmem %s5, 48
    %v981 = vld [vmem:[%s980] sm:$0xff]
    %983 = vset.pattern.permute.xlu0 0
    %984 = vperm.xlu0 %983, %v981
    %v985 = vpop.permute.xlu0 %984
    %v987 = vmul.f32 %v951, %v985
    %v988 = vmul.f32 %v952, %v985
    %v989 = vmul.f32 %v953, %v985
    %993 = vrot.lane.b32.xlu0 %v987, 122
    %v994 = vpop.permute.xlu0 %993
    %995 = vrot.lane.b32.xlu0 %v988, 122
    %v996 = vpop.permute.xlu0 %995
    %997 = vrot.lane.b32.xlu0 %v989, 122
    %v998 = vpop.permute.xlu0 %997
    %v999 = vsel %vm973, %v994, %v996
    %v1000 = vsel %vm973, %v996, %v998
    %v1003 = vadd.f32 %v929, %v999
    %v1004 = vadd.f32 %v930, %v1000
    %s1005 = scalar_lea.vmem %s7, 14
    %v1006 = vld [vmem:[%s1005] sm:$0x3]
    %v1008 = vlaneseq
    %v1009 = vshrl.u32 %v1008, 7
    %v1010 = vsub.s32 0, %v1009
    %v1011 = vrot.slane %v1006, %v1010
    %v1012 = vlaneseq
    %v1013 = vshrl.u32 %v1012, 7
    %v1014 = vsub.s32 1, %v1013
    %v1015 = vrot.slane %v1006, %v1014
    %1016 = vrot.lane.b32.xlu0 %v1011, 16
    %v1017 = vpop.permute.xlu0 %1016
    %1018 = vrot.lane.b32.xlu0 %v1015, 16
    %v1019 = vpop.permute.xlu0 %1018
    %vm1020 = vcmask 130048
    %v1021 = vsel %vm1020, %v1017, %v1019
    %v1025 = vmul.f32 %v525, %v1017
    %v1026 = vmul.f32 %v521, %v1021
    %v1027 = vmul.f32 %v526, %v1019
    %s1028 = scalar_lea.vmem %s3, 56
    %v1029 = vld [vmem:[%s1028] sm:$0xff]
    %1031 = vset.pattern.permute.xlu0 0
    %1032 = vperm.xlu0 %1031, %v1029
    %v1033 = vpop.permute.xlu0 %1032
    %v1035 = vmul.f32 %v1025, %v1033
    %v1036 = vmul.f32 %v1026, %v1033
    %v1037 = vmul.f32 %v1027, %v1033
    %1041 = vrot.lane.b32.xlu0 %v1035, 112
    %v1042 = vpop.permute.xlu0 %1041
    %1043 = vrot.lane.b32.xlu0 %v1036, 112
    %v1044 = vpop.permute.xlu0 %1043
    %1045 = vrot.lane.b32.xlu0 %v1037, 112
    %v1046 = vpop.permute.xlu0 %1045
    %vm1047 = vcmask 916480
    %v1048 = vsel %vm1047, %v1042, %v1044
    %v1049 = vsel %vm1047, %v1044, %v1046
    %v1052 = vadd.f32 %v978, %v1048
    %v1053 = vadd.f32 %v979, %v1049
    %s1054 = scalar_lea.vmem %s5, 56
    %v1055 = vld [vmem:[%s1054] sm:$0xff]
    %1057 = vset.pattern.permute.xlu0 0
    %1058 = vperm.xlu0 %1057, %v1055
    %v1059 = vpop.permute.xlu0 %1058
    %v1061 = vmul.f32 %v1025, %v1059
    %v1062 = vmul.f32 %v1026, %v1059
    %v1063 = vmul.f32 %v1027, %v1059
    %1067 = vrot.lane.b32.xlu0 %v1061, 112
    %v1068 = vpop.permute.xlu0 %1067
    %1069 = vrot.lane.b32.xlu0 %v1062, 112
    %v1070 = vpop.permute.xlu0 %1069
    %1071 = vrot.lane.b32.xlu0 %v1063, 112
    %v1072 = vpop.permute.xlu0 %1071
    %v1073 = vsel %vm1047, %v1068, %v1070
    %v1074 = vsel %vm1047, %v1070, %v1072
    %v1077 = vadd.f32 %v1003, %v1073
    %v1078 = vadd.f32 %v1004, %v1074
    %s1079 = scalar_lea.vmem %s7, 16
    %v1080 = vld [vmem:[%s1079] sm:$0x3]
    %v1082 = vlaneseq
    %v1083 = vshrl.u32 %v1082, 7
    %v1084 = vsub.s32 0, %v1083
    %v1085 = vrot.slane %v1080, %v1084
    %v1086 = vlaneseq
    %v1087 = vshrl.u32 %v1086, 7
    %v1088 = vsub.s32 1, %v1087
    %v1089 = vrot.slane %v1080, %v1088
    %1090 = vrot.lane.b32.xlu0 %v1085, 17
    %v1091 = vpop.permute.xlu0 %1090
    %1092 = vrot.lane.b32.xlu0 %v1089, 17
    %v1093 = vpop.permute.xlu0 %1092
    %vm1094 = vcmask 138240
    %v1095 = vsel %vm1094, %v1091, %v1093
    %v1099 = vmul.f32 %v525, %v1091
    %v1100 = vmul.f32 %v521, %v1095
    %v1101 = vmul.f32 %v526, %v1093
    %s1102 = scalar_lea.vmem %s3, 64
    %v1103 = vld [vmem:[%s1102] sm:$0xff]
    %1105 = vset.pattern.permute.xlu0 0
    %1106 = vperm.xlu0 %1105, %v1103
    %v1107 = vpop.permute.xlu0 %1106
    %v1109 = vmul.f32 %v1099, %v1107
    %v1110 = vmul.f32 %v1100, %v1107
    %v1111 = vmul.f32 %v1101, %v1107
    %1115 = vrot.lane.b32.xlu0 %v1109, 111
    %v1116 = vpop.permute.xlu0 %1115
    %1117 = vrot.lane.b32.xlu0 %v1110, 111
    %v1118 = vpop.permute.xlu0 %1117
    %1119 = vrot.lane.b32.xlu0 %v1111, 111
    %v1120 = vpop.permute.xlu0 %1119
    %vm1121 = vcmask 908288
    %v1122 = vsel %vm1121, %v1116, %v1118
    %v1123 = vsel %vm1121, %v1118, %v1120
    %v1126 = vadd.f32 %v1052, %v1122
    %v1127 = vadd.f32 %v1053, %v1123
    %s1128 = scalar_lea.vmem %s5, 64
    %v1129 = vld [vmem:[%s1128] sm:$0xff]
    %1131 = vset.pattern.permute.xlu0 0
    %1132 = vperm.xlu0 %1131, %v1129
    %v1133 = vpop.permute.xlu0 %1132
    %v1135 = vmul.f32 %v1099, %v1133
    %v1136 = vmul.f32 %v1100, %v1133
    %v1137 = vmul.f32 %v1101, %v1133
    %1141 = vrot.lane.b32.xlu0 %v1135, 111
    %v1142 = vpop.permute.xlu0 %1141
    %1143 = vrot.lane.b32.xlu0 %v1136, 111
    %v1144 = vpop.permute.xlu0 %1143
    %1145 = vrot.lane.b32.xlu0 %v1137, 111
    %v1146 = vpop.permute.xlu0 %1145
    %v1147 = vsel %vm1121, %v1142, %v1144
    %v1148 = vsel %vm1121, %v1144, %v1146
    %v1151 = vadd.f32 %v1077, %v1147
    %v1152 = vadd.f32 %v1078, %v1148
    %s1153 = scalar_lea.vmem %s7, 18
    %v1154 = vld [vmem:[%s1153] sm:$0x3]
    %v1156 = vlaneseq
    %v1157 = vshrl.u32 %v1156, 7
    %v1158 = vsub.s32 0, %v1157
    %v1159 = vrot.slane %v1154, %v1158
    %v1160 = vlaneseq
    %v1161 = vshrl.u32 %v1160, 7
    %v1162 = vsub.s32 1, %v1161
    %v1163 = vrot.slane %v1154, %v1162
    %1164 = vrot.lane.b32.xlu0 %v1159, 18
    %v1165 = vpop.permute.xlu0 %1164
    %1166 = vrot.lane.b32.xlu0 %v1163, 18
    %v1167 = vpop.permute.xlu0 %1166
    %vm1168 = vcmask 146432
    %v1169 = vsel %vm1168, %v1165, %v1167
    %v1173 = vmul.f32 %v525, %v1165
    %v1174 = vmul.f32 %v521, %v1169
    %v1175 = vmul.f32 %v526, %v1167
    %s1176 = scalar_lea.vmem %s3, 72
    %v1177 = vld [vmem:[%s1176] sm:$0xff]
    %1179 = vset.pattern.permute.xlu0 0
    %1180 = vperm.xlu0 %1179, %v1177
    %v1181 = vpop.permute.xlu0 %1180
    %v1183 = vmul.f32 %v1173, %v1181
    %v1184 = vmul.f32 %v1174, %v1181
    %v1185 = vmul.f32 %v1175, %v1181
    %1189 = vrot.lane.b32.xlu0 %v1183, 110
    %v1190 = vpop.permute.xlu0 %1189
    %1191 = vrot.lane.b32.xlu0 %v1184, 110
    %v1192 = vpop.permute.xlu0 %1191
    %1193 = vrot.lane.b32.xlu0 %v1185, 110
    %v1194 = vpop.permute.xlu0 %1193
    %vm1195 = vcmask 900096
    %v1196 = vsel %vm1195, %v1190, %v1192
    %v1197 = vsel %vm1195, %v1192, %v1194
    %v1200 = vadd.f32 %v1126, %v1196
    %v1201 = vadd.f32 %v1127, %v1197
    %s1202 = scalar_lea.vmem %s5, 72
    %v1203 = vld [vmem:[%s1202] sm:$0xff]
    %1205 = vset.pattern.permute.xlu0 0
    %1206 = vperm.xlu0 %1205, %v1203
    %v1207 = vpop.permute.xlu0 %1206
    %v1209 = vmul.f32 %v1173, %v1207
    %v1210 = vmul.f32 %v1174, %v1207
    %v1211 = vmul.f32 %v1175, %v1207
    %1215 = vrot.lane.b32.xlu0 %v1209, 110
    %v1216 = vpop.permute.xlu0 %1215
    %1217 = vrot.lane.b32.xlu0 %v1210, 110
    %v1218 = vpop.permute.xlu0 %1217
    %1219 = vrot.lane.b32.xlu0 %v1211, 110
    %v1220 = vpop.permute.xlu0 %1219
    %v1221 = vsel %vm1195, %v1216, %v1218
    %v1222 = vsel %vm1195, %v1218, %v1220
    %v1225 = vadd.f32 %v1151, %v1221
    %v1226 = vadd.f32 %v1152, %v1222
    %s1227 = scalar_lea.vmem %s7, 20
    %v1228 = vld [vmem:[%s1227] sm:$0x3]
    %v1230 = vlaneseq
    %v1231 = vshrl.u32 %v1230, 7
    %v1232 = vsub.s32 0, %v1231
    %v1233 = vrot.slane %v1228, %v1232
    %v1234 = vlaneseq
    %v1235 = vshrl.u32 %v1234, 7
    %v1236 = vsub.s32 1, %v1235
    %v1237 = vrot.slane %v1228, %v1236
    %1238 = vrot.lane.b32.xlu0 %v1233, 19
    %v1239 = vpop.permute.xlu0 %1238
    %1240 = vrot.lane.b32.xlu0 %v1237, 19
    %v1241 = vpop.permute.xlu0 %1240
    %vm1242 = vcmask 154624
    %v1243 = vsel %vm1242, %v1239, %v1241
    %v1247 = vmul.f32 %v525, %v1239
    %v1248 = vmul.f32 %v521, %v1243
    %v1249 = vmul.f32 %v526, %v1241
    %s1250 = scalar_lea.vmem %s3, 80
    %v1251 = vld [vmem:[%s1250] sm:$0xff]
    %1253 = vset.pattern.permute.xlu0 0
    %1254 = vperm.xlu0 %1253, %v1251
    %v1255 = vpop.permute.xlu0 %1254
    %v1257 = vmul.f32 %v1247, %v1255
    %v1258 = vmul.f32 %v1248, %v1255
    %v1259 = vmul.f32 %v1249, %v1255
    %1263 = vrot.lane.b32.xlu0 %v1257, 109
    %v1264 = vpop.permute.xlu0 %1263
    %1265 = vrot.lane.b32.xlu0 %v1258, 109
    %v1266 = vpop.permute.xlu0 %1265
    %1267 = vrot.lane.b32.xlu0 %v1259, 109
    %v1268 = vpop.permute.xlu0 %1267
    %vm1269 = vcmask 891904
    %v1270 = vsel %vm1269, %v1264, %v1266
    %v1271 = vsel %vm1269, %v1266, %v1268
    %v1274 = vadd.f32 %v1200, %v1270
    %v1275 = vadd.f32 %v1201, %v1271
    %s1276 = scalar_lea.vmem %s5, 80
    %v1277 = vld [vmem:[%s1276] sm:$0xff]
    %1279 = vset.pattern.permute.xlu0 0
    %1280 = vperm.xlu0 %1279, %v1277
    %v1281 = vpop.permute.xlu0 %1280
    %v1283 = vmul.f32 %v1247, %v1281
    %v1284 = vmul.f32 %v1248, %v1281
    %v1285 = vmul.f32 %v1249, %v1281
    %1289 = vrot.lane.b32.xlu0 %v1283, 109
    %v1290 = vpop.permute.xlu0 %1289
    %1291 = vrot.lane.b32.xlu0 %v1284, 109
    %v1292 = vpop.permute.xlu0 %1291
    %1293 = vrot.lane.b32.xlu0 %v1285, 109
    %v1294 = vpop.permute.xlu0 %1293
    %v1295 = vsel %vm1269, %v1290, %v1292
    %v1296 = vsel %vm1269, %v1292, %v1294
    %v1299 = vadd.f32 %v1225, %v1295
    %v1300 = vadd.f32 %v1226, %v1296
    %s1301 = scalar_lea.vmem %s7, 22
    %v1302 = vld [vmem:[%s1301] sm:$0x3]
    %v1304 = vlaneseq
    %v1305 = vshrl.u32 %v1304, 7
    %v1306 = vsub.s32 0, %v1305
    %v1307 = vrot.slane %v1302, %v1306
    %v1308 = vlaneseq
    %v1309 = vshrl.u32 %v1308, 7
    %v1310 = vsub.s32 1, %v1309
    %v1311 = vrot.slane %v1302, %v1310
    %1312 = vrot.lane.b32.xlu0 %v1307, 20
    %v1313 = vpop.permute.xlu0 %1312
    %1314 = vrot.lane.b32.xlu0 %v1311, 20
    %v1315 = vpop.permute.xlu0 %1314
    %vm1316 = vcmask 162816
    %v1317 = vsel %vm1316, %v1313, %v1315
    %v1321 = vmul.f32 %v525, %v1313
    %v1322 = vmul.f32 %v521, %v1317
    %v1323 = vmul.f32 %v526, %v1315
    %s1324 = scalar_lea.vmem %s3, 88
    %v1325 = vld [vmem:[%s1324] sm:$0xff]
    %1327 = vset.pattern.permute.xlu0 0
    %1328 = vperm.xlu0 %1327, %v1325
    %v1329 = vpop.permute.xlu0 %1328
    %v1331 = vmul.f32 %v1321, %v1329
    %v1332 = vmul.f32 %v1322, %v1329
    %v1333 = vmul.f32 %v1323, %v1329
    %1337 = vrot.lane.b32.xlu0 %v1331, 108
    %v1338 = vpop.permute.xlu0 %1337
    %1339 = vrot.lane.b32.xlu0 %v1332, 108
    %v1340 = vpop.permute.xlu0 %1339
    %1341 = vrot.lane.b32.xlu0 %v1333, 108
    %v1342 = vpop.permute.xlu0 %1341
    %vm1343 = vcmask 883712
    %v1344 = vsel %vm1343, %v1338, %v1340
    %v1345 = vsel %vm1343, %v1340, %v1342
    %v1348 = vadd.f32 %v1274, %v1344
    %v1349 = vadd.f32 %v1275, %v1345
    %s1350 = scalar_lea.vmem %s5, 88
    %v1351 = vld [vmem:[%s1350] sm:$0xff]
    %1353 = vset.pattern.permute.xlu0 0
    %1354 = vperm.xlu0 %1353, %v1351
    %v1355 = vpop.permute.xlu0 %1354
    %v1357 = vmul.f32 %v1321, %v1355
    %v1358 = vmul.f32 %v1322, %v1355
    %v1359 = vmul.f32 %v1323, %v1355
    %1363 = vrot.lane.b32.xlu0 %v1357, 108
    %v1364 = vpop.permute.xlu0 %1363
    %1365 = vrot.lane.b32.xlu0 %v1358, 108
    %v1366 = vpop.permute.xlu0 %1365
    %1367 = vrot.lane.b32.xlu0 %v1359, 108
    %v1368 = vpop.permute.xlu0 %1367
    %v1369 = vsel %vm1343, %v1364, %v1366
    %v1370 = vsel %vm1343, %v1366, %v1368
    %v1373 = vadd.f32 %v1299, %v1369
    %v1374 = vadd.f32 %v1300, %v1370
    %s1375 = scalar_lea.vmem %s7, 24
    %v1376 = vld [vmem:[%s1375] sm:$0x3]
    %v1378 = vlaneseq
    %v1379 = vshrl.u32 %v1378, 7
    %v1380 = vsub.s32 0, %v1379
    %v1381 = vrot.slane %v1376, %v1380
    %v1382 = vlaneseq
    %v1383 = vshrl.u32 %v1382, 7
    %v1384 = vsub.s32 1, %v1383
    %v1385 = vrot.slane %v1376, %v1384
    %1386 = vrot.lane.b32.xlu0 %v1381, 21
    %v1387 = vpop.permute.xlu0 %1386
    %1388 = vrot.lane.b32.xlu0 %v1385, 21
    %v1389 = vpop.permute.xlu0 %1388
    %vm1390 = vcmask 171008
    %v1391 = vsel %vm1390, %v1387, %v1389
    %v1395 = vmul.f32 %v525, %v1387
    %v1396 = vmul.f32 %v521, %v1391
    %v1397 = vmul.f32 %v526, %v1389
    %s1398 = scalar_lea.vmem %s3, 96
    %v1399 = vld [vmem:[%s1398] sm:$0xff]
    %1401 = vset.pattern.permute.xlu0 0
    %1402 = vperm.xlu0 %1401, %v1399
    %v1403 = vpop.permute.xlu0 %1402
    %v1405 = vmul.f32 %v1395, %v1403
    %v1406 = vmul.f32 %v1396, %v1403
    %v1407 = vmul.f32 %v1397, %v1403
    %1411 = vrot.lane.b32.xlu0 %v1405, 107
    %v1412 = vpop.permute.xlu0 %1411
    %1413 = vrot.lane.b32.xlu0 %v1406, 107
    %v1414 = vpop.permute.xlu0 %1413
    %1415 = vrot.lane.b32.xlu0 %v1407, 107
    %v1416 = vpop.permute.xlu0 %1415
    %vm1417 = vcmask 875520
    %v1418 = vsel %vm1417, %v1412, %v1414
    %v1419 = vsel %vm1417, %v1414, %v1416
    %v1422 = vadd.f32 %v1348, %v1418
    %v1423 = vadd.f32 %v1349, %v1419
    %s1424 = scalar_lea.vmem %s5, 96
    %v1425 = vld [vmem:[%s1424] sm:$0xff]
    %1427 = vset.pattern.permute.xlu0 0
    %1428 = vperm.xlu0 %1427, %v1425
    %v1429 = vpop.permute.xlu0 %1428
    %v1431 = vmul.f32 %v1395, %v1429
    %v1432 = vmul.f32 %v1396, %v1429
    %v1433 = vmul.f32 %v1397, %v1429
    %1437 = vrot.lane.b32.xlu0 %v1431, 107
    %v1438 = vpop.permute.xlu0 %1437
    %1439 = vrot.lane.b32.xlu0 %v1432, 107
    %v1440 = vpop.permute.xlu0 %1439
    %1441 = vrot.lane.b32.xlu0 %v1433, 107
    %v1442 = vpop.permute.xlu0 %1441
    %v1443 = vsel %vm1417, %v1438, %v1440
    %v1444 = vsel %vm1417, %v1440, %v1442
    %v1447 = vadd.f32 %v1373, %v1443
    %v1448 = vadd.f32 %v1374, %v1444
    %s1449 = scalar_lea.vmem %s7, 26
    %v1450 = vld [vmem:[%s1449] sm:$0x3]
    %v1452 = vlaneseq
    %v1453 = vshrl.u32 %v1452, 7
    %v1454 = vsub.s32 0, %v1453
    %v1455 = vrot.slane %v1450, %v1454
    %v1456 = vlaneseq
    %v1457 = vshrl.u32 %v1456, 7
    %v1458 = vsub.s32 1, %v1457
    %v1459 = vrot.slane %v1450, %v1458
    %1460 = vrot.lane.b32.xlu0 %v1455, 22
    %v1461 = vpop.permute.xlu0 %1460
    %1462 = vrot.lane.b32.xlu0 %v1459, 22
    %v1463 = vpop.permute.xlu0 %1462
    %vm1464 = vcmask 179200
    %v1465 = vsel %vm1464, %v1461, %v1463
    %v1469 = vmul.f32 %v525, %v1461
    %v1470 = vmul.f32 %v521, %v1465
    %v1471 = vmul.f32 %v526, %v1463
    %s1472 = scalar_lea.vmem %s3, 104
    %v1473 = vld [vmem:[%s1472] sm:$0xff]
    %1475 = vset.pattern.permute.xlu0 0
    %1476 = vperm.xlu0 %1475, %v1473
    %v1477 = vpop.permute.xlu0 %1476
    %v1479 = vmul.f32 %v1469, %v1477
    %v1480 = vmul.f32 %v1470, %v1477
    %v1481 = vmul.f32 %v1471, %v1477
    %1485 = vrot.lane.b32.xlu0 %v1479, 106
    %v1486 = vpop.permute.xlu0 %1485
    %1487 = vrot.lane.b32.xlu0 %v1480, 106
    %v1488 = vpop.permute.xlu0 %1487
    %1489 = vrot.lane.b32.xlu0 %v1481, 106
    %v1490 = vpop.permute.xlu0 %1489
    %vm1491 = vcmask 867328
    %v1492 = vsel %vm1491, %v1486, %v1488
    %v1493 = vsel %vm1491, %v1488, %v1490
    %v1496 = vadd.f32 %v1422, %v1492
    %v1497 = vadd.f32 %v1423, %v1493
    %s1498 = scalar_lea.vmem %s5, 104
    %v1499 = vld [vmem:[%s1498] sm:$0xff]
    %1501 = vset.pattern.permute.xlu0 0
    %1502 = vperm.xlu0 %1501, %v1499
    %v1503 = vpop.permute.xlu0 %1502
    %v1505 = vmul.f32 %v1469, %v1503
    %v1506 = vmul.f32 %v1470, %v1503
    %v1507 = vmul.f32 %v1471, %v1503
    %1511 = vrot.lane.b32.xlu0 %v1505, 106
    %v1512 = vpop.permute.xlu0 %1511
    %1513 = vrot.lane.b32.xlu0 %v1506, 106
    %v1514 = vpop.permute.xlu0 %1513
    %1515 = vrot.lane.b32.xlu0 %v1507, 106
    %v1516 = vpop.permute.xlu0 %1515
    %v1517 = vsel %vm1491, %v1512, %v1514
    %v1518 = vsel %vm1491, %v1514, %v1516
    %v1521 = vadd.f32 %v1447, %v1517
    %v1522 = vadd.f32 %v1448, %v1518
    %s1523 = scalar_lea.vmem %s7, 28
    %v1524 = vld [vmem:[%s1523] sm:$0x3]
    %v1526 = vlaneseq
    %v1527 = vshrl.u32 %v1526, 7
    %v1528 = vsub.s32 0, %v1527
    %v1529 = vrot.slane %v1524, %v1528
    %v1530 = vlaneseq
    %v1531 = vshrl.u32 %v1530, 7
    %v1532 = vsub.s32 1, %v1531
    %v1533 = vrot.slane %v1524, %v1532
    %1534 = vrot.lane.b32.xlu0 %v1529, 32
    %v1535 = vpop.permute.xlu0 %1534
    %1536 = vrot.lane.b32.xlu0 %v1533, 32
    %v1537 = vpop.permute.xlu0 %1536
    %vm1538 = vcmask 261120
    %v1539 = vsel %vm1538, %v1535, %v1537
    %v1543 = vmul.f32 %v525, %v1535
    %v1544 = vmul.f32 %v521, %v1539
    %v1545 = vmul.f32 %v526, %v1537
    %s1546 = scalar_lea.vmem %s3, 112
    %v1547 = vld [vmem:[%s1546] sm:$0xff]
    %1549 = vset.pattern.permute.xlu0 0
    %1550 = vperm.xlu0 %1549, %v1547
    %v1551 = vpop.permute.xlu0 %1550
    %v1553 = vmul.f32 %v1543, %v1551
    %v1554 = vmul.f32 %v1544, %v1551
    %v1555 = vmul.f32 %v1545, %v1551
    %1559 = vrot.lane.b32.xlu0 %v1553, 96
    %v1560 = vpop.permute.xlu0 %1559
    %1561 = vrot.lane.b32.xlu0 %v1554, 96
    %v1562 = vpop.permute.xlu0 %1561
    %1563 = vrot.lane.b32.xlu0 %v1555, 96
    %v1564 = vpop.permute.xlu0 %1563
    %vm1565 = vcmask 785408
    %v1566 = vsel %vm1565, %v1560, %v1562
    %v1567 = vsel %vm1565, %v1562, %v1564
    %v1570 = vadd.f32 %v1496, %v1566
    %v1571 = vadd.f32 %v1497, %v1567
    %s1572 = scalar_lea.vmem %s5, 112
    %v1573 = vld [vmem:[%s1572] sm:$0xff]
    %1575 = vset.pattern.permute.xlu0 0
    %1576 = vperm.xlu0 %1575, %v1573
    %v1577 = vpop.permute.xlu0 %1576
    %v1579 = vmul.f32 %v1543, %v1577
    %v1580 = vmul.f32 %v1544, %v1577
    %v1581 = vmul.f32 %v1545, %v1577
    %1585 = vrot.lane.b32.xlu0 %v1579, 96
    %v1586 = vpop.permute.xlu0 %1585
    %1587 = vrot.lane.b32.xlu0 %v1580, 96
    %v1588 = vpop.permute.xlu0 %1587
    %1589 = vrot.lane.b32.xlu0 %v1581, 96
    %v1590 = vpop.permute.xlu0 %1589
    %v1591 = vsel %vm1565, %v1586, %v1588
    %v1592 = vsel %vm1565, %v1588, %v1590
    %v1595 = vadd.f32 %v1521, %v1591
    %v1596 = vadd.f32 %v1522, %v1592
    %s1597 = scalar_lea.vmem %s7, 30
    %v1598 = vld [vmem:[%s1597] sm:$0x3]
    %v1600 = vlaneseq
    %v1601 = vshrl.u32 %v1600, 7
    %v1602 = vsub.s32 0, %v1601
    %v1603 = vrot.slane %v1598, %v1602
    %v1604 = vlaneseq
    %v1605 = vshrl.u32 %v1604, 7
    %v1606 = vsub.s32 1, %v1605
    %v1607 = vrot.slane %v1598, %v1606
    %1608 = vrot.lane.b32.xlu0 %v1603, 33
    %v1609 = vpop.permute.xlu0 %1608
    %1610 = vrot.lane.b32.xlu0 %v1607, 33
    %v1611 = vpop.permute.xlu0 %1610
    %vm1612 = vcmask 269312
    %v1613 = vsel %vm1612, %v1609, %v1611
    %v1617 = vmul.f32 %v525, %v1609
    %v1618 = vmul.f32 %v521, %v1613
    %v1619 = vmul.f32 %v526, %v1611
    %s1620 = scalar_lea.vmem %s3, 120
    %v1621 = vld [vmem:[%s1620] sm:$0xff]
    %1623 = vset.pattern.permute.xlu0 0
    %1624 = vperm.xlu0 %1623, %v1621
    %v1625 = vpop.permute.xlu0 %1624
    %v1627 = vmul.f32 %v1617, %v1625
    %v1628 = vmul.f32 %v1618, %v1625
    %v1629 = vmul.f32 %v1619, %v1625
    %1633 = vrot.lane.b32.xlu0 %v1627, 95
    %v1634 = vpop.permute.xlu0 %1633
    %1635 = vrot.lane.b32.xlu0 %v1628, 95
    %v1636 = vpop.permute.xlu0 %1635
    %1637 = vrot.lane.b32.xlu0 %v1629, 95
    %v1638 = vpop.permute.xlu0 %1637
    %vm1639 = vcmask 777216
    %v1640 = vsel %vm1639, %v1634, %v1636
    %v1641 = vsel %vm1639, %v1636, %v1638
    %v1644 = vadd.f32 %v1570, %v1640
    %v1645 = vadd.f32 %v1571, %v1641
    %s1646 = scalar_lea.vmem %s5, 120
    %v1647 = vld [vmem:[%s1646] sm:$0xff]
    %1649 = vset.pattern.permute.xlu0 0
    %1650 = vperm.xlu0 %1649, %v1647
    %v1651 = vpop.permute.xlu0 %1650
    %v1653 = vmul.f32 %v1617, %v1651
    %v1654 = vmul.f32 %v1618, %v1651
    %v1655 = vmul.f32 %v1619, %v1651
    %1659 = vrot.lane.b32.xlu0 %v1653, 95
    %v1660 = vpop.permute.xlu0 %1659
    %1661 = vrot.lane.b32.xlu0 %v1654, 95
    %v1662 = vpop.permute.xlu0 %1661
    %1663 = vrot.lane.b32.xlu0 %v1655, 95
    %v1664 = vpop.permute.xlu0 %1663
    %v1665 = vsel %vm1639, %v1660, %v1662
    %v1666 = vsel %vm1639, %v1662, %v1664
    %v1669 = vadd.f32 %v1595, %v1665
    %v1670 = vadd.f32 %v1596, %v1666
    %s1671 = scalar_lea.vmem %s7, 32
    %v1672 = vld [vmem:[%s1671] sm:$0x3]
    %v1674 = vlaneseq
    %v1675 = vshrl.u32 %v1674, 7
    %v1676 = vsub.s32 0, %v1675
    %v1677 = vrot.slane %v1672, %v1676
    %v1678 = vlaneseq
    %v1679 = vshrl.u32 %v1678, 7
    %v1680 = vsub.s32 1, %v1679
    %v1681 = vrot.slane %v1672, %v1680
    %1682 = vrot.lane.b32.xlu0 %v1677, 34
    %v1683 = vpop.permute.xlu0 %1682
    %1684 = vrot.lane.b32.xlu0 %v1681, 34
    %v1685 = vpop.permute.xlu0 %1684
    %vm1686 = vcmask 277504
    %v1687 = vsel %vm1686, %v1683, %v1685
    %v1691 = vmul.f32 %v525, %v1683
    %v1692 = vmul.f32 %v521, %v1687
    %v1693 = vmul.f32 %v526, %v1685
    %s1694 = scalar_lea.vmem %s3, 128
    %v1695 = vld [vmem:[%s1694] sm:$0xff]
    %1697 = vset.pattern.permute.xlu0 0
    %1698 = vperm.xlu0 %1697, %v1695
    %v1699 = vpop.permute.xlu0 %1698
    %v1701 = vmul.f32 %v1691, %v1699
    %v1702 = vmul.f32 %v1692, %v1699
    %v1703 = vmul.f32 %v1693, %v1699
    %1707 = vrot.lane.b32.xlu0 %v1701, 94
    %v1708 = vpop.permute.xlu0 %1707
    %1709 = vrot.lane.b32.xlu0 %v1702, 94
    %v1710 = vpop.permute.xlu0 %1709
    %1711 = vrot.lane.b32.xlu0 %v1703, 94
    %v1712 = vpop.permute.xlu0 %1711
    %vm1713 = vcmask 769024
    %v1714 = vsel %vm1713, %v1708, %v1710
    %v1715 = vsel %vm1713, %v1710, %v1712
    %v1718 = vadd.f32 %v1644, %v1714
    %v1719 = vadd.f32 %v1645, %v1715
    %s1720 = scalar_lea.vmem %s5, 128
    %v1721 = vld [vmem:[%s1720] sm:$0xff]
    %1723 = vset.pattern.permute.xlu0 0
    %1724 = vperm.xlu0 %1723, %v1721
    %v1725 = vpop.permute.xlu0 %1724
    %v1727 = vmul.f32 %v1691, %v1725
    %v1728 = vmul.f32 %v1692, %v1725
    %v1729 = vmul.f32 %v1693, %v1725
    %1733 = vrot.lane.b32.xlu0 %v1727, 94
    %v1734 = vpop.permute.xlu0 %1733
    %1735 = vrot.lane.b32.xlu0 %v1728, 94
    %v1736 = vpop.permute.xlu0 %1735
    %1737 = vrot.lane.b32.xlu0 %v1729, 94
    %v1738 = vpop.permute.xlu0 %1737
    %v1739 = vsel %vm1713, %v1734, %v1736
    %v1740 = vsel %vm1713, %v1736, %v1738
    %v1743 = vadd.f32 %v1669, %v1739
    %v1744 = vadd.f32 %v1670, %v1740
    %s1745 = scalar_lea.vmem %s7, 34
    %v1746 = vld [vmem:[%s1745] sm:$0x3]
    %v1748 = vlaneseq
    %v1749 = vshrl.u32 %v1748, 7
    %v1750 = vsub.s32 0, %v1749
    %v1751 = vrot.slane %v1746, %v1750
    %v1752 = vlaneseq
    %v1753 = vshrl.u32 %v1752, 7
    %v1754 = vsub.s32 1, %v1753
    %v1755 = vrot.slane %v1746, %v1754
    %1756 = vrot.lane.b32.xlu0 %v1751, 35
    %v1757 = vpop.permute.xlu0 %1756
    %1758 = vrot.lane.b32.xlu0 %v1755, 35
    %v1759 = vpop.permute.xlu0 %1758
    %vm1760 = vcmask 285696
    %v1761 = vsel %vm1760, %v1757, %v1759
    %v1765 = vmul.f32 %v525, %v1757
    %v1766 = vmul.f32 %v521, %v1761
    %v1767 = vmul.f32 %v526, %v1759
    %s1768 = scalar_lea.vmem %s3, 136
    %v1769 = vld [vmem:[%s1768] sm:$0xff]
    %1771 = vset.pattern.permute.xlu0 0
    %1772 = vperm.xlu0 %1771, %v1769
    %v1773 = vpop.permute.xlu0 %1772
    %v1775 = vmul.f32 %v1765, %v1773
    %v1776 = vmul.f32 %v1766, %v1773
    %v1777 = vmul.f32 %v1767, %v1773
    %1781 = vrot.lane.b32.xlu0 %v1775, 93
    %v1782 = vpop.permute.xlu0 %1781
    %1783 = vrot.lane.b32.xlu0 %v1776, 93
    %v1784 = vpop.permute.xlu0 %1783
    %1785 = vrot.lane.b32.xlu0 %v1777, 93
    %v1786 = vpop.permute.xlu0 %1785
    %vm1787 = vcmask 760832
    %v1788 = vsel %vm1787, %v1782, %v1784
    %v1789 = vsel %vm1787, %v1784, %v1786
    %v1792 = vadd.f32 %v1718, %v1788
    %v1793 = vadd.f32 %v1719, %v1789
    %s1794 = scalar_lea.vmem %s5, 136
    %v1795 = vld [vmem:[%s1794] sm:$0xff]
    %1797 = vset.pattern.permute.xlu0 0
    %1798 = vperm.xlu0 %1797, %v1795
    %v1799 = vpop.permute.xlu0 %1798
    %v1801 = vmul.f32 %v1765, %v1799
    %v1802 = vmul.f32 %v1766, %v1799
    %v1803 = vmul.f32 %v1767, %v1799
    %1807 = vrot.lane.b32.xlu0 %v1801, 93
    %v1808 = vpop.permute.xlu0 %1807
    %1809 = vrot.lane.b32.xlu0 %v1802, 93
    %v1810 = vpop.permute.xlu0 %1809
    %1811 = vrot.lane.b32.xlu0 %v1803, 93
    %v1812 = vpop.permute.xlu0 %1811
    %v1813 = vsel %vm1787, %v1808, %v1810
    %v1814 = vsel %vm1787, %v1810, %v1812
    %v1817 = vadd.f32 %v1743, %v1813
    %v1818 = vadd.f32 %v1744, %v1814
    %s1819 = scalar_lea.vmem %s7, 36
    %v1820 = vld [vmem:[%s1819] sm:$0x3]
    %v1822 = vlaneseq
    %v1823 = vshrl.u32 %v1822, 7
    %v1824 = vsub.s32 0, %v1823
    %v1825 = vrot.slane %v1820, %v1824
    %v1826 = vlaneseq
    %v1827 = vshrl.u32 %v1826, 7
    %v1828 = vsub.s32 1, %v1827
    %v1829 = vrot.slane %v1820, %v1828
    %1830 = vrot.lane.b32.xlu0 %v1825, 36
    %v1831 = vpop.permute.xlu0 %1830
    %1832 = vrot.lane.b32.xlu0 %v1829, 36
    %v1833 = vpop.permute.xlu0 %1832
    %vm1834 = vcmask 293888
    %v1835 = vsel %vm1834, %v1831, %v1833
    %v1839 = vmul.f32 %v525, %v1831
    %v1840 = vmul.f32 %v521, %v1835
    %v1841 = vmul.f32 %v526, %v1833
    %s1842 = scalar_lea.vmem %s3, 144
    %v1843 = vld [vmem:[%s1842] sm:$0xff]
    %1845 = vset.pattern.permute.xlu0 0
    %1846 = vperm.xlu0 %1845, %v1843
    %v1847 = vpop.permute.xlu0 %1846
    %v1849 = vmul.f32 %v1839, %v1847
    %v1850 = vmul.f32 %v1840, %v1847
    %v1851 = vmul.f32 %v1841, %v1847
    %1855 = vrot.lane.b32.xlu0 %v1849, 92
    %v1856 = vpop.permute.xlu0 %1855
    %1857 = vrot.lane.b32.xlu0 %v1850, 92
    %v1858 = vpop.permute.xlu0 %1857
    %1859 = vrot.lane.b32.xlu0 %v1851, 92
    %v1860 = vpop.permute.xlu0 %1859
    %vm1861 = vcmask 752640
    %v1862 = vsel %vm1861, %v1856, %v1858
    %v1863 = vsel %vm1861, %v1858, %v1860
    %v1866 = vadd.f32 %v1792, %v1862
    %v1867 = vadd.f32 %v1793, %v1863
    %s1868 = scalar_lea.vmem %s5, 144
    %v1869 = vld [vmem:[%s1868] sm:$0xff]
    %1871 = vset.pattern.permute.xlu0 0
    %1872 = vperm.xlu0 %1871, %v1869
    %v1873 = vpop.permute.xlu0 %1872
    %v1875 = vmul.f32 %v1839, %v1873
    %v1876 = vmul.f32 %v1840, %v1873
    %v1877 = vmul.f32 %v1841, %v1873
    %1881 = vrot.lane.b32.xlu0 %v1875, 92
    %v1882 = vpop.permute.xlu0 %1881
    %1883 = vrot.lane.b32.xlu0 %v1876, 92
    %v1884 = vpop.permute.xlu0 %1883
    %1885 = vrot.lane.b32.xlu0 %v1877, 92
    %v1886 = vpop.permute.xlu0 %1885
    %v1887 = vsel %vm1861, %v1882, %v1884
    %v1888 = vsel %vm1861, %v1884, %v1886
    %v1891 = vadd.f32 %v1817, %v1887
    %v1892 = vadd.f32 %v1818, %v1888
    %s1893 = scalar_lea.vmem %s7, 38
    %v1894 = vld [vmem:[%s1893] sm:$0x3]
    %v1896 = vlaneseq
    %v1897 = vshrl.u32 %v1896, 7
    %v1898 = vsub.s32 0, %v1897
    %v1899 = vrot.slane %v1894, %v1898
    %v1900 = vlaneseq
    %v1901 = vshrl.u32 %v1900, 7
    %v1902 = vsub.s32 1, %v1901
    %v1903 = vrot.slane %v1894, %v1902
    %1904 = vrot.lane.b32.xlu0 %v1899, 37
    %v1905 = vpop.permute.xlu0 %1904
    %1906 = vrot.lane.b32.xlu0 %v1903, 37
    %v1907 = vpop.permute.xlu0 %1906
    %vm1908 = vcmask 302080
    %v1909 = vsel %vm1908, %v1905, %v1907
    %v1913 = vmul.f32 %v525, %v1905
    %v1914 = vmul.f32 %v521, %v1909
    %v1915 = vmul.f32 %v526, %v1907
    %s1916 = scalar_lea.vmem %s3, 152
    %v1917 = vld [vmem:[%s1916] sm:$0xff]
    %1919 = vset.pattern.permute.xlu0 0
    %1920 = vperm.xlu0 %1919, %v1917
    %v1921 = vpop.permute.xlu0 %1920
    %v1923 = vmul.f32 %v1913, %v1921
    %v1924 = vmul.f32 %v1914, %v1921
    %v1925 = vmul.f32 %v1915, %v1921
    %1929 = vrot.lane.b32.xlu0 %v1923, 91
    %v1930 = vpop.permute.xlu0 %1929
    %1931 = vrot.lane.b32.xlu0 %v1924, 91
    %v1932 = vpop.permute.xlu0 %1931
    %1933 = vrot.lane.b32.xlu0 %v1925, 91
    %v1934 = vpop.permute.xlu0 %1933
    %vm1935 = vcmask 744448
    %v1936 = vsel %vm1935, %v1930, %v1932
    %v1937 = vsel %vm1935, %v1932, %v1934
    %v1940 = vadd.f32 %v1866, %v1936
    %v1941 = vadd.f32 %v1867, %v1937
    %s1942 = scalar_lea.vmem %s5, 152
    %v1943 = vld [vmem:[%s1942] sm:$0xff]
    %1945 = vset.pattern.permute.xlu0 0
    %1946 = vperm.xlu0 %1945, %v1943
    %v1947 = vpop.permute.xlu0 %1946
    %v1949 = vmul.f32 %v1913, %v1947
    %v1950 = vmul.f32 %v1914, %v1947
    %v1951 = vmul.f32 %v1915, %v1947
    %1955 = vrot.lane.b32.xlu0 %v1949, 91
    %v1956 = vpop.permute.xlu0 %1955
    %1957 = vrot.lane.b32.xlu0 %v1950, 91
    %v1958 = vpop.permute.xlu0 %1957
    %1959 = vrot.lane.b32.xlu0 %v1951, 91
    %v1960 = vpop.permute.xlu0 %1959
    %v1961 = vsel %vm1935, %v1956, %v1958
    %v1962 = vsel %vm1935, %v1958, %v1960
    %v1965 = vadd.f32 %v1891, %v1961
    %v1966 = vadd.f32 %v1892, %v1962
    %s1967 = scalar_lea.vmem %s7, 40
    %v1968 = vld [vmem:[%s1967] sm:$0x3]
    %v1970 = vlaneseq
    %v1971 = vshrl.u32 %v1970, 7
    %v1972 = vsub.s32 0, %v1971
    %v1973 = vrot.slane %v1968, %v1972
    %v1974 = vlaneseq
    %v1975 = vshrl.u32 %v1974, 7
    %v1976 = vsub.s32 1, %v1975
    %v1977 = vrot.slane %v1968, %v1976
    %1978 = vrot.lane.b32.xlu0 %v1973, 38
    %v1979 = vpop.permute.xlu0 %1978
    %1980 = vrot.lane.b32.xlu0 %v1977, 38
    %v1981 = vpop.permute.xlu0 %1980
    %vm1982 = vcmask 310272
    %v1983 = vsel %vm1982, %v1979, %v1981
    %v1987 = vmul.f32 %v525, %v1979
    %v1988 = vmul.f32 %v521, %v1983
    %v1989 = vmul.f32 %v526, %v1981
    %s1990 = scalar_lea.vmem %s3, 160
    %v1991 = vld [vmem:[%s1990] sm:$0xff]
    %1993 = vset.pattern.permute.xlu0 0
    %1994 = vperm.xlu0 %1993, %v1991
    %v1995 = vpop.permute.xlu0 %1994
    %v1997 = vmul.f32 %v1987, %v1995
    %v1998 = vmul.f32 %v1988, %v1995
    %v1999 = vmul.f32 %v1989, %v1995
    %2003 = vrot.lane.b32.xlu0 %v1997, 90
    %v2004 = vpop.permute.xlu0 %2003
    %2005 = vrot.lane.b32.xlu0 %v1998, 90
    %v2006 = vpop.permute.xlu0 %2005
    %2007 = vrot.lane.b32.xlu0 %v1999, 90
    %v2008 = vpop.permute.xlu0 %2007
    %vm2009 = vcmask 736256
    %v2010 = vsel %vm2009, %v2004, %v2006
    %v2011 = vsel %vm2009, %v2006, %v2008
    %v2014 = vadd.f32 %v1940, %v2010
    %v2015 = vadd.f32 %v1941, %v2011
    %s2016 = scalar_lea.vmem %s5, 160
    %v2017 = vld [vmem:[%s2016] sm:$0xff]
    %2019 = vset.pattern.permute.xlu0 0
    %2020 = vperm.xlu0 %2019, %v2017
    %v2021 = vpop.permute.xlu0 %2020
    %v2023 = vmul.f32 %v1987, %v2021
    %v2024 = vmul.f32 %v1988, %v2021
    %v2025 = vmul.f32 %v1989, %v2021
    %2029 = vrot.lane.b32.xlu0 %v2023, 90
    %v2030 = vpop.permute.xlu0 %2029
    %2031 = vrot.lane.b32.xlu0 %v2024, 90
    %v2032 = vpop.permute.xlu0 %2031
    %2033 = vrot.lane.b32.xlu0 %v2025, 90
    %v2034 = vpop.permute.xlu0 %2033
    %v2035 = vsel %vm2009, %v2030, %v2032
    %v2036 = vsel %vm2009, %v2032, %v2034
    %v2039 = vadd.f32 %v1965, %v2035
    %v2040 = vadd.f32 %v1966, %v2036
    %s2041 = scalar_lea.vmem %s7, 42
    %v2042 = vld [vmem:[%s2041] sm:$0x3]
    %v2044 = vlaneseq
    %v2045 = vshrl.u32 %v2044, 7
    %v2046 = vsub.s32 0, %v2045
    %v2047 = vrot.slane %v2042, %v2046
    %v2048 = vlaneseq
    %v2049 = vshrl.u32 %v2048, 7
    %v2050 = vsub.s32 1, %v2049
    %v2051 = vrot.slane %v2042, %v2050
    %2052 = vrot.lane.b32.xlu0 %v2047, 48
    %v2053 = vpop.permute.xlu0 %2052
    %2054 = vrot.lane.b32.xlu0 %v2051, 48
    %v2055 = vpop.permute.xlu0 %2054
    %vm2056 = vcmask 392192
    %v2057 = vsel %vm2056, %v2053, %v2055
    %v2061 = vmul.f32 %v525, %v2053
    %v2062 = vmul.f32 %v521, %v2057
    %v2063 = vmul.f32 %v526, %v2055
    %s2064 = scalar_lea.vmem %s3, 168
    %v2065 = vld [vmem:[%s2064] sm:$0xff]
    %2067 = vset.pattern.permute.xlu0 0
    %2068 = vperm.xlu0 %2067, %v2065
    %v2069 = vpop.permute.xlu0 %2068
    %v2071 = vmul.f32 %v2061, %v2069
    %v2072 = vmul.f32 %v2062, %v2069
    %v2073 = vmul.f32 %v2063, %v2069
    %2077 = vrot.lane.b32.xlu0 %v2071, 80
    %v2078 = vpop.permute.xlu0 %2077
    %2079 = vrot.lane.b32.xlu0 %v2072, 80
    %v2080 = vpop.permute.xlu0 %2079
    %2081 = vrot.lane.b32.xlu0 %v2073, 80
    %v2082 = vpop.permute.xlu0 %2081
    %vm2083 = vcmask 654336
    %v2084 = vsel %vm2083, %v2078, %v2080
    %v2085 = vsel %vm2083, %v2080, %v2082
    %v2088 = vadd.f32 %v2014, %v2084
    %v2089 = vadd.f32 %v2015, %v2085
    %s2090 = scalar_lea.vmem %s5, 168
    %v2091 = vld [vmem:[%s2090] sm:$0xff]
    %2093 = vset.pattern.permute.xlu0 0
    %2094 = vperm.xlu0 %2093, %v2091
    %v2095 = vpop.permute.xlu0 %2094
    %v2097 = vmul.f32 %v2061, %v2095
    %v2098 = vmul.f32 %v2062, %v2095
    %v2099 = vmul.f32 %v2063, %v2095
    %2103 = vrot.lane.b32.xlu0 %v2097, 80
    %v2104 = vpop.permute.xlu0 %2103
    %2105 = vrot.lane.b32.xlu0 %v2098, 80
    %v2106 = vpop.permute.xlu0 %2105
    %2107 = vrot.lane.b32.xlu0 %v2099, 80
    %v2108 = vpop.permute.xlu0 %2107
    %v2109 = vsel %vm2083, %v2104, %v2106
    %v2110 = vsel %vm2083, %v2106, %v2108
    %v2113 = vadd.f32 %v2039, %v2109
    %v2114 = vadd.f32 %v2040, %v2110
    %s2115 = scalar_lea.vmem %s7, 44
    %v2116 = vld [vmem:[%s2115] sm:$0x3]
    %v2118 = vlaneseq
    %v2119 = vshrl.u32 %v2118, 7
    %v2120 = vsub.s32 0, %v2119
    %v2121 = vrot.slane %v2116, %v2120
    %v2122 = vlaneseq
    %v2123 = vshrl.u32 %v2122, 7
    %v2124 = vsub.s32 1, %v2123
    %v2125 = vrot.slane %v2116, %v2124
    %2126 = vrot.lane.b32.xlu0 %v2121, 49
    %v2127 = vpop.permute.xlu0 %2126
    %2128 = vrot.lane.b32.xlu0 %v2125, 49
    %v2129 = vpop.permute.xlu0 %2128
    %vm2130 = vcmask 400384
    %v2131 = vsel %vm2130, %v2127, %v2129
    %v2135 = vmul.f32 %v525, %v2127
    %v2136 = vmul.f32 %v521, %v2131
    %v2137 = vmul.f32 %v526, %v2129
    %s2138 = scalar_lea.vmem %s3, 176
    %v2139 = vld [vmem:[%s2138] sm:$0xff]
    %2141 = vset.pattern.permute.xlu0 0
    %2142 = vperm.xlu0 %2141, %v2139
    %v2143 = vpop.permute.xlu0 %2142
    %v2145 = vmul.f32 %v2135, %v2143
    %v2146 = vmul.f32 %v2136, %v2143
    %v2147 = vmul.f32 %v2137, %v2143
    %2151 = vrot.lane.b32.xlu0 %v2145, 79
    %v2152 = vpop.permute.xlu0 %2151
    %2153 = vrot.lane.b32.xlu0 %v2146, 79
    %v2154 = vpop.permute.xlu0 %2153
    %2155 = vrot.lane.b32.xlu0 %v2147, 79
    %v2156 = vpop.permute.xlu0 %2155
    %vm2157 = vcmask 646144
    %v2158 = vsel %vm2157, %v2152, %v2154
    %v2159 = vsel %vm2157, %v2154, %v2156
    %v2162 = vadd.f32 %v2088, %v2158
    %v2163 = vadd.f32 %v2089, %v2159
    %s2164 = scalar_lea.vmem %s5, 176
    %v2165 = vld [vmem:[%s2164] sm:$0xff]
    %2167 = vset.pattern.permute.xlu0 0
    %2168 = vperm.xlu0 %2167, %v2165
    %v2169 = vpop.permute.xlu0 %2168
    %v2171 = vmul.f32 %v2135, %v2169
    %v2172 = vmul.f32 %v2136, %v2169
    %v2173 = vmul.f32 %v2137, %v2169
    %2177 = vrot.lane.b32.xlu0 %v2171, 79
    %v2178 = vpop.permute.xlu0 %2177
    %2179 = vrot.lane.b32.xlu0 %v2172, 79
    %v2180 = vpop.permute.xlu0 %2179
    %2181 = vrot.lane.b32.xlu0 %v2173, 79
    %v2182 = vpop.permute.xlu0 %2181
    %v2183 = vsel %vm2157, %v2178, %v2180
    %v2184 = vsel %vm2157, %v2180, %v2182
    %v2187 = vadd.f32 %v2113, %v2183
    %v2188 = vadd.f32 %v2114, %v2184
    %s2189 = scalar_lea.vmem %s7, 46
    %v2190 = vld [vmem:[%s2189] sm:$0x3]
    %v2192 = vlaneseq
    %v2193 = vshrl.u32 %v2192, 7
    %v2194 = vsub.s32 0, %v2193
    %v2195 = vrot.slane %v2190, %v2194
    %v2196 = vlaneseq
    %v2197 = vshrl.u32 %v2196, 7
    %v2198 = vsub.s32 1, %v2197
    %v2199 = vrot.slane %v2190, %v2198
    %2200 = vrot.lane.b32.xlu0 %v2195, 50
    %v2201 = vpop.permute.xlu0 %2200
    %2202 = vrot.lane.b32.xlu0 %v2199, 50
    %v2203 = vpop.permute.xlu0 %2202
    %vm2204 = vcmask 408576
    %v2205 = vsel %vm2204, %v2201, %v2203
    %v2209 = vmul.f32 %v525, %v2201
    %v2210 = vmul.f32 %v521, %v2205
    %v2211 = vmul.f32 %v526, %v2203
    %s2212 = scalar_lea.vmem %s3, 184
    %v2213 = vld [vmem:[%s2212] sm:$0xff]
    %2215 = vset.pattern.permute.xlu0 0
    %2216 = vperm.xlu0 %2215, %v2213
    %v2217 = vpop.permute.xlu0 %2216
    %v2219 = vmul.f32 %v2209, %v2217
    %v2220 = vmul.f32 %v2210, %v2217
    %v2221 = vmul.f32 %v2211, %v2217
    %2225 = vrot.lane.b32.xlu0 %v2219, 78
    %v2226 = vpop.permute.xlu0 %2225
    %2227 = vrot.lane.b32.xlu0 %v2220, 78
    %v2228 = vpop.permute.xlu0 %2227
    %2229 = vrot.lane.b32.xlu0 %v2221, 78
    %v2230 = vpop.permute.xlu0 %2229
    %vm2231 = vcmask 637952
    %v2232 = vsel %vm2231, %v2226, %v2228
    %v2233 = vsel %vm2231, %v2228, %v2230
    %v2236 = vadd.f32 %v2162, %v2232
    %v2237 = vadd.f32 %v2163, %v2233
    %s2238 = scalar_lea.vmem %s5, 184
    %v2239 = vld [vmem:[%s2238] sm:$0xff]
    %2241 = vset.pattern.permute.xlu0 0
    %2242 = vperm.xlu0 %2241, %v2239
    %v2243 = vpop.permute.xlu0 %2242
    %v2245 = vmul.f32 %v2209, %v2243
    %v2246 = vmul.f32 %v2210, %v2243
    %v2247 = vmul.f32 %v2211, %v2243
    %2251 = vrot.lane.b32.xlu0 %v2245, 78
    %v2252 = vpop.permute.xlu0 %2251
    %2253 = vrot.lane.b32.xlu0 %v2246, 78
    %v2254 = vpop.permute.xlu0 %2253
    %2255 = vrot.lane.b32.xlu0 %v2247, 78
    %v2256 = vpop.permute.xlu0 %2255
    %v2257 = vsel %vm2231, %v2252, %v2254
    %v2258 = vsel %vm2231, %v2254, %v2256
    %v2261 = vadd.f32 %v2187, %v2257
    %v2262 = vadd.f32 %v2188, %v2258
    %s2263 = scalar_lea.vmem %s7, 48
    %v2264 = vld [vmem:[%s2263] sm:$0x3]
    %v2266 = vlaneseq
    %v2267 = vshrl.u32 %v2266, 7
    %v2268 = vsub.s32 0, %v2267
    %v2269 = vrot.slane %v2264, %v2268
    %v2270 = vlaneseq
    %v2271 = vshrl.u32 %v2270, 7
    %v2272 = vsub.s32 1, %v2271
    %v2273 = vrot.slane %v2264, %v2272
    %2274 = vrot.lane.b32.xlu0 %v2269, 51
    %v2275 = vpop.permute.xlu0 %2274
    %2276 = vrot.lane.b32.xlu0 %v2273, 51
    %v2277 = vpop.permute.xlu0 %2276
    %v2278 = vsel %vm520, %v2275, %v2277
    %v2282 = vmul.f32 %v525, %v2275
    %v2283 = vmul.f32 %v521, %v2278
    %v2284 = vmul.f32 %v526, %v2277
    %s2285 = scalar_lea.vmem %s3, 192
    %v2286 = vld [vmem:[%s2285] sm:$0xff]
    %2288 = vset.pattern.permute.xlu0 0
    %2289 = vperm.xlu0 %2288, %v2286
    %v2290 = vpop.permute.xlu0 %2289
    %v2292 = vmul.f32 %v2282, %v2290
    %v2293 = vmul.f32 %v2283, %v2290
    %v2294 = vmul.f32 %v2284, %v2290
    %2298 = vrot.lane.b32.xlu0 %v2292, 77
    %v2299 = vpop.permute.xlu0 %2298
    %2300 = vrot.lane.b32.xlu0 %v2293, 77
    %v2301 = vpop.permute.xlu0 %2300
    %2302 = vrot.lane.b32.xlu0 %v2294, 77
    %v2303 = vpop.permute.xlu0 %2302
    %vm2304 = vcmask 629760
    %v2305 = vsel %vm2304, %v2299, %v2301
    %v2306 = vsel %vm2304, %v2301, %v2303
    %v2309 = vadd.f32 %v2236, %v2305
    %v2310 = vadd.f32 %v2237, %v2306
    %s2311 = scalar_lea.vmem %s5, 192
    %v2312 = vld [vmem:[%s2311] sm:$0xff]
    %2314 = vset.pattern.permute.xlu0 0
    %2315 = vperm.xlu0 %2314, %v2312
    %v2316 = vpop.permute.xlu0 %2315
    %v2318 = vmul.f32 %v2282, %v2316
    %v2319 = vmul.f32 %v2283, %v2316
    %v2320 = vmul.f32 %v2284, %v2316
    %2324 = vrot.lane.b32.xlu0 %v2318, 77
    %v2325 = vpop.permute.xlu0 %2324
    %2326 = vrot.lane.b32.xlu0 %v2319, 77
    %v2327 = vpop.permute.xlu0 %2326
    %2328 = vrot.lane.b32.xlu0 %v2320, 77
    %v2329 = vpop.permute.xlu0 %2328
    %v2330 = vsel %vm2304, %v2325, %v2327
    %v2331 = vsel %vm2304, %v2327, %v2329
    %v2334 = vadd.f32 %v2261, %v2330
    %v2335 = vadd.f32 %v2262, %v2331
    %s2336 = scalar_lea.vmem %s7, 50
    %v2337 = vld [vmem:[%s2336] sm:$0x3]
    %v2339 = vlaneseq
    %v2340 = vshrl.u32 %v2339, 7
    %v2341 = vsub.s32 0, %v2340
    %v2342 = vrot.slane %v2337, %v2341
    %v2343 = vlaneseq
    %v2344 = vshrl.u32 %v2343, 7
    %v2345 = vsub.s32 1, %v2344
    %v2346 = vrot.slane %v2337, %v2345
    %2347 = vrot.lane.b32.xlu0 %v2342, 52
    %v2348 = vpop.permute.xlu0 %2347
    %2349 = vrot.lane.b32.xlu0 %v2346, 52
    %v2350 = vpop.permute.xlu0 %2349
    %vm2351 = vcmask 424960
    %v2352 = vsel %vm2351, %v2348, %v2350
    %v2356 = vmul.f32 %v525, %v2348
    %v2357 = vmul.f32 %v521, %v2352
    %v2358 = vmul.f32 %v526, %v2350
    %s2359 = scalar_lea.vmem %s3, 200
    %v2360 = vld [vmem:[%s2359] sm:$0xff]
    %2362 = vset.pattern.permute.xlu0 0
    %2363 = vperm.xlu0 %2362, %v2360
    %v2364 = vpop.permute.xlu0 %2363
    %v2366 = vmul.f32 %v2356, %v2364
    %v2367 = vmul.f32 %v2357, %v2364
    %v2368 = vmul.f32 %v2358, %v2364
    %2372 = vrot.lane.b32.xlu0 %v2366, 76
    %v2373 = vpop.permute.xlu0 %2372
    %2374 = vrot.lane.b32.xlu0 %v2367, 76
    %v2375 = vpop.permute.xlu0 %2374
    %2376 = vrot.lane.b32.xlu0 %v2368, 76
    %v2377 = vpop.permute.xlu0 %2376
    %vm2378 = vcmask 621568
    %v2379 = vsel %vm2378, %v2373, %v2375
    %v2380 = vsel %vm2378, %v2375, %v2377
    %v2383 = vadd.f32 %v2309, %v2379
    %v2384 = vadd.f32 %v2310, %v2380
    %s2385 = scalar_lea.vmem %s5, 200
    %v2386 = vld [vmem:[%s2385] sm:$0xff]
    %2388 = vset.pattern.permute.xlu0 0
    %2389 = vperm.xlu0 %2388, %v2386
    %v2390 = vpop.permute.xlu0 %2389
    %v2392 = vmul.f32 %v2356, %v2390
    %v2393 = vmul.f32 %v2357, %v2390
    %v2394 = vmul.f32 %v2358, %v2390
    %2398 = vrot.lane.b32.xlu0 %v2392, 76
    %v2399 = vpop.permute.xlu0 %2398
    %2400 = vrot.lane.b32.xlu0 %v2393, 76
    %v2401 = vpop.permute.xlu0 %2400
    %2402 = vrot.lane.b32.xlu0 %v2394, 76
    %v2403 = vpop.permute.xlu0 %2402
    %v2404 = vsel %vm2378, %v2399, %v2401
    %v2405 = vsel %vm2378, %v2401, %v2403
    %v2408 = vadd.f32 %v2334, %v2404
    %v2409 = vadd.f32 %v2335, %v2405
    %s2410 = scalar_lea.vmem %s7, 52
    %v2411 = vld [vmem:[%s2410] sm:$0x3]
    %v2413 = vlaneseq
    %v2414 = vshrl.u32 %v2413, 7
    %v2415 = vsub.s32 0, %v2414
    %v2416 = vrot.slane %v2411, %v2415
    %v2417 = vlaneseq
    %v2418 = vshrl.u32 %v2417, 7
    %v2419 = vsub.s32 1, %v2418
    %v2420 = vrot.slane %v2411, %v2419
    %2421 = vrot.lane.b32.xlu0 %v2416, 53
    %v2422 = vpop.permute.xlu0 %2421
    %2423 = vrot.lane.b32.xlu0 %v2420, 53
    %v2424 = vpop.permute.xlu0 %2423
    %vm2425 = vcmask 433152
    %v2426 = vsel %vm2425, %v2422, %v2424
    %v2430 = vmul.f32 %v525, %v2422
    %v2431 = vmul.f32 %v521, %v2426
    %v2432 = vmul.f32 %v526, %v2424
    %s2433 = scalar_lea.vmem %s3, 208
    %v2434 = vld [vmem:[%s2433] sm:$0xff]
    %2436 = vset.pattern.permute.xlu0 0
    %2437 = vperm.xlu0 %2436, %v2434
    %v2438 = vpop.permute.xlu0 %2437
    %v2440 = vmul.f32 %v2430, %v2438
    %v2441 = vmul.f32 %v2431, %v2438
    %v2442 = vmul.f32 %v2432, %v2438
    %2446 = vrot.lane.b32.xlu0 %v2440, 75
    %v2447 = vpop.permute.xlu0 %2446
    %2448 = vrot.lane.b32.xlu0 %v2441, 75
    %v2449 = vpop.permute.xlu0 %2448
    %2450 = vrot.lane.b32.xlu0 %v2442, 75
    %v2451 = vpop.permute.xlu0 %2450
    %vm2452 = vcmask 613376
    %v2453 = vsel %vm2452, %v2447, %v2449
    %v2454 = vsel %vm2452, %v2449, %v2451
    %v2457 = vadd.f32 %v2383, %v2453
    %v2458 = vadd.f32 %v2384, %v2454
    %s2459 = scalar_lea.vmem %s5, 208
    %v2460 = vld [vmem:[%s2459] sm:$0xff]
    %2462 = vset.pattern.permute.xlu0 0
    %2463 = vperm.xlu0 %2462, %v2460
    %v2464 = vpop.permute.xlu0 %2463
    %v2466 = vmul.f32 %v2430, %v2464
    %v2467 = vmul.f32 %v2431, %v2464
    %v2468 = vmul.f32 %v2432, %v2464
    %2472 = vrot.lane.b32.xlu0 %v2466, 75
    %v2473 = vpop.permute.xlu0 %2472
    %2474 = vrot.lane.b32.xlu0 %v2467, 75
    %v2475 = vpop.permute.xlu0 %2474
    %2476 = vrot.lane.b32.xlu0 %v2468, 75
    %v2477 = vpop.permute.xlu0 %2476
    %v2478 = vsel %vm2452, %v2473, %v2475
    %v2479 = vsel %vm2452, %v2475, %v2477
    %v2482 = vadd.f32 %v2408, %v2478
    %v2483 = vadd.f32 %v2409, %v2479
    %s2484 = scalar_lea.vmem %s7, 54
    %v2485 = vld [vmem:[%s2484] sm:$0x3]
    %v2487 = vlaneseq
    %v2488 = vshrl.u32 %v2487, 7
    %v2489 = vsub.s32 0, %v2488
    %v2490 = vrot.slane %v2485, %v2489
    %v2491 = vlaneseq
    %v2492 = vshrl.u32 %v2491, 7
    %v2493 = vsub.s32 1, %v2492
    %v2494 = vrot.slane %v2485, %v2493
    %2495 = vrot.lane.b32.xlu0 %v2490, 54
    %v2496 = vpop.permute.xlu0 %2495
    %2497 = vrot.lane.b32.xlu0 %v2494, 54
    %v2498 = vpop.permute.xlu0 %2497
    %vm2499 = vcmask 441344
    %v2500 = vsel %vm2499, %v2496, %v2498
    %v2504 = vmul.f32 %v525, %v2496
    %v2505 = vmul.f32 %v521, %v2500
    %v2506 = vmul.f32 %v526, %v2498
    %s2507 = scalar_lea.vmem %s3, 216
    %v2508 = vld [vmem:[%s2507] sm:$0xff]
    %2510 = vset.pattern.permute.xlu0 0
    %2511 = vperm.xlu0 %2510, %v2508
    %v2512 = vpop.permute.xlu0 %2511
    %v2514 = vmul.f32 %v2504, %v2512
    %v2515 = vmul.f32 %v2505, %v2512
    %v2516 = vmul.f32 %v2506, %v2512
    %2520 = vrot.lane.b32.xlu0 %v2514, 74
    %v2521 = vpop.permute.xlu0 %2520
    %2522 = vrot.lane.b32.xlu0 %v2515, 74
    %v2523 = vpop.permute.xlu0 %2522
    %2524 = vrot.lane.b32.xlu0 %v2516, 74
    %v2525 = vpop.permute.xlu0 %2524
    %vm2526 = vcmask 605184
    %v2527 = vsel %vm2526, %v2521, %v2523
    %v2528 = vsel %vm2526, %v2523, %v2525
    %v2531 = vadd.f32 %v2457, %v2527
    %v2532 = vadd.f32 %v2458, %v2528
    %s2533 = scalar_lea.vmem %s5, 216
    %v2534 = vld [vmem:[%s2533] sm:$0xff]
    %2536 = vset.pattern.permute.xlu0 0
    %2537 = vperm.xlu0 %2536, %v2534
    %v2538 = vpop.permute.xlu0 %2537
    %v2540 = vmul.f32 %v2504, %v2538
    %v2541 = vmul.f32 %v2505, %v2538
    %v2542 = vmul.f32 %v2506, %v2538
    %2546 = vrot.lane.b32.xlu0 %v2540, 74
    %v2547 = vpop.permute.xlu0 %2546
    %2548 = vrot.lane.b32.xlu0 %v2541, 74
    %v2549 = vpop.permute.xlu0 %2548
    %2550 = vrot.lane.b32.xlu0 %v2542, 74
    %v2551 = vpop.permute.xlu0 %2550
    %v2552 = vsel %vm2526, %v2547, %v2549
    %v2553 = vsel %vm2526, %v2549, %v2551
    %v2556 = vadd.f32 %v2482, %v2552
    %v2557 = vadd.f32 %v2483, %v2553
    %s2558 = scalar_lea.vmem %s7, 56
    %v2559 = vld [vmem:[%s2558] sm:$0x3]
    %v2561 = vlaneseq
    %v2562 = vshrl.u32 %v2561, 7
    %v2563 = vsub.s32 0, %v2562
    %v2564 = vrot.slane %v2559, %v2563
    %v2565 = vlaneseq
    %v2566 = vshrl.u32 %v2565, 7
    %v2567 = vsub.s32 1, %v2566
    %v2568 = vrot.slane %v2559, %v2567
    %2569 = vrot.lane.b32.xlu0 %v2564, 64
    %v2570 = vpop.permute.xlu0 %2569
    %2571 = vrot.lane.b32.xlu0 %v2568, 64
    %v2572 = vpop.permute.xlu0 %2571
    %vm2573 = vcmask 523264
    %v2574 = vsel %vm2573, %v2570, %v2572
    %v2578 = vmul.f32 %v525, %v2570
    %v2579 = vmul.f32 %v521, %v2574
    %v2580 = vmul.f32 %v526, %v2572
    %s2581 = scalar_lea.vmem %s3, 224
    %v2582 = vld [vmem:[%s2581] sm:$0xff]
    %2584 = vset.pattern.permute.xlu0 0
    %2585 = vperm.xlu0 %2584, %v2582
    %v2586 = vpop.permute.xlu0 %2585
    %v2588 = vmul.f32 %v2578, %v2586
    %v2589 = vmul.f32 %v2579, %v2586
    %v2590 = vmul.f32 %v2580, %v2586
    %2594 = vrot.lane.b32.xlu0 %v2588, 64
    %v2595 = vpop.permute.xlu0 %2594
    %2596 = vrot.lane.b32.xlu0 %v2589, 64
    %v2597 = vpop.permute.xlu0 %2596
    %2598 = vrot.lane.b32.xlu0 %v2590, 64
    %v2599 = vpop.permute.xlu0 %2598
    %v2600 = vsel %vm2573, %v2595, %v2597
    %v2601 = vsel %vm2573, %v2597, %v2599
    %v2604 = vadd.f32 %v2531, %v2600
    %v2605 = vadd.f32 %v2532, %v2601
    %s2606 = scalar_lea.vmem %s5, 224
    %v2607 = vld [vmem:[%s2606] sm:$0xff]
    %2609 = vset.pattern.permute.xlu0 0
    %2610 = vperm.xlu0 %2609, %v2607
    %v2611 = vpop.permute.xlu0 %2610
    %v2613 = vmul.f32 %v2578, %v2611
    %v2614 = vmul.f32 %v2579, %v2611
    %v2615 = vmul.f32 %v2580, %v2611
    %2619 = vrot.lane.b32.xlu0 %v2613, 64
    %v2620 = vpop.permute.xlu0 %2619
    %2621 = vrot.lane.b32.xlu0 %v2614, 64
    %v2622 = vpop.permute.xlu0 %2621
    %2623 = vrot.lane.b32.xlu0 %v2615, 64
    %v2624 = vpop.permute.xlu0 %2623
    %v2625 = vsel %vm2573, %v2620, %v2622
    %v2626 = vsel %vm2573, %v2622, %v2624
    %v2629 = vadd.f32 %v2556, %v2625
    %v2630 = vadd.f32 %v2557, %v2626
    %s2631 = scalar_lea.vmem %s7, 58
    %v2632 = vld [vmem:[%s2631] sm:$0x3]
    %v2634 = vlaneseq
    %v2635 = vshrl.u32 %v2634, 7
    %v2636 = vsub.s32 0, %v2635
    %v2637 = vrot.slane %v2632, %v2636
    %v2638 = vlaneseq
    %v2639 = vshrl.u32 %v2638, 7
    %v2640 = vsub.s32 1, %v2639
    %v2641 = vrot.slane %v2632, %v2640
    %2642 = vrot.lane.b32.xlu0 %v2637, 65
    %v2643 = vpop.permute.xlu0 %2642
    %2644 = vrot.lane.b32.xlu0 %v2641, 65
    %v2645 = vpop.permute.xlu0 %2644
    %vm2646 = vcmask 531456
    %v2647 = vsel %vm2646, %v2643, %v2645
    %v2651 = vmul.f32 %v525, %v2643
    %v2652 = vmul.f32 %v521, %v2647
    %v2653 = vmul.f32 %v526, %v2645
    %s2654 = scalar_lea.vmem %s3, 232
    %v2655 = vld [vmem:[%s2654] sm:$0xff]
    %2657 = vset.pattern.permute.xlu0 0
    %2658 = vperm.xlu0 %2657, %v2655
    %v2659 = vpop.permute.xlu0 %2658
    %v2661 = vmul.f32 %v2651, %v2659
    %v2662 = vmul.f32 %v2652, %v2659
    %v2663 = vmul.f32 %v2653, %v2659
    %2667 = vrot.lane.b32.xlu0 %v2661, 63
    %v2668 = vpop.permute.xlu0 %2667
    %2669 = vrot.lane.b32.xlu0 %v2662, 63
    %v2670 = vpop.permute.xlu0 %2669
    %2671 = vrot.lane.b32.xlu0 %v2663, 63
    %v2672 = vpop.permute.xlu0 %2671
    %vm2673 = vcmask 515072
    %v2674 = vsel %vm2673, %v2668, %v2670
    %v2675 = vsel %vm2673, %v2670, %v2672
    %v2678 = vadd.f32 %v2604, %v2674
    %v2679 = vadd.f32 %v2605, %v2675
    %s2680 = scalar_lea.vmem %s5, 232
    %v2681 = vld [vmem:[%s2680] sm:$0xff]
    %2683 = vset.pattern.permute.xlu0 0
    %2684 = vperm.xlu0 %2683, %v2681
    %v2685 = vpop.permute.xlu0 %2684
    %v2687 = vmul.f32 %v2651, %v2685
    %v2688 = vmul.f32 %v2652, %v2685
    %v2689 = vmul.f32 %v2653, %v2685
    %2693 = vrot.lane.b32.xlu0 %v2687, 63
    %v2694 = vpop.permute.xlu0 %2693
    %2695 = vrot.lane.b32.xlu0 %v2688, 63
    %v2696 = vpop.permute.xlu0 %2695
    %2697 = vrot.lane.b32.xlu0 %v2689, 63
    %v2698 = vpop.permute.xlu0 %2697
    %v2699 = vsel %vm2673, %v2694, %v2696
    %v2700 = vsel %vm2673, %v2696, %v2698
    %v2703 = vadd.f32 %v2629, %v2699
    %v2704 = vadd.f32 %v2630, %v2700
    %s2705 = scalar_lea.vmem %s7, 60
    %v2706 = vld [vmem:[%s2705] sm:$0x3]
    %v2708 = vlaneseq
    %v2709 = vshrl.u32 %v2708, 7
    %v2710 = vsub.s32 0, %v2709
    %v2711 = vrot.slane %v2706, %v2710
    %v2712 = vlaneseq
    %v2713 = vshrl.u32 %v2712, 7
    %v2714 = vsub.s32 1, %v2713
    %v2715 = vrot.slane %v2706, %v2714
    %2716 = vrot.lane.b32.xlu0 %v2711, 66
    %v2717 = vpop.permute.xlu0 %2716
    %2718 = vrot.lane.b32.xlu0 %v2715, 66
    %v2719 = vpop.permute.xlu0 %2718
    %vm2720 = vcmask 539648
    %v2721 = vsel %vm2720, %v2717, %v2719
    %v2725 = vmul.f32 %v525, %v2717
    %v2726 = vmul.f32 %v521, %v2721
    %v2727 = vmul.f32 %v526, %v2719
    %s2728 = scalar_lea.vmem %s3, 240
    %v2729 = vld [vmem:[%s2728] sm:$0xff]
    %2731 = vset.pattern.permute.xlu0 0
    %2732 = vperm.xlu0 %2731, %v2729
    %v2733 = vpop.permute.xlu0 %2732
    %v2735 = vmul.f32 %v2725, %v2733
    %v2736 = vmul.f32 %v2726, %v2733
    %v2737 = vmul.f32 %v2727, %v2733
    %2741 = vrot.lane.b32.xlu0 %v2735, 62
    %v2742 = vpop.permute.xlu0 %2741
    %2743 = vrot.lane.b32.xlu0 %v2736, 62
    %v2744 = vpop.permute.xlu0 %2743
    %2745 = vrot.lane.b32.xlu0 %v2737, 62
    %v2746 = vpop.permute.xlu0 %2745
    %vm2747 = vcmask 506880
    %v2748 = vsel %vm2747, %v2742, %v2744
    %v2749 = vsel %vm2747, %v2744, %v2746
    %v2752 = vadd.f32 %v2678, %v2748
    %v2753 = vadd.f32 %v2679, %v2749
    %s2754 = scalar_lea.vmem %s5, 240
    %v2755 = vld [vmem:[%s2754] sm:$0xff]
    %2757 = vset.pattern.permute.xlu0 0
    %2758 = vperm.xlu0 %2757, %v2755
    %v2759 = vpop.permute.xlu0 %2758
    %v2761 = vmul.f32 %v2725, %v2759
    %v2762 = vmul.f32 %v2726, %v2759
    %v2763 = vmul.f32 %v2727, %v2759
    %2767 = vrot.lane.b32.xlu0 %v2761, 62
    %v2768 = vpop.permute.xlu0 %2767
    %2769 = vrot.lane.b32.xlu0 %v2762, 62
    %v2770 = vpop.permute.xlu0 %2769
    %2771 = vrot.lane.b32.xlu0 %v2763, 62
    %v2772 = vpop.permute.xlu0 %2771
    %v2773 = vsel %vm2747, %v2768, %v2770
    %v2774 = vsel %vm2747, %v2770, %v2772
    %v2777 = vadd.f32 %v2703, %v2773
    %v2778 = vadd.f32 %v2704, %v2774
    %s2779 = scalar_lea.vmem %s7, 62
    %v2780 = vld [vmem:[%s2779] sm:$0x3]
    %v2782 = vlaneseq
    %v2783 = vshrl.u32 %v2782, 7
    %v2784 = vsub.s32 0, %v2783
    %v2785 = vrot.slane %v2780, %v2784
    %v2786 = vlaneseq
    %v2787 = vshrl.u32 %v2786, 7
    %v2788 = vsub.s32 1, %v2787
    %v2789 = vrot.slane %v2780, %v2788
    %2790 = vrot.lane.b32.xlu0 %v2785, 67
    %v2791 = vpop.permute.xlu0 %2790
    %2792 = vrot.lane.b32.xlu0 %v2789, 67
    %v2793 = vpop.permute.xlu0 %2792
    %vm2794 = vcmask 547840
    %v2795 = vsel %vm2794, %v2791, %v2793
    %v2799 = vmul.f32 %v525, %v2791
    %v2800 = vmul.f32 %v521, %v2795
    %v2801 = vmul.f32 %v526, %v2793
    %s2802 = scalar_lea.vmem %s3, 248
    %v2803 = vld [vmem:[%s2802] sm:$0xff]
    %2805 = vset.pattern.permute.xlu0 0
    %2806 = vperm.xlu0 %2805, %v2803
    %v2807 = vpop.permute.xlu0 %2806
    %v2809 = vmul.f32 %v2799, %v2807
    %v2810 = vmul.f32 %v2800, %v2807
    %v2811 = vmul.f32 %v2801, %v2807
    %2815 = vrot.lane.b32.xlu0 %v2809, 61
    %v2816 = vpop.permute.xlu0 %2815
    %2817 = vrot.lane.b32.xlu0 %v2810, 61
    %v2818 = vpop.permute.xlu0 %2817
    %2819 = vrot.lane.b32.xlu0 %v2811, 61
    %v2820 = vpop.permute.xlu0 %2819
    %vm2821 = vcmask 498688
    %v2822 = vsel %vm2821, %v2816, %v2818
    %v2823 = vsel %vm2821, %v2818, %v2820
    %v2826 = vadd.f32 %v2752, %v2822
    %v2827 = vadd.f32 %v2753, %v2823
    %s2828 = scalar_lea.vmem %s5, 248
    %v2829 = vld [vmem:[%s2828] sm:$0xff]
    %2831 = vset.pattern.permute.xlu0 0
    %2832 = vperm.xlu0 %2831, %v2829
    %v2833 = vpop.permute.xlu0 %2832
    %v2835 = vmul.f32 %v2799, %v2833
    %v2836 = vmul.f32 %v2800, %v2833
    %v2837 = vmul.f32 %v2801, %v2833
    %2841 = vrot.lane.b32.xlu0 %v2835, 61
    %v2842 = vpop.permute.xlu0 %2841
    %2843 = vrot.lane.b32.xlu0 %v2836, 61
    %v2844 = vpop.permute.xlu0 %2843
    %2845 = vrot.lane.b32.xlu0 %v2837, 61
    %v2846 = vpop.permute.xlu0 %2845
    %v2847 = vsel %vm2821, %v2842, %v2844
    %v2848 = vsel %vm2821, %v2844, %v2846
    %v2851 = vadd.f32 %v2777, %v2847
    %v2852 = vadd.f32 %v2778, %v2848
    %s2853 = scalar_lea.vmem %s7, 64
    %v2854 = vld [vmem:[%s2853] sm:$0x3]
    %v2856 = vlaneseq
    %v2857 = vshrl.u32 %v2856, 7
    %v2858 = vsub.s32 0, %v2857
    %v2859 = vrot.slane %v2854, %v2858
    %v2860 = vlaneseq
    %v2861 = vshrl.u32 %v2860, 7
    %v2862 = vsub.s32 1, %v2861
    %v2863 = vrot.slane %v2854, %v2862
    %2864 = vrot.lane.b32.xlu0 %v2859, 68
    %v2865 = vpop.permute.xlu0 %2864
    %2866 = vrot.lane.b32.xlu0 %v2863, 68
    %v2867 = vpop.permute.xlu0 %2866
    %vm2868 = vcmask 556032
    %v2869 = vsel %vm2868, %v2865, %v2867
    %v2873 = vmul.f32 %v525, %v2865
    %v2874 = vmul.f32 %v521, %v2869
    %v2875 = vmul.f32 %v526, %v2867
    %s2876 = scalar_lea.vmem %s3, 256
    %v2877 = vld [vmem:[%s2876] sm:$0xff]
    %2879 = vset.pattern.permute.xlu0 0
    %2880 = vperm.xlu0 %2879, %v2877
    %v2881 = vpop.permute.xlu0 %2880
    %v2883 = vmul.f32 %v2873, %v2881
    %v2884 = vmul.f32 %v2874, %v2881
    %v2885 = vmul.f32 %v2875, %v2881
    %2889 = vrot.lane.b32.xlu0 %v2883, 60
    %v2890 = vpop.permute.xlu0 %2889
    %2891 = vrot.lane.b32.xlu0 %v2884, 60
    %v2892 = vpop.permute.xlu0 %2891
    %2893 = vrot.lane.b32.xlu0 %v2885, 60
    %v2894 = vpop.permute.xlu0 %2893
    %vm2895 = vcmask 490496
    %v2896 = vsel %vm2895, %v2890, %v2892
    %v2897 = vsel %vm2895, %v2892, %v2894
    %v2900 = vadd.f32 %v2826, %v2896
    %v2901 = vadd.f32 %v2827, %v2897
    %s2902 = scalar_lea.vmem %s5, 256
    %v2903 = vld [vmem:[%s2902] sm:$0xff]
    %2905 = vset.pattern.permute.xlu0 0
    %2906 = vperm.xlu0 %2905, %v2903
    %v2907 = vpop.permute.xlu0 %2906
    %v2909 = vmul.f32 %v2873, %v2907
    %v2910 = vmul.f32 %v2874, %v2907
    %v2911 = vmul.f32 %v2875, %v2907
    %2915 = vrot.lane.b32.xlu0 %v2909, 60
    %v2916 = vpop.permute.xlu0 %2915
    %2917 = vrot.lane.b32.xlu0 %v2910, 60
    %v2918 = vpop.permute.xlu0 %2917
    %2919 = vrot.lane.b32.xlu0 %v2911, 60
    %v2920 = vpop.permute.xlu0 %2919
    %v2921 = vsel %vm2895, %v2916, %v2918
    %v2922 = vsel %vm2895, %v2918, %v2920
    %v2925 = vadd.f32 %v2851, %v2921
    %v2926 = vadd.f32 %v2852, %v2922
    %s2927 = scalar_lea.vmem %s7, 66
    %v2928 = vld [vmem:[%s2927] sm:$0x3]
    %v2930 = vlaneseq
    %v2931 = vshrl.u32 %v2930, 7
    %v2932 = vsub.s32 0, %v2931
    %v2933 = vrot.slane %v2928, %v2932
    %v2934 = vlaneseq
    %v2935 = vshrl.u32 %v2934, 7
    %v2936 = vsub.s32 1, %v2935
    %v2937 = vrot.slane %v2928, %v2936
    %2938 = vrot.lane.b32.xlu0 %v2933, 69
    %v2939 = vpop.permute.xlu0 %2938
    %2940 = vrot.lane.b32.xlu0 %v2937, 69
    %v2941 = vpop.permute.xlu0 %2940
    %vm2942 = vcmask 564224
    %v2943 = vsel %vm2942, %v2939, %v2941
    %v2947 = vmul.f32 %v525, %v2939
    %v2948 = vmul.f32 %v521, %v2943
    %v2949 = vmul.f32 %v526, %v2941
    %s2950 = scalar_lea.vmem %s3, 264
    %v2951 = vld [vmem:[%s2950] sm:$0xff]
    %2953 = vset.pattern.permute.xlu0 0
    %2954 = vperm.xlu0 %2953, %v2951
    %v2955 = vpop.permute.xlu0 %2954
    %v2957 = vmul.f32 %v2947, %v2955
    %v2958 = vmul.f32 %v2948, %v2955
    %v2959 = vmul.f32 %v2949, %v2955
    %2963 = vrot.lane.b32.xlu0 %v2957, 59
    %v2964 = vpop.permute.xlu0 %2963
    %2965 = vrot.lane.b32.xlu0 %v2958, 59
    %v2966 = vpop.permute.xlu0 %2965
    %2967 = vrot.lane.b32.xlu0 %v2959, 59
    %v2968 = vpop.permute.xlu0 %2967
    %vm2969 = vcmask 482304
    %v2970 = vsel %vm2969, %v2964, %v2966
    %v2971 = vsel %vm2969, %v2966, %v2968
    %v2974 = vadd.f32 %v2900, %v2970
    %v2975 = vadd.f32 %v2901, %v2971
    %s2976 = scalar_lea.vmem %s5, 264
    %v2977 = vld [vmem:[%s2976] sm:$0xff]
    %2979 = vset.pattern.permute.xlu0 0
    %2980 = vperm.xlu0 %2979, %v2977
    %v2981 = vpop.permute.xlu0 %2980
    %v2983 = vmul.f32 %v2947, %v2981
    %v2984 = vmul.f32 %v2948, %v2981
    %v2985 = vmul.f32 %v2949, %v2981
    %2989 = vrot.lane.b32.xlu0 %v2983, 59
    %v2990 = vpop.permute.xlu0 %2989
    %2991 = vrot.lane.b32.xlu0 %v2984, 59
    %v2992 = vpop.permute.xlu0 %2991
    %2993 = vrot.lane.b32.xlu0 %v2985, 59
    %v2994 = vpop.permute.xlu0 %2993
    %v2995 = vsel %vm2969, %v2990, %v2992
    %v2996 = vsel %vm2969, %v2992, %v2994
    %v2999 = vadd.f32 %v2925, %v2995
    %v3000 = vadd.f32 %v2926, %v2996
    %s3001 = scalar_lea.vmem %s7, 68
    %v3002 = vld [vmem:[%s3001] sm:$0x3]
    %v3004 = vlaneseq
    %v3005 = vshrl.u32 %v3004, 7
    %v3006 = vsub.s32 0, %v3005
    %v3007 = vrot.slane %v3002, %v3006
    %v3008 = vlaneseq
    %v3009 = vshrl.u32 %v3008, 7
    %v3010 = vsub.s32 1, %v3009
    %v3011 = vrot.slane %v3002, %v3010
    %3012 = vrot.lane.b32.xlu0 %v3007, 70
    %v3013 = vpop.permute.xlu0 %3012
    %3014 = vrot.lane.b32.xlu0 %v3011, 70
    %v3015 = vpop.permute.xlu0 %3014
    %vm3016 = vcmask 572416
    %v3017 = vsel %vm3016, %v3013, %v3015
    %v3021 = vmul.f32 %v525, %v3013
    %v3022 = vmul.f32 %v521, %v3017
    %v3023 = vmul.f32 %v526, %v3015
    %s3024 = scalar_lea.vmem %s3, 272
    %v3025 = vld [vmem:[%s3024] sm:$0xff]
    %3027 = vset.pattern.permute.xlu0 0
    %3028 = vperm.xlu0 %3027, %v3025
    %v3029 = vpop.permute.xlu0 %3028
    %v3031 = vmul.f32 %v3021, %v3029
    %v3032 = vmul.f32 %v3022, %v3029
    %v3033 = vmul.f32 %v3023, %v3029
    %3037 = vrot.lane.b32.xlu0 %v3031, 58
    %v3038 = vpop.permute.xlu0 %3037
    %3039 = vrot.lane.b32.xlu0 %v3032, 58
    %v3040 = vpop.permute.xlu0 %3039
    %3041 = vrot.lane.b32.xlu0 %v3033, 58
    %v3042 = vpop.permute.xlu0 %3041
    %vm3043 = vcmask 474112
    %v3044 = vsel %vm3043, %v3038, %v3040
    %v3045 = vsel %vm3043, %v3040, %v3042
    %v3048 = vadd.f32 %v2974, %v3044
    %v3049 = vadd.f32 %v2975, %v3045
    %s3050 = scalar_lea.vmem %s5, 272
    %v3051 = vld [vmem:[%s3050] sm:$0xff]
    %3053 = vset.pattern.permute.xlu0 0
    %3054 = vperm.xlu0 %3053, %v3051
    %v3055 = vpop.permute.xlu0 %3054
    %v3057 = vmul.f32 %v3021, %v3055
    %v3058 = vmul.f32 %v3022, %v3055
    %v3059 = vmul.f32 %v3023, %v3055
    %3063 = vrot.lane.b32.xlu0 %v3057, 58
    %v3064 = vpop.permute.xlu0 %3063
    %3065 = vrot.lane.b32.xlu0 %v3058, 58
    %v3066 = vpop.permute.xlu0 %3065
    %3067 = vrot.lane.b32.xlu0 %v3059, 58
    %v3068 = vpop.permute.xlu0 %3067
    %v3069 = vsel %vm3043, %v3064, %v3066
    %v3070 = vsel %vm3043, %v3066, %v3068
    %v3073 = vadd.f32 %v2999, %v3069
    %v3074 = vadd.f32 %v3000, %v3070
    %s3075 = scalar_lea.vmem %s7, 70
    %v3076 = vld [vmem:[%s3075] sm:$0x3]
    %v3078 = vlaneseq
    %v3079 = vshrl.u32 %v3078, 7
    %v3080 = vsub.s32 0, %v3079
    %v3081 = vrot.slane %v3076, %v3080
    %v3082 = vlaneseq
    %v3083 = vshrl.u32 %v3082, 7
    %v3084 = vsub.s32 1, %v3083
    %v3085 = vrot.slane %v3076, %v3084
    %3086 = vrot.lane.b32.xlu0 %v3081, 80
    %v3087 = vpop.permute.xlu0 %3086
    %3088 = vrot.lane.b32.xlu0 %v3085, 80
    %v3089 = vpop.permute.xlu0 %3088
    %v3090 = vsel %vm2083, %v3087, %v3089
    %v3094 = vmul.f32 %v525, %v3087
    %v3095 = vmul.f32 %v521, %v3090
    %v3096 = vmul.f32 %v526, %v3089
    %s3097 = scalar_lea.vmem %s3, 280
    %v3098 = vld [vmem:[%s3097] sm:$0xff]
    %3100 = vset.pattern.permute.xlu0 0
    %3101 = vperm.xlu0 %3100, %v3098
    %v3102 = vpop.permute.xlu0 %3101
    %v3104 = vmul.f32 %v3094, %v3102
    %v3105 = vmul.f32 %v3095, %v3102
    %v3106 = vmul.f32 %v3096, %v3102
    %3110 = vrot.lane.b32.xlu0 %v3104, 48
    %v3111 = vpop.permute.xlu0 %3110
    %3112 = vrot.lane.b32.xlu0 %v3105, 48
    %v3113 = vpop.permute.xlu0 %3112
    %3114 = vrot.lane.b32.xlu0 %v3106, 48
    %v3115 = vpop.permute.xlu0 %3114
    %v3116 = vsel %vm2056, %v3111, %v3113
    %v3117 = vsel %vm2056, %v3113, %v3115
    %v3120 = vadd.f32 %v3048, %v3116
    %v3121 = vadd.f32 %v3049, %v3117
    %s3122 = scalar_lea.vmem %s5, 280
    %v3123 = vld [vmem:[%s3122] sm:$0xff]
    %3125 = vset.pattern.permute.xlu0 0
    %3126 = vperm.xlu0 %3125, %v3123
    %v3127 = vpop.permute.xlu0 %3126
    %v3129 = vmul.f32 %v3094, %v3127
    %v3130 = vmul.f32 %v3095, %v3127
    %v3131 = vmul.f32 %v3096, %v3127
    %3135 = vrot.lane.b32.xlu0 %v3129, 48
    %v3136 = vpop.permute.xlu0 %3135
    %3137 = vrot.lane.b32.xlu0 %v3130, 48
    %v3138 = vpop.permute.xlu0 %3137
    %3139 = vrot.lane.b32.xlu0 %v3131, 48
    %v3140 = vpop.permute.xlu0 %3139
    %v3141 = vsel %vm2056, %v3136, %v3138
    %v3142 = vsel %vm2056, %v3138, %v3140
    %v3145 = vadd.f32 %v3073, %v3141
    %v3146 = vadd.f32 %v3074, %v3142
    %s3147 = scalar_lea.vmem %s7, 72
    %v3148 = vld [vmem:[%s3147] sm:$0x3]
    %v3150 = vlaneseq
    %v3151 = vshrl.u32 %v3150, 7
    %v3152 = vsub.s32 0, %v3151
    %v3153 = vrot.slane %v3148, %v3152
    %v3154 = vlaneseq
    %v3155 = vshrl.u32 %v3154, 7
    %v3156 = vsub.s32 1, %v3155
    %v3157 = vrot.slane %v3148, %v3156
    %3158 = vrot.lane.b32.xlu0 %v3153, 81
    %v3159 = vpop.permute.xlu0 %3158
    %3160 = vrot.lane.b32.xlu0 %v3157, 81
    %v3161 = vpop.permute.xlu0 %3160
    %vm3162 = vcmask 662528
    %v3163 = vsel %vm3162, %v3159, %v3161
    %v3167 = vmul.f32 %v525, %v3159
    %v3168 = vmul.f32 %v521, %v3163
    %v3169 = vmul.f32 %v526, %v3161
    %s3170 = scalar_lea.vmem %s3, 288
    %v3171 = vld [vmem:[%s3170] sm:$0xff]
    %3173 = vset.pattern.permute.xlu0 0
    %3174 = vperm.xlu0 %3173, %v3171
    %v3175 = vpop.permute.xlu0 %3174
    %v3177 = vmul.f32 %v3167, %v3175
    %v3178 = vmul.f32 %v3168, %v3175
    %v3179 = vmul.f32 %v3169, %v3175
    %3183 = vrot.lane.b32.xlu0 %v3177, 47
    %v3184 = vpop.permute.xlu0 %3183
    %3185 = vrot.lane.b32.xlu0 %v3178, 47
    %v3186 = vpop.permute.xlu0 %3185
    %3187 = vrot.lane.b32.xlu0 %v3179, 47
    %v3188 = vpop.permute.xlu0 %3187
    %vm3189 = vcmask 384000
    %v3190 = vsel %vm3189, %v3184, %v3186
    %v3191 = vsel %vm3189, %v3186, %v3188
    %v3194 = vadd.f32 %v3120, %v3190
    %v3195 = vadd.f32 %v3121, %v3191
    %s3196 = scalar_lea.vmem %s5, 288
    %v3197 = vld [vmem:[%s3196] sm:$0xff]
    %3199 = vset.pattern.permute.xlu0 0
    %3200 = vperm.xlu0 %3199, %v3197
    %v3201 = vpop.permute.xlu0 %3200
    %v3203 = vmul.f32 %v3167, %v3201
    %v3204 = vmul.f32 %v3168, %v3201
    %v3205 = vmul.f32 %v3169, %v3201
    %3209 = vrot.lane.b32.xlu0 %v3203, 47
    %v3210 = vpop.permute.xlu0 %3209
    %3211 = vrot.lane.b32.xlu0 %v3204, 47
    %v3212 = vpop.permute.xlu0 %3211
    %3213 = vrot.lane.b32.xlu0 %v3205, 47
    %v3214 = vpop.permute.xlu0 %3213
    %v3215 = vsel %vm3189, %v3210, %v3212
    %v3216 = vsel %vm3189, %v3212, %v3214
    %v3219 = vadd.f32 %v3145, %v3215
    %v3220 = vadd.f32 %v3146, %v3216
    %s3221 = scalar_lea.vmem %s7, 74
    %v3222 = vld [vmem:[%s3221] sm:$0x3]
    %v3224 = vlaneseq
    %v3225 = vshrl.u32 %v3224, 7
    %v3226 = vsub.s32 0, %v3225
    %v3227 = vrot.slane %v3222, %v3226
    %v3228 = vlaneseq
    %v3229 = vshrl.u32 %v3228, 7
    %v3230 = vsub.s32 1, %v3229
    %v3231 = vrot.slane %v3222, %v3230
    %3232 = vrot.lane.b32.xlu0 %v3227, 82
    %v3233 = vpop.permute.xlu0 %3232
    %3234 = vrot.lane.b32.xlu0 %v3231, 82
    %v3235 = vpop.permute.xlu0 %3234
    %vm3236 = vcmask 670720
    %v3237 = vsel %vm3236, %v3233, %v3235
    %v3241 = vmul.f32 %v525, %v3233
    %v3242 = vmul.f32 %v521, %v3237
    %v3243 = vmul.f32 %v526, %v3235
    %s3244 = scalar_lea.vmem %s3, 296
    %v3245 = vld [vmem:[%s3244] sm:$0xff]
    %3247 = vset.pattern.permute.xlu0 0
    %3248 = vperm.xlu0 %3247, %v3245
    %v3249 = vpop.permute.xlu0 %3248
    %v3251 = vmul.f32 %v3241, %v3249
    %v3252 = vmul.f32 %v3242, %v3249
    %v3253 = vmul.f32 %v3243, %v3249
    %3257 = vrot.lane.b32.xlu0 %v3251, 46
    %v3258 = vpop.permute.xlu0 %3257
    %3259 = vrot.lane.b32.xlu0 %v3252, 46
    %v3260 = vpop.permute.xlu0 %3259
    %3261 = vrot.lane.b32.xlu0 %v3253, 46
    %v3262 = vpop.permute.xlu0 %3261
    %vm3263 = vcmask 375808
    %v3264 = vsel %vm3263, %v3258, %v3260
    %v3265 = vsel %vm3263, %v3260, %v3262
    %v3268 = vadd.f32 %v3194, %v3264
    %v3269 = vadd.f32 %v3195, %v3265
    %s3270 = scalar_lea.vmem %s5, 296
    %v3271 = vld [vmem:[%s3270] sm:$0xff]
    %3273 = vset.pattern.permute.xlu0 0
    %3274 = vperm.xlu0 %3273, %v3271
    %v3275 = vpop.permute.xlu0 %3274
    %v3277 = vmul.f32 %v3241, %v3275
    %v3278 = vmul.f32 %v3242, %v3275
    %v3279 = vmul.f32 %v3243, %v3275
    %3283 = vrot.lane.b32.xlu0 %v3277, 46
    %v3284 = vpop.permute.xlu0 %3283
    %3285 = vrot.lane.b32.xlu0 %v3278, 46
    %v3286 = vpop.permute.xlu0 %3285
    %3287 = vrot.lane.b32.xlu0 %v3279, 46
    %v3288 = vpop.permute.xlu0 %3287
    %v3289 = vsel %vm3263, %v3284, %v3286
    %v3290 = vsel %vm3263, %v3286, %v3288
    %v3293 = vadd.f32 %v3219, %v3289
    %v3294 = vadd.f32 %v3220, %v3290
    %s3295 = scalar_lea.vmem %s7, 76
    %v3296 = vld [vmem:[%s3295] sm:$0x3]
    %v3298 = vlaneseq
    %v3299 = vshrl.u32 %v3298, 7
    %v3300 = vsub.s32 0, %v3299
    %v3301 = vrot.slane %v3296, %v3300
    %v3302 = vlaneseq
    %v3303 = vshrl.u32 %v3302, 7
    %v3304 = vsub.s32 1, %v3303
    %v3305 = vrot.slane %v3296, %v3304
    %3306 = vrot.lane.b32.xlu0 %v3301, 83
    %v3307 = vpop.permute.xlu0 %3306
    %3308 = vrot.lane.b32.xlu0 %v3305, 83
    %v3309 = vpop.permute.xlu0 %3308
    %vm3310 = vcmask 678912
    %v3311 = vsel %vm3310, %v3307, %v3309
    %v3315 = vmul.f32 %v525, %v3307
    %v3316 = vmul.f32 %v521, %v3311
    %v3317 = vmul.f32 %v526, %v3309
    %s3318 = scalar_lea.vmem %s3, 304
    %v3319 = vld [vmem:[%s3318] sm:$0xff]
    %3321 = vset.pattern.permute.xlu0 0
    %3322 = vperm.xlu0 %3321, %v3319
    %v3323 = vpop.permute.xlu0 %3322
    %v3325 = vmul.f32 %v3315, %v3323
    %v3326 = vmul.f32 %v3316, %v3323
    %v3327 = vmul.f32 %v3317, %v3323
    %3331 = vrot.lane.b32.xlu0 %v3325, 45
    %v3332 = vpop.permute.xlu0 %3331
    %3333 = vrot.lane.b32.xlu0 %v3326, 45
    %v3334 = vpop.permute.xlu0 %3333
    %3335 = vrot.lane.b32.xlu0 %v3327, 45
    %v3336 = vpop.permute.xlu0 %3335
    %vm3337 = vcmask 367616
    %v3338 = vsel %vm3337, %v3332, %v3334
    %v3339 = vsel %vm3337, %v3334, %v3336
    %v3342 = vadd.f32 %v3268, %v3338
    %v3343 = vadd.f32 %v3269, %v3339
    %s3344 = scalar_lea.vmem %s5, 304
    %v3345 = vld [vmem:[%s3344] sm:$0xff]
    %3347 = vset.pattern.permute.xlu0 0
    %3348 = vperm.xlu0 %3347, %v3345
    %v3349 = vpop.permute.xlu0 %3348
    %v3351 = vmul.f32 %v3315, %v3349
    %v3352 = vmul.f32 %v3316, %v3349
    %v3353 = vmul.f32 %v3317, %v3349
    %3357 = vrot.lane.b32.xlu0 %v3351, 45
    %v3358 = vpop.permute.xlu0 %3357
    %3359 = vrot.lane.b32.xlu0 %v3352, 45
    %v3360 = vpop.permute.xlu0 %3359
    %3361 = vrot.lane.b32.xlu0 %v3353, 45
    %v3362 = vpop.permute.xlu0 %3361
    %v3363 = vsel %vm3337, %v3358, %v3360
    %v3364 = vsel %vm3337, %v3360, %v3362
    %v3367 = vadd.f32 %v3293, %v3363
    %v3368 = vadd.f32 %v3294, %v3364
    %s3369 = scalar_lea.vmem %s7, 78
    %v3370 = vld [vmem:[%s3369] sm:$0x3]
    %v3372 = vlaneseq
    %v3373 = vshrl.u32 %v3372, 7
    %v3374 = vsub.s32 0, %v3373
    %v3375 = vrot.slane %v3370, %v3374
    %v3376 = vlaneseq
    %v3377 = vshrl.u32 %v3376, 7
    %v3378 = vsub.s32 1, %v3377
    %v3379 = vrot.slane %v3370, %v3378
    %3380 = vrot.lane.b32.xlu0 %v3375, 84
    %v3381 = vpop.permute.xlu0 %3380
    %3382 = vrot.lane.b32.xlu0 %v3379, 84
    %v3383 = vpop.permute.xlu0 %3382
    %vm3384 = vcmask 687104
    %v3385 = vsel %vm3384, %v3381, %v3383
    %v3389 = vmul.f32 %v525, %v3381
    %v3390 = vmul.f32 %v521, %v3385
    %v3391 = vmul.f32 %v526, %v3383
    %s3392 = scalar_lea.vmem %s3, 312
    %v3393 = vld [vmem:[%s3392] sm:$0xff]
    %3395 = vset.pattern.permute.xlu0 0
    %3396 = vperm.xlu0 %3395, %v3393
    %v3397 = vpop.permute.xlu0 %3396
    %v3399 = vmul.f32 %v3389, %v3397
    %v3400 = vmul.f32 %v3390, %v3397
    %v3401 = vmul.f32 %v3391, %v3397
    %3405 = vrot.lane.b32.xlu0 %v3399, 44
    %v3406 = vpop.permute.xlu0 %3405
    %3407 = vrot.lane.b32.xlu0 %v3400, 44
    %v3408 = vpop.permute.xlu0 %3407
    %3409 = vrot.lane.b32.xlu0 %v3401, 44
    %v3410 = vpop.permute.xlu0 %3409
    %vm3411 = vcmask 359424
    %v3412 = vsel %vm3411, %v3406, %v3408
    %v3413 = vsel %vm3411, %v3408, %v3410
    %v3416 = vadd.f32 %v3342, %v3412
    %v3417 = vadd.f32 %v3343, %v3413
    %s3418 = scalar_lea.vmem %s5, 312
    %v3419 = vld [vmem:[%s3418] sm:$0xff]
    %3421 = vset.pattern.permute.xlu0 0
    %3422 = vperm.xlu0 %3421, %v3419
    %v3423 = vpop.permute.xlu0 %3422
    %v3425 = vmul.f32 %v3389, %v3423
    %v3426 = vmul.f32 %v3390, %v3423
    %v3427 = vmul.f32 %v3391, %v3423
    %3431 = vrot.lane.b32.xlu0 %v3425, 44
    %v3432 = vpop.permute.xlu0 %3431
    %3433 = vrot.lane.b32.xlu0 %v3426, 44
    %v3434 = vpop.permute.xlu0 %3433
    %3435 = vrot.lane.b32.xlu0 %v3427, 44
    %v3436 = vpop.permute.xlu0 %3435
    %v3437 = vsel %vm3411, %v3432, %v3434
    %v3438 = vsel %vm3411, %v3434, %v3436
    %v3441 = vadd.f32 %v3367, %v3437
    %v3442 = vadd.f32 %v3368, %v3438
    %s3443 = scalar_lea.vmem %s7, 80
    %v3444 = vld [vmem:[%s3443] sm:$0x3]
    %v3446 = vlaneseq
    %v3447 = vshrl.u32 %v3446, 7
    %v3448 = vsub.s32 0, %v3447
    %v3449 = vrot.slane %v3444, %v3448
    %v3450 = vlaneseq
    %v3451 = vshrl.u32 %v3450, 7
    %v3452 = vsub.s32 1, %v3451
    %v3453 = vrot.slane %v3444, %v3452
    %3454 = vrot.lane.b32.xlu0 %v3449, 85
    %v3455 = vpop.permute.xlu0 %3454
    %3456 = vrot.lane.b32.xlu0 %v3453, 85
    %v3457 = vpop.permute.xlu0 %3456
    %vm3458 = vcmask 695296
    %v3459 = vsel %vm3458, %v3455, %v3457
    %v3463 = vmul.f32 %v525, %v3455
    %v3464 = vmul.f32 %v521, %v3459
    %v3465 = vmul.f32 %v526, %v3457
    %s3466 = scalar_lea.vmem %s3, 320
    %v3467 = vld [vmem:[%s3466] sm:$0xff]
    %3469 = vset.pattern.permute.xlu0 0
    %3470 = vperm.xlu0 %3469, %v3467
    %v3471 = vpop.permute.xlu0 %3470
    %v3473 = vmul.f32 %v3463, %v3471
    %v3474 = vmul.f32 %v3464, %v3471
    %v3475 = vmul.f32 %v3465, %v3471
    %3479 = vrot.lane.b32.xlu0 %v3473, 43
    %v3480 = vpop.permute.xlu0 %3479
    %3481 = vrot.lane.b32.xlu0 %v3474, 43
    %v3482 = vpop.permute.xlu0 %3481
    %3483 = vrot.lane.b32.xlu0 %v3475, 43
    %v3484 = vpop.permute.xlu0 %3483
    %vm3485 = vcmask 351232
    %v3486 = vsel %vm3485, %v3480, %v3482
    %v3487 = vsel %vm3485, %v3482, %v3484
    %v3490 = vadd.f32 %v3416, %v3486
    %v3491 = vadd.f32 %v3417, %v3487
    %s3492 = scalar_lea.vmem %s5, 320
    %v3493 = vld [vmem:[%s3492] sm:$0xff]
    %3495 = vset.pattern.permute.xlu0 0
    %3496 = vperm.xlu0 %3495, %v3493
    %v3497 = vpop.permute.xlu0 %3496
    %v3499 = vmul.f32 %v3463, %v3497
    %v3500 = vmul.f32 %v3464, %v3497
    %v3501 = vmul.f32 %v3465, %v3497
    %3505 = vrot.lane.b32.xlu0 %v3499, 43
    %v3506 = vpop.permute.xlu0 %3505
    %3507 = vrot.lane.b32.xlu0 %v3500, 43
    %v3508 = vpop.permute.xlu0 %3507
    %3509 = vrot.lane.b32.xlu0 %v3501, 43
    %v3510 = vpop.permute.xlu0 %3509
    %v3511 = vsel %vm3485, %v3506, %v3508
    %v3512 = vsel %vm3485, %v3508, %v3510
    %v3515 = vadd.f32 %v3441, %v3511
    %v3516 = vadd.f32 %v3442, %v3512
    %s3517 = scalar_lea.vmem %s7, 82
    %v3518 = vld [vmem:[%s3517] sm:$0x3]
    %v3520 = vlaneseq
    %v3521 = vshrl.u32 %v3520, 7
    %v3522 = vsub.s32 0, %v3521
    %v3523 = vrot.slane %v3518, %v3522
    %v3524 = vlaneseq
    %v3525 = vshrl.u32 %v3524, 7
    %v3526 = vsub.s32 1, %v3525
    %v3527 = vrot.slane %v3518, %v3526
    %3528 = vrot.lane.b32.xlu0 %v3523, 86
    %v3529 = vpop.permute.xlu0 %3528
    %3530 = vrot.lane.b32.xlu0 %v3527, 86
    %v3531 = vpop.permute.xlu0 %3530
    %vm3532 = vcmask 703488
    %v3533 = vsel %vm3532, %v3529, %v3531
    %v3537 = vmul.f32 %v525, %v3529
    %v3538 = vmul.f32 %v521, %v3533
    %v3539 = vmul.f32 %v526, %v3531
    %s3540 = scalar_lea.vmem %s3, 328
    %v3541 = vld [vmem:[%s3540] sm:$0xff]
    %3543 = vset.pattern.permute.xlu0 0
    %3544 = vperm.xlu0 %3543, %v3541
    %v3545 = vpop.permute.xlu0 %3544
    %v3547 = vmul.f32 %v3537, %v3545
    %v3548 = vmul.f32 %v3538, %v3545
    %v3549 = vmul.f32 %v3539, %v3545
    %3553 = vrot.lane.b32.xlu0 %v3547, 42
    %v3554 = vpop.permute.xlu0 %3553
    %3555 = vrot.lane.b32.xlu0 %v3548, 42
    %v3556 = vpop.permute.xlu0 %3555
    %3557 = vrot.lane.b32.xlu0 %v3549, 42
    %v3558 = vpop.permute.xlu0 %3557
    %vm3559 = vcmask 343040
    %v3560 = vsel %vm3559, %v3554, %v3556
    %v3561 = vsel %vm3559, %v3556, %v3558
    %v3564 = vadd.f32 %v3490, %v3560
    %v3565 = vadd.f32 %v3491, %v3561
    %s3566 = scalar_lea.vmem %s5, 328
    %v3567 = vld [vmem:[%s3566] sm:$0xff]
    %3569 = vset.pattern.permute.xlu0 0
    %3570 = vperm.xlu0 %3569, %v3567
    %v3571 = vpop.permute.xlu0 %3570
    %v3573 = vmul.f32 %v3537, %v3571
    %v3574 = vmul.f32 %v3538, %v3571
    %v3575 = vmul.f32 %v3539, %v3571
    %3579 = vrot.lane.b32.xlu0 %v3573, 42
    %v3580 = vpop.permute.xlu0 %3579
    %3581 = vrot.lane.b32.xlu0 %v3574, 42
    %v3582 = vpop.permute.xlu0 %3581
    %3583 = vrot.lane.b32.xlu0 %v3575, 42
    %v3584 = vpop.permute.xlu0 %3583
    %v3585 = vsel %vm3559, %v3580, %v3582
    %v3586 = vsel %vm3559, %v3582, %v3584
    %v3589 = vadd.f32 %v3515, %v3585
    %v3590 = vadd.f32 %v3516, %v3586
    %s3591 = scalar_lea.vmem %s7, 84
    %v3592 = vld [vmem:[%s3591] sm:$0x3]
    %v3594 = vlaneseq
    %v3595 = vshrl.u32 %v3594, 7
    %v3596 = vsub.s32 0, %v3595
    %v3597 = vrot.slane %v3592, %v3596
    %v3598 = vlaneseq
    %v3599 = vshrl.u32 %v3598, 7
    %v3600 = vsub.s32 1, %v3599
    %v3601 = vrot.slane %v3592, %v3600
    %3602 = vrot.lane.b32.xlu0 %v3597, 96
    %v3603 = vpop.permute.xlu0 %3602
    %3604 = vrot.lane.b32.xlu0 %v3601, 96
    %v3605 = vpop.permute.xlu0 %3604
    %v3606 = vsel %vm1565, %v3603, %v3605
    %v3610 = vmul.f32 %v525, %v3603
    %v3611 = vmul.f32 %v521, %v3606
    %v3612 = vmul.f32 %v526, %v3605
    %s3613 = scalar_lea.vmem %s3, 336
    %v3614 = vld [vmem:[%s3613] sm:$0xff]
    %3616 = vset.pattern.permute.xlu0 0
    %3617 = vperm.xlu0 %3616, %v3614
    %v3618 = vpop.permute.xlu0 %3617
    %v3620 = vmul.f32 %v3610, %v3618
    %v3621 = vmul.f32 %v3611, %v3618
    %v3622 = vmul.f32 %v3612, %v3618
    %3626 = vrot.lane.b32.xlu0 %v3620, 32
    %v3627 = vpop.permute.xlu0 %3626
    %3628 = vrot.lane.b32.xlu0 %v3621, 32
    %v3629 = vpop.permute.xlu0 %3628
    %3630 = vrot.lane.b32.xlu0 %v3622, 32
    %v3631 = vpop.permute.xlu0 %3630
    %v3632 = vsel %vm1538, %v3627, %v3629
    %v3633 = vsel %vm1538, %v3629, %v3631
    %v3636 = vadd.f32 %v3564, %v3632
    %v3637 = vadd.f32 %v3565, %v3633
    %s3638 = scalar_lea.vmem %s5, 336
    %v3639 = vld [vmem:[%s3638] sm:$0xff]
    %3641 = vset.pattern.permute.xlu0 0
    %3642 = vperm.xlu0 %3641, %v3639
    %v3643 = vpop.permute.xlu0 %3642
    %v3645 = vmul.f32 %v3610, %v3643
    %v3646 = vmul.f32 %v3611, %v3643
    %v3647 = vmul.f32 %v3612, %v3643
    %3651 = vrot.lane.b32.xlu0 %v3645, 32
    %v3652 = vpop.permute.xlu0 %3651
    %3653 = vrot.lane.b32.xlu0 %v3646, 32
    %v3654 = vpop.permute.xlu0 %3653
    %3655 = vrot.lane.b32.xlu0 %v3647, 32
    %v3656 = vpop.permute.xlu0 %3655
    %v3657 = vsel %vm1538, %v3652, %v3654
    %v3658 = vsel %vm1538, %v3654, %v3656
    %v3661 = vadd.f32 %v3589, %v3657
    %v3662 = vadd.f32 %v3590, %v3658
    %s3663 = scalar_lea.vmem %s7, 86
    %v3664 = vld [vmem:[%s3663] sm:$0x3]
    %v3666 = vlaneseq
    %v3667 = vshrl.u32 %v3666, 7
    %v3668 = vsub.s32 0, %v3667
    %v3669 = vrot.slane %v3664, %v3668
    %v3670 = vlaneseq
    %v3671 = vshrl.u32 %v3670, 7
    %v3672 = vsub.s32 1, %v3671
    %v3673 = vrot.slane %v3664, %v3672
    %3674 = vrot.lane.b32.xlu0 %v3669, 97
    %v3675 = vpop.permute.xlu0 %3674
    %3676 = vrot.lane.b32.xlu0 %v3673, 97
    %v3677 = vpop.permute.xlu0 %3676
    %vm3678 = vcmask 793600
    %v3679 = vsel %vm3678, %v3675, %v3677
    %v3683 = vmul.f32 %v525, %v3675
    %v3684 = vmul.f32 %v521, %v3679
    %v3685 = vmul.f32 %v526, %v3677
    %s3686 = scalar_lea.vmem %s3, 344
    %v3687 = vld [vmem:[%s3686] sm:$0xff]
    %3689 = vset.pattern.permute.xlu0 0
    %3690 = vperm.xlu0 %3689, %v3687
    %v3691 = vpop.permute.xlu0 %3690
    %v3693 = vmul.f32 %v3683, %v3691
    %v3694 = vmul.f32 %v3684, %v3691
    %v3695 = vmul.f32 %v3685, %v3691
    %3699 = vrot.lane.b32.xlu0 %v3693, 31
    %v3700 = vpop.permute.xlu0 %3699
    %3701 = vrot.lane.b32.xlu0 %v3694, 31
    %v3702 = vpop.permute.xlu0 %3701
    %3703 = vrot.lane.b32.xlu0 %v3695, 31
    %v3704 = vpop.permute.xlu0 %3703
    %vm3705 = vcmask 252928
    %v3706 = vsel %vm3705, %v3700, %v3702
    %v3707 = vsel %vm3705, %v3702, %v3704
    %v3710 = vadd.f32 %v3636, %v3706
    %v3711 = vadd.f32 %v3637, %v3707
    %s3712 = scalar_lea.vmem %s5, 344
    %v3713 = vld [vmem:[%s3712] sm:$0xff]
    %3715 = vset.pattern.permute.xlu0 0
    %3716 = vperm.xlu0 %3715, %v3713
    %v3717 = vpop.permute.xlu0 %3716
    %v3719 = vmul.f32 %v3683, %v3717
    %v3720 = vmul.f32 %v3684, %v3717
    %v3721 = vmul.f32 %v3685, %v3717
    %3725 = vrot.lane.b32.xlu0 %v3719, 31
    %v3726 = vpop.permute.xlu0 %3725
    %3727 = vrot.lane.b32.xlu0 %v3720, 31
    %v3728 = vpop.permute.xlu0 %3727
    %3729 = vrot.lane.b32.xlu0 %v3721, 31
    %v3730 = vpop.permute.xlu0 %3729
    %v3731 = vsel %vm3705, %v3726, %v3728
    %v3732 = vsel %vm3705, %v3728, %v3730
    %v3735 = vadd.f32 %v3661, %v3731
    %v3736 = vadd.f32 %v3662, %v3732
    %s3737 = scalar_lea.vmem %s7, 88
    %v3738 = vld [vmem:[%s3737] sm:$0x3]
    %v3740 = vlaneseq
    %v3741 = vshrl.u32 %v3740, 7
    %v3742 = vsub.s32 0, %v3741
    %v3743 = vrot.slane %v3738, %v3742
    %v3744 = vlaneseq
    %v3745 = vshrl.u32 %v3744, 7
    %v3746 = vsub.s32 1, %v3745
    %v3747 = vrot.slane %v3738, %v3746
    %3748 = vrot.lane.b32.xlu0 %v3743, 98
    %v3749 = vpop.permute.xlu0 %3748
    %3750 = vrot.lane.b32.xlu0 %v3747, 98
    %v3751 = vpop.permute.xlu0 %3750
    %vm3752 = vcmask 801792
    %v3753 = vsel %vm3752, %v3749, %v3751
    %v3757 = vmul.f32 %v525, %v3749
    %v3758 = vmul.f32 %v521, %v3753
    %v3759 = vmul.f32 %v526, %v3751
    %s3760 = scalar_lea.vmem %s3, 352
    %v3761 = vld [vmem:[%s3760] sm:$0xff]
    %3763 = vset.pattern.permute.xlu0 0
    %3764 = vperm.xlu0 %3763, %v3761
    %v3765 = vpop.permute.xlu0 %3764
    %v3767 = vmul.f32 %v3757, %v3765
    %v3768 = vmul.f32 %v3758, %v3765
    %v3769 = vmul.f32 %v3759, %v3765
    %3773 = vrot.lane.b32.xlu0 %v3767, 30
    %v3774 = vpop.permute.xlu0 %3773
    %3775 = vrot.lane.b32.xlu0 %v3768, 30
    %v3776 = vpop.permute.xlu0 %3775
    %3777 = vrot.lane.b32.xlu0 %v3769, 30
    %v3778 = vpop.permute.xlu0 %3777
    %vm3779 = vcmask 244736
    %v3780 = vsel %vm3779, %v3774, %v3776
    %v3781 = vsel %vm3779, %v3776, %v3778
    %v3784 = vadd.f32 %v3710, %v3780
    %v3785 = vadd.f32 %v3711, %v3781
    %s3786 = scalar_lea.vmem %s5, 352
    %v3787 = vld [vmem:[%s3786] sm:$0xff]
    %3789 = vset.pattern.permute.xlu0 0
    %3790 = vperm.xlu0 %3789, %v3787
    %v3791 = vpop.permute.xlu0 %3790
    %v3793 = vmul.f32 %v3757, %v3791
    %v3794 = vmul.f32 %v3758, %v3791
    %v3795 = vmul.f32 %v3759, %v3791
    %3799 = vrot.lane.b32.xlu0 %v3793, 30
    %v3800 = vpop.permute.xlu0 %3799
    %3801 = vrot.lane.b32.xlu0 %v3794, 30
    %v3802 = vpop.permute.xlu0 %3801
    %3803 = vrot.lane.b32.xlu0 %v3795, 30
    %v3804 = vpop.permute.xlu0 %3803
    %v3805 = vsel %vm3779, %v3800, %v3802
    %v3806 = vsel %vm3779, %v3802, %v3804
    %v3809 = vadd.f32 %v3735, %v3805
    %v3810 = vadd.f32 %v3736, %v3806
    %s3811 = scalar_lea.vmem %s7, 90
    %v3812 = vld [vmem:[%s3811] sm:$0x3]
    %v3814 = vlaneseq
    %v3815 = vshrl.u32 %v3814, 7
    %v3816 = vsub.s32 0, %v3815
    %v3817 = vrot.slane %v3812, %v3816
    %v3818 = vlaneseq
    %v3819 = vshrl.u32 %v3818, 7
    %v3820 = vsub.s32 1, %v3819
    %v3821 = vrot.slane %v3812, %v3820
    %3822 = vrot.lane.b32.xlu0 %v3817, 99
    %v3823 = vpop.permute.xlu0 %3822
    %3824 = vrot.lane.b32.xlu0 %v3821, 99
    %v3825 = vpop.permute.xlu0 %3824
    %vm3826 = vcmask 809984
    %v3827 = vsel %vm3826, %v3823, %v3825
    %v3831 = vmul.f32 %v525, %v3823
    %v3832 = vmul.f32 %v521, %v3827
    %v3833 = vmul.f32 %v526, %v3825
    %s3834 = scalar_lea.vmem %s3, 360
    %v3835 = vld [vmem:[%s3834] sm:$0xff]
    %3837 = vset.pattern.permute.xlu0 0
    %3838 = vperm.xlu0 %3837, %v3835
    %v3839 = vpop.permute.xlu0 %3838
    %v3841 = vmul.f32 %v3831, %v3839
    %v3842 = vmul.f32 %v3832, %v3839
    %v3843 = vmul.f32 %v3833, %v3839
    %3847 = vrot.lane.b32.xlu0 %v3841, 29
    %v3848 = vpop.permute.xlu0 %3847
    %3849 = vrot.lane.b32.xlu0 %v3842, 29
    %v3850 = vpop.permute.xlu0 %3849
    %3851 = vrot.lane.b32.xlu0 %v3843, 29
    %v3852 = vpop.permute.xlu0 %3851
    %vm3853 = vcmask 236544
    %v3854 = vsel %vm3853, %v3848, %v3850
    %v3855 = vsel %vm3853, %v3850, %v3852
    %v3858 = vadd.f32 %v3784, %v3854
    %v3859 = vadd.f32 %v3785, %v3855
    %s3860 = scalar_lea.vmem %s5, 360
    %v3861 = vld [vmem:[%s3860] sm:$0xff]
    %3863 = vset.pattern.permute.xlu0 0
    %3864 = vperm.xlu0 %3863, %v3861
    %v3865 = vpop.permute.xlu0 %3864
    %v3867 = vmul.f32 %v3831, %v3865
    %v3868 = vmul.f32 %v3832, %v3865
    %v3869 = vmul.f32 %v3833, %v3865
    %3873 = vrot.lane.b32.xlu0 %v3867, 29
    %v3874 = vpop.permute.xlu0 %3873
    %3875 = vrot.lane.b32.xlu0 %v3868, 29
    %v3876 = vpop.permute.xlu0 %3875
    %3877 = vrot.lane.b32.xlu0 %v3869, 29
    %v3878 = vpop.permute.xlu0 %3877
    %v3879 = vsel %vm3853, %v3874, %v3876
    %v3880 = vsel %vm3853, %v3876, %v3878
    %v3883 = vadd.f32 %v3809, %v3879
    %v3884 = vadd.f32 %v3810, %v3880
    %s3885 = scalar_lea.vmem %s7, 92
    %v3886 = vld [vmem:[%s3885] sm:$0x3]
    %v3888 = vlaneseq
    %v3889 = vshrl.u32 %v3888, 7
    %v3890 = vsub.s32 0, %v3889
    %v3891 = vrot.slane %v3886, %v3890
    %v3892 = vlaneseq
    %v3893 = vshrl.u32 %v3892, 7
    %v3894 = vsub.s32 1, %v3893
    %v3895 = vrot.slane %v3886, %v3894
    %3896 = vrot.lane.b32.xlu0 %v3891, 100
    %v3897 = vpop.permute.xlu0 %3896
    %3898 = vrot.lane.b32.xlu0 %v3895, 100
    %v3899 = vpop.permute.xlu0 %3898
    %vm3900 = vcmask 818176
    %v3901 = vsel %vm3900, %v3897, %v3899
    %v3905 = vmul.f32 %v525, %v3897
    %v3906 = vmul.f32 %v521, %v3901
    %v3907 = vmul.f32 %v526, %v3899
    %s3908 = scalar_lea.vmem %s3, 368
    %v3909 = vld [vmem:[%s3908] sm:$0xff]
    %3911 = vset.pattern.permute.xlu0 0
    %3912 = vperm.xlu0 %3911, %v3909
    %v3913 = vpop.permute.xlu0 %3912
    %v3915 = vmul.f32 %v3905, %v3913
    %v3916 = vmul.f32 %v3906, %v3913
    %v3917 = vmul.f32 %v3907, %v3913
    %3921 = vrot.lane.b32.xlu0 %v3915, 28
    %v3922 = vpop.permute.xlu0 %3921
    %3923 = vrot.lane.b32.xlu0 %v3916, 28
    %v3924 = vpop.permute.xlu0 %3923
    %3925 = vrot.lane.b32.xlu0 %v3917, 28
    %v3926 = vpop.permute.xlu0 %3925
    %vm3927 = vcmask 228352
    %v3928 = vsel %vm3927, %v3922, %v3924
    %v3929 = vsel %vm3927, %v3924, %v3926
    %v3932 = vadd.f32 %v3858, %v3928
    %v3933 = vadd.f32 %v3859, %v3929
    %s3934 = scalar_lea.vmem %s5, 368
    %v3935 = vld [vmem:[%s3934] sm:$0xff]
    %3937 = vset.pattern.permute.xlu0 0
    %3938 = vperm.xlu0 %3937, %v3935
    %v3939 = vpop.permute.xlu0 %3938
    %v3941 = vmul.f32 %v3905, %v3939
    %v3942 = vmul.f32 %v3906, %v3939
    %v3943 = vmul.f32 %v3907, %v3939
    %3947 = vrot.lane.b32.xlu0 %v3941, 28
    %v3948 = vpop.permute.xlu0 %3947
    %3949 = vrot.lane.b32.xlu0 %v3942, 28
    %v3950 = vpop.permute.xlu0 %3949
    %3951 = vrot.lane.b32.xlu0 %v3943, 28
    %v3952 = vpop.permute.xlu0 %3951
    %v3953 = vsel %vm3927, %v3948, %v3950
    %v3954 = vsel %vm3927, %v3950, %v3952
    %v3957 = vadd.f32 %v3883, %v3953
    %v3958 = vadd.f32 %v3884, %v3954
    %s3959 = scalar_lea.vmem %s7, 94
    %v3960 = vld [vmem:[%s3959] sm:$0x3]
    %v3962 = vlaneseq
    %v3963 = vshrl.u32 %v3962, 7
    %v3964 = vsub.s32 0, %v3963
    %v3965 = vrot.slane %v3960, %v3964
    %v3966 = vlaneseq
    %v3967 = vshrl.u32 %v3966, 7
    %v3968 = vsub.s32 1, %v3967
    %v3969 = vrot.slane %v3960, %v3968
    %3970 = vrot.lane.b32.xlu0 %v3965, 101
    %v3971 = vpop.permute.xlu0 %3970
    %3972 = vrot.lane.b32.xlu0 %v3969, 101
    %v3973 = vpop.permute.xlu0 %3972
    %vm3974 = vcmask 826368
    %v3975 = vsel %vm3974, %v3971, %v3973
    %v3979 = vmul.f32 %v525, %v3971
    %v3980 = vmul.f32 %v521, %v3975
    %v3981 = vmul.f32 %v526, %v3973
    %s3982 = scalar_lea.vmem %s3, 376
    %v3983 = vld [vmem:[%s3982] sm:$0xff]
    %3985 = vset.pattern.permute.xlu0 0
    %3986 = vperm.xlu0 %3985, %v3983
    %v3987 = vpop.permute.xlu0 %3986
    %v3989 = vmul.f32 %v3979, %v3987
    %v3990 = vmul.f32 %v3980, %v3987
    %v3991 = vmul.f32 %v3981, %v3987
    %3995 = vrot.lane.b32.xlu0 %v3989, 27
    %v3996 = vpop.permute.xlu0 %3995
    %3997 = vrot.lane.b32.xlu0 %v3990, 27
    %v3998 = vpop.permute.xlu0 %3997
    %3999 = vrot.lane.b32.xlu0 %v3991, 27
    %v4000 = vpop.permute.xlu0 %3999
    %vm4001 = vcmask 220160
    %v4002 = vsel %vm4001, %v3996, %v3998
    %v4003 = vsel %vm4001, %v3998, %v4000
    %v4006 = vadd.f32 %v3932, %v4002
    %v4007 = vadd.f32 %v3933, %v4003
    %s4008 = scalar_lea.vmem %s5, 376
    %v4009 = vld [vmem:[%s4008] sm:$0xff]
    %4011 = vset.pattern.permute.xlu0 0
    %4012 = vperm.xlu0 %4011, %v4009
    %v4013 = vpop.permute.xlu0 %4012
    %v4015 = vmul.f32 %v3979, %v4013
    %v4016 = vmul.f32 %v3980, %v4013
    %v4017 = vmul.f32 %v3981, %v4013
    %4021 = vrot.lane.b32.xlu0 %v4015, 27
    %v4022 = vpop.permute.xlu0 %4021
    %4023 = vrot.lane.b32.xlu0 %v4016, 27
    %v4024 = vpop.permute.xlu0 %4023
    %4025 = vrot.lane.b32.xlu0 %v4017, 27
    %v4026 = vpop.permute.xlu0 %4025
    %v4027 = vsel %vm4001, %v4022, %v4024
    %v4028 = vsel %vm4001, %v4024, %v4026
    %v4031 = vadd.f32 %v3957, %v4027
    %v4032 = vadd.f32 %v3958, %v4028
    %s4033 = scalar_lea.vmem %s7, 96
    %v4034 = vld [vmem:[%s4033] sm:$0x3]
    %v4036 = vlaneseq
    %v4037 = vshrl.u32 %v4036, 7
    %v4038 = vsub.s32 0, %v4037
    %v4039 = vrot.slane %v4034, %v4038
    %v4040 = vlaneseq
    %v4041 = vshrl.u32 %v4040, 7
    %v4042 = vsub.s32 1, %v4041
    %v4043 = vrot.slane %v4034, %v4042
    %4044 = vrot.lane.b32.xlu0 %v4039, 102
    %v4045 = vpop.permute.xlu0 %4044
    %4046 = vrot.lane.b32.xlu0 %v4043, 102
    %v4047 = vpop.permute.xlu0 %4046
    %vm4048 = vcmask 834560
    %v4049 = vsel %vm4048, %v4045, %v4047
    %v4053 = vmul.f32 %v525, %v4045
    %v4054 = vmul.f32 %v521, %v4049
    %v4055 = vmul.f32 %v526, %v4047
    %s4056 = scalar_lea.vmem %s3, 384
    %v4057 = vld [vmem:[%s4056] sm:$0xff]
    %4059 = vset.pattern.permute.xlu0 0
    %4060 = vperm.xlu0 %4059, %v4057
    %v4061 = vpop.permute.xlu0 %4060
    %v4063 = vmul.f32 %v4053, %v4061
    %v4064 = vmul.f32 %v4054, %v4061
    %v4065 = vmul.f32 %v4055, %v4061
    %4069 = vrot.lane.b32.xlu0 %v4063, 26
    %v4070 = vpop.permute.xlu0 %4069
    %4071 = vrot.lane.b32.xlu0 %v4064, 26
    %v4072 = vpop.permute.xlu0 %4071
    %4073 = vrot.lane.b32.xlu0 %v4065, 26
    %v4074 = vpop.permute.xlu0 %4073
    %vm4075 = vcmask 211968
    %v4076 = vsel %vm4075, %v4070, %v4072
    %v4077 = vsel %vm4075, %v4072, %v4074
    %v4080 = vadd.f32 %v4006, %v4076
    %v4081 = vadd.f32 %v4007, %v4077
    %s4082 = scalar_lea.vmem %s5, 384
    %v4083 = vld [vmem:[%s4082] sm:$0xff]
    %4085 = vset.pattern.permute.xlu0 0
    %4086 = vperm.xlu0 %4085, %v4083
    %v4087 = vpop.permute.xlu0 %4086
    %v4089 = vmul.f32 %v4053, %v4087
    %v4090 = vmul.f32 %v4054, %v4087
    %v4091 = vmul.f32 %v4055, %v4087
    %4095 = vrot.lane.b32.xlu0 %v4089, 26
    %v4096 = vpop.permute.xlu0 %4095
    %4097 = vrot.lane.b32.xlu0 %v4090, 26
    %v4098 = vpop.permute.xlu0 %4097
    %4099 = vrot.lane.b32.xlu0 %v4091, 26
    %v4100 = vpop.permute.xlu0 %4099
    %v4101 = vsel %vm4075, %v4096, %v4098
    %v4102 = vsel %vm4075, %v4098, %v4100
    %v4105 = vadd.f32 %v4031, %v4101
    %v4106 = vadd.f32 %v4032, %v4102
    %v4107 = vld [vmem:[%s4] sm:$0xff]
    %4109 = vset.pattern.permute.xlu0 0
    %4110 = vperm.xlu0 %4109, %v4107
    %v4111 = vpop.permute.xlu0 %4110
    %v4113 = vadd.f32 %v4080, %v4111
    %v4114 = vadd.f32 %v4081, %v4111
    %v4115 = vld [vmem:[%s6] sm:$0xff]
    %4117 = vset.pattern.permute.xlu0 0
    %4118 = vperm.xlu0 %4117, %v4115
    %v4119 = vpop.permute.xlu0 %4118
    %v4121 = vadd.f32 %v4105, %v4119
    %v4122 = vadd.f32 %v4106, %v4119
    %v4123 = vmul.f32 %v4113, 0.5
    %v4124 = vmul.f32 %v4114, 0.5
    %v4125 = vmul.f32 %v4113, 0.70710677
    %v4126 = vmul.f32 %v4114, 0.70710677
    %v4127 = verf.f32.pop %v4125
    %v4128 = verf.f32.pop %v4126
    %v4129 = vadd.f32 %v4127, 1.0
    %v4130 = vadd.f32 %v4128, 1.0
    %v4131 = vmul.f32 %v4123, %v4129
    %v4132 = vmul.f32 %v4124, %v4130
    %v4133 = vxor.u32 %v4121, 2147483648
    %v4134 = vxor.u32 %v4122, 2147483648
    %v4135 = vmul.f32 %v4133, 1.442695
    %v4136 = vpow.pop %v4135
    %v4137 = vmul.f32 %v4134, 1.442695
    %v4138 = vpow.pop %v4137
    %v4139 = vadd.f32 %v4136, 1.0
    %v4140 = vadd.f32 %v4138, 1.0
    %v4141 = vrcp.pop %v4139
    %v4142 = vmul.f32 1.0, %v4141
    %v4143 = vrcp.pop %v4140
    %v4144 = vmul.f32 1.0, %v4143
    %v4145 = vmul.f32 %v4131, %v4142
    %v4146 = vmul.f32 %v4132, %v4144
    %v4147 = vld [vmem:[%s8] sm:$0xff]
    %v4148 = vld [vmem:[%s9] sm:$0xff]
    %4150 = vset.pattern.permute.xlu0 0
    %4151 = vperm.xlu0 %4150, %v4148
    %v4152 = vpop.permute.xlu0 %4151
    %v4155 = vsel %vm45, %v4147, 0
    %v4157 = vand.u32 %v4146, 4294901760
    %4158 = vmatprep.subr.mxu0 %v4157
    %v4159 = vand.u32 %v4145, 4294901760
    %4160 = vmatpush1.msra.mxu0 %v4159
    %4161 = vmatprep.subr.mxu0 0.0
    %4162 = vmatpush1.msra.mxu0 0.0
    %4163 = vmatprep.subr.mxu0 0.0
    %4164 = vmatpush1.msra.mxu0 0.0
    %4165 = vmatprep.subr.mxu0 0.0
    %4166 = vmatpush1.msra.mxu0 0.0
    %4167 = vmatprep.subr.mxu0 0.0
    %4168 = vmatpush1.msra.mxu0 0.0
    %4169 = vmatprep.subr.mxu0 0.0
    %4170 = vmatpush1.msra.mxu0 0.0
    %4171 = vmatprep.subr.mxu0 0.0
    %4172 = vmatpush1.msra.mxu0 0.0
    %4173 = vmatprep.subr.mxu0 0.0
    %4174 = vmatpush1.msra.mxu0 0.0
    %4175 = vmatprep.subr.mxu0 0.0
    %4176 = vmatpush1.msra.mxu0 0.0
    %4177 = vmatprep.subr.mxu0 0.0
    %4178 = vmatpush1.msra.mxu0 0.0
    %4179 = vmatprep.subr.mxu0 0.0
    %4180 = vmatpush1.msra.mxu0 0.0
    %4181 = vmatprep.subr.mxu0 0.0
    %4182 = vmatpush1.msra.mxu0 0.0
    %4183 = vmatprep.subr.mxu0 0.0
    %4184 = vmatpush1.msra.mxu0 0.0
    %4185 = vmatprep.subr.mxu0 0.0
    %4186 = vmatpush1.msra.mxu0 0.0
    %4187 = vmatprep.subr.mxu0 0.0
    %4188 = vmatpush1.msra.mxu0 0.0
    %4189 = vmatprep.subr.mxu0 0.0
    %4190 = vmatpush1.msra.mxu0 0.0
    %4191 = vmatprep.subr.mxu0 0.0
    %4192 = vmatpush1.msra.mxu0 0.0
    %4193 = vmatprep.subr.mxu0 0.0
    %4194 = vmatpush1.msra.mxu0 0.0
    %4195 = vmatprep.subr.mxu0 0.0
    %4196 = vmatpush1.msra.mxu0 0.0
    %4197 = vmatprep.subr.mxu0 0.0
    %4198 = vmatpush1.msra.mxu0 0.0
    %4199 = vmatprep.subr.mxu0 0.0
    %4200 = vmatpush1.msra.mxu0 0.0
    %4201 = vmatprep.subr.mxu0 0.0
    %4202 = vmatpush1.msra.mxu0 0.0
    %4203 = vmatprep.subr.mxu0 0.0
    %4204 = vmatpush1.msra.mxu0 0.0
    %4205 = vmatprep.subr.mxu0 0.0
    %4206 = vmatpush1.msra.mxu0 0.0
    %4207 = vmatprep.subr.mxu0 0.0
    %4208 = vmatpush1.msra.mxu0 0.0
    %4209 = vmatprep.subr.mxu0 0.0
    %4210 = vmatpush1.msra.mxu0 0.0
    %4211 = vmatprep.subr.mxu0 0.0
    %4212 = vmatpush1.msra.mxu0 0.0
    %4213 = vmatprep.subr.mxu0 0.0
    %4214 = vmatpush1.msra.mxu0 0.0
    %4215 = vmatprep.subr.mxu0 0.0
    %4216 = vmatpush1.msra.mxu0 0.0
    %4217 = vmatprep.subr.mxu0 0.0
    %4218 = vmatpush1.msra.mxu0 0.0
    %4219 = vmatprep.subr.mxu0 0.0
    %4220 = vmatpush1.msra.mxu0 0.0
    %4221 = vmatprep.subr.mxu0 0.0
    %4222 = vmatpush1.msra.mxu0 0.0
    %4223 = vmatprep.mubr.f32.mxu0 0.0
    %v4224 = vand.u32 %v4155, 4294901760
    %v4225 = vsub.f32 %v4155, %v4224
    %v4226 = vand.u32 %v4225, 4294901760
    %v4227 = vsub.f32 %v4225, %v4226
    %v4228 = vand.u32 %v4227, 4294901760
    %4229 = vmatmul.mubr.f32.gmra.mrb[0].mxu0 %v4228
    %v4230 = vpop.f32.mrb[0].mxu0
    %v4231 = vadd.f32 %v4152, %v4230
    %v4232 = vpop.f32.mrb[0].mxu0
    %v4233 = vadd.f32 %v4152, %v4232
    %4234 = vdwg.mxu0
    %v4235 = vand.u32 %v4146, 4294901760
    %v4236 = vsub.f32 %v4146, %v4235
    %v4237 = vand.u32 %v4236, 4294901760
    %v4238 = vsub.f32 %v4236, %v4237
    %v4239 = vand.u32 %v4238, 4294901760
    %4240 = vmatprep.subr.mxu0 %v4239
    %v4241 = vand.u32 %v4145, 4294901760
    %v4242 = vsub.f32 %v4145, %v4241
    %v4243 = vand.u32 %v4242, 4294901760
    %v4244 = vsub.f32 %v4242, %v4243
    %v4245 = vand.u32 %v4244, 4294901760
    %4246 = vmatpush1.msra.mxu0 %v4245
    %4247 = vmatprep.subr.mxu0 0.0
    %4248 = vmatpush1.msra.mxu0 0.0
    %4249 = vmatprep.subr.mxu0 0.0
    %4250 = vmatpush1.msra.mxu0 0.0
    %4251 = vmatprep.subr.mxu0 0.0
    %4252 = vmatpush1.msra.mxu0 0.0
    %4253 = vmatprep.subr.mxu0 0.0
    %4254 = vmatpush1.msra.mxu0 0.0
    %4255 = vmatprep.subr.mxu0 0.0
    %4256 = vmatpush1.msra.mxu0 0.0
    %4257 = vmatprep.subr.mxu0 0.0
    %4258 = vmatpush1.msra.mxu0 0.0
    %4259 = vmatprep.subr.mxu0 0.0
    %4260 = vmatpush1.msra.mxu0 0.0
    %4261 = vmatprep.subr.mxu0 0.0
    %4262 = vmatpush1.msra.mxu0 0.0
    %4263 = vmatprep.subr.mxu0 0.0
    %4264 = vmatpush1.msra.mxu0 0.0
    %4265 = vmatprep.subr.mxu0 0.0
    %4266 = vmatpush1.msra.mxu0 0.0
    %4267 = vmatprep.subr.mxu0 0.0
    %4268 = vmatpush1.msra.mxu0 0.0
    %4269 = vmatprep.subr.mxu0 0.0
    %4270 = vmatpush1.msra.mxu0 0.0
    %4271 = vmatprep.subr.mxu0 0.0
    %4272 = vmatpush1.msra.mxu0 0.0
    %4273 = vmatprep.subr.mxu0 0.0
    %4274 = vmatpush1.msra.mxu0 0.0
    %4275 = vmatprep.subr.mxu0 0.0
    %4276 = vmatpush1.msra.mxu0 0.0
    %4277 = vmatprep.subr.mxu0 0.0
    %4278 = vmatpush1.msra.mxu0 0.0
    %4279 = vmatprep.subr.mxu0 0.0
    %4280 = vmatpush1.msra.mxu0 0.0
    %4281 = vmatprep.subr.mxu0 0.0
    %4282 = vmatpush1.msra.mxu0 0.0
    %4283 = vmatprep.subr.mxu0 0.0
    %4284 = vmatpush1.msra.mxu0 0.0
    %4285 = vmatprep.subr.mxu0 0.0
    %4286 = vmatpush1.msra.mxu0 0.0
    %4287 = vmatprep.subr.mxu0 0.0
    %4288 = vmatpush1.msra.mxu0 0.0
    %4289 = vmatprep.subr.mxu0 0.0
    %4290 = vmatpush1.msra.mxu0 0.0
    %4291 = vmatprep.subr.mxu0 0.0
    %4292 = vmatpush1.msra.mxu0 0.0
    %4293 = vmatprep.subr.mxu0 0.0
    %4294 = vmatpush1.msra.mxu0 0.0
    %4295 = vmatprep.subr.mxu0 0.0
    %4296 = vmatpush1.msra.mxu0 0.0
    %4297 = vmatprep.subr.mxu0 0.0
    %4298 = vmatpush1.msra.mxu0 0.0
    %4299 = vmatprep.subr.mxu0 0.0
    %4300 = vmatpush1.msra.mxu0 0.0
    %4301 = vmatprep.subr.mxu0 0.0
    %4302 = vmatpush1.msra.mxu0 0.0
    %4303 = vmatprep.subr.mxu0 0.0
    %4304 = vmatpush1.msra.mxu0 0.0
    %4305 = vmatprep.subr.mxu0 0.0
    %4306 = vmatpush1.msra.mxu0 0.0
    %4307 = vmatprep.subr.mxu0 0.0
    %4308 = vmatpush1.msra.mxu0 0.0
    %4309 = vmatprep.mubr.f32.mxu0 0.0
    %v4310 = vand.u32 %v4155, 4294901760
    %4311 = vmatmul.mubr.f32.gmra.mrb[0].mxu0 %v4310
    %v4312 = vpop.f32.mrb[0].mxu0
    %v4313 = vadd.f32 %v4231, %v4312
    %v4314 = vpop.f32.mrb[0].mxu0
    %v4315 = vadd.f32 %v4233, %v4314
    %4316 = vdwg.mxu0
    %v4317 = vand.u32 %v4146, 4294901760
    %v4318 = vsub.f32 %v4146, %v4317
    %4319 = vmatprep.subr.mxu0 %v4318
    %v4320 = vand.u32 %v4145, 4294901760
    %v4321 = vsub.f32 %v4145, %v4320
    %4322 = vmatpush1.msra.mxu0 %v4321
    %4323 = vmatprep.subr.mxu0 0.0
    %4324 = vmatpush1.msra.mxu0 0.0
    %4325 = vmatprep.subr.mxu0 0.0
    %4326 = vmatpush1.msra.mxu0 0.0
    %4327 = vmatprep.subr.mxu0 0.0
    %4328 = vmatpush1.msra.mxu0 0.0
    %4329 = vmatprep.subr.mxu0 0.0
    %4330 = vmatpush1.msra.mxu0 0.0
    %4331 = vmatprep.subr.mxu0 0.0
    %4332 = vmatpush1.msra.mxu0 0.0
    %4333 = vmatprep.subr.mxu0 0.0
    %4334 = vmatpush1.msra.mxu0 0.0
    %4335 = vmatprep.subr.mxu0 0.0
    %4336 = vmatpush1.msra.mxu0 0.0
    %4337 = vmatprep.subr.mxu0 0.0
    %4338 = vmatpush1.msra.mxu0 0.0
    %4339 = vmatprep.subr.mxu0 0.0
    %4340 = vmatpush1.msra.mxu0 0.0
    %4341 = vmatprep.subr.mxu0 0.0
    %4342 = vmatpush1.msra.mxu0 0.0
    %4343 = vmatprep.subr.mxu0 0.0
    %4344 = vmatpush1.msra.mxu0 0.0
    %4345 = vmatprep.subr.mxu0 0.0
    %4346 = vmatpush1.msra.mxu0 0.0
    %4347 = vmatprep.subr.mxu0 0.0
    %4348 = vmatpush1.msra.mxu0 0.0
    %4349 = vmatprep.subr.mxu0 0.0
    %4350 = vmatpush1.msra.mxu0 0.0
    %4351 = vmatprep.subr.mxu0 0.0
    %4352 = vmatpush1.msra.mxu0 0.0
    %4353 = vmatprep.subr.mxu0 0.0
    %4354 = vmatpush1.msra.mxu0 0.0
    %4355 = vmatprep.subr.mxu0 0.0
    %4356 = vmatpush1.msra.mxu0 0.0
    %4357 = vmatprep.subr.mxu0 0.0
    %4358 = vmatpush1.msra.mxu0 0.0
    %4359 = vmatprep.subr.mxu0 0.0
    %4360 = vmatpush1.msra.mxu0 0.0
    %4361 = vmatprep.subr.mxu0 0.0
    %4362 = vmatpush1.msra.mxu0 0.0
    %4363 = vmatprep.subr.mxu0 0.0
    %4364 = vmatpush1.msra.mxu0 0.0
    %4365 = vmatprep.subr.mxu0 0.0
    %4366 = vmatpush1.msra.mxu0 0.0
    %4367 = vmatprep.subr.mxu0 0.0
    %4368 = vmatpush1.msra.mxu0 0.0
    %4369 = vmatprep.subr.mxu0 0.0
    %4370 = vmatpush1.msra.mxu0 0.0
    %4371 = vmatprep.subr.mxu0 0.0
    %4372 = vmatpush1.msra.mxu0 0.0
    %4373 = vmatprep.subr.mxu0 0.0
    %4374 = vmatpush1.msra.mxu0 0.0
    %4375 = vmatprep.subr.mxu0 0.0
    %4376 = vmatpush1.msra.mxu0 0.0
    %4377 = vmatprep.subr.mxu0 0.0
    %4378 = vmatpush1.msra.mxu0 0.0
    %4379 = vmatprep.subr.mxu0 0.0
    %4380 = vmatpush1.msra.mxu0 0.0
    %4381 = vmatprep.subr.mxu0 0.0
    %4382 = vmatpush1.msra.mxu0 0.0
    %4383 = vmatprep.subr.mxu0 0.0
    %4384 = vmatpush1.msra.mxu0 0.0
    %4385 = vmatprep.mubr.f32.mxu0 0.0
    %v4386 = vand.u32 %v4155, 4294901760
    %v4387 = vsub.f32 %v4155, %v4386
    %4388 = vmatmul.mubr.f32.gmra.mrb[0].mxu0 %v4387
    %v4389 = vpop.f32.mrb[0].mxu0
    %v4390 = vadd.f32 %v4313, %v4389
    %v4391 = vpop.f32.mrb[0].mxu0
    %v4392 = vadd.f32 %v4315, %v4391
    %4393 = vdwg.mxu0
    %v4394 = vand.u32 %v4146, 4294901760
    %4395 = vmatprep.subr.mxu0 %v4394
    %v4396 = vand.u32 %v4145, 4294901760
    %4397 = vmatpush1.msra.mxu0 %v4396
    %4398 = vmatprep.subr.mxu0 0.0
    %4399 = vmatpush1.msra.mxu0 0.0
    %4400 = vmatprep.subr.mxu0 0.0
    %4401 = vmatpush1.msra.mxu0 0.0
    %4402 = vmatprep.subr.mxu0 0.0
    %4403 = vmatpush1.msra.mxu0 0.0
    %4404 = vmatprep.subr.mxu0 0.0
    %4405 = vmatpush1.msra.mxu0 0.0
    %4406 = vmatprep.subr.mxu0 0.0
    %4407 = vmatpush1.msra.mxu0 0.0
    %4408 = vmatprep.subr.mxu0 0.0
    %4409 = vmatpush1.msra.mxu0 0.0
    %4410 = vmatprep.subr.mxu0 0.0
    %4411 = vmatpush1.msra.mxu0 0.0
    %4412 = vmatprep.subr.mxu0 0.0
    %4413 = vmatpush1.msra.mxu0 0.0
    %4414 = vmatprep.subr.mxu0 0.0
    %4415 = vmatpush1.msra.mxu0 0.0
    %4416 = vmatprep.subr.mxu0 0.0
    %4417 = vmatpush1.msra.mxu0 0.0
    %4418 = vmatprep.subr.mxu0 0.0
    %4419 = vmatpush1.msra.mxu0 0.0
    %4420 = vmatprep.subr.mxu0 0.0
    %4421 = vmatpush1.msra.mxu0 0.0
    %4422 = vmatprep.subr.mxu0 0.0
    %4423 = vmatpush1.msra.mxu0 0.0
    %4424 = vmatprep.subr.mxu0 0.0
    %4425 = vmatpush1.msra.mxu0 0.0
    %4426 = vmatprep.subr.mxu0 0.0
    %4427 = vmatpush1.msra.mxu0 0.0
    %4428 = vmatprep.subr.mxu0 0.0
    %4429 = vmatpush1.msra.mxu0 0.0
    %4430 = vmatprep.subr.mxu0 0.0
    %4431 = vmatpush1.msra.mxu0 0.0
    %4432 = vmatprep.subr.mxu0 0.0
    %4433 = vmatpush1.msra.mxu0 0.0
    %4434 = vmatprep.subr.mxu0 0.0
    %4435 = vmatpush1.msra.mxu0 0.0
    %4436 = vmatprep.subr.mxu0 0.0
    %4437 = vmatpush1.msra.mxu0 0.0
    %4438 = vmatprep.subr.mxu0 0.0
    %4439 = vmatpush1.msra.mxu0 0.0
    %4440 = vmatprep.subr.mxu0 0.0
    %4441 = vmatpush1.msra.mxu0 0.0
    %4442 = vmatprep.subr.mxu0 0.0
    %4443 = vmatpush1.msra.mxu0 0.0
    %4444 = vmatprep.subr.mxu0 0.0
    %4445 = vmatpush1.msra.mxu0 0.0
    %4446 = vmatprep.subr.mxu0 0.0
    %4447 = vmatpush1.msra.mxu0 0.0
    %4448 = vmatprep.subr.mxu0 0.0
    %4449 = vmatpush1.msra.mxu0 0.0
    %4450 = vmatprep.subr.mxu0 0.0
    %4451 = vmatpush1.msra.mxu0 0.0
    %4452 = vmatprep.subr.mxu0 0.0
    %4453 = vmatpush1.msra.mxu0 0.0
    %4454 = vmatprep.subr.mxu0 0.0
    %4455 = vmatpush1.msra.mxu0 0.0
    %4456 = vmatprep.subr.mxu0 0.0
    %4457 = vmatpush1.msra.mxu0 0.0
    %4458 = vmatprep.subr.mxu0 0.0
    %4459 = vmatpush1.msra.mxu0 0.0
    %4460 = vmatprep.mubr.f32.mxu0 0.0
    %v4461 = vand.u32 %v4155, 4294901760
    %v4462 = vsub.f32 %v4155, %v4461
    %v4463 = vand.u32 %v4462, 4294901760
    %4464 = vmatmul.mubr.f32.gmra.mrb[0].mxu0 %v4463
    %v4465 = vpop.f32.mrb[0].mxu0
    %v4466 = vadd.f32 %v4390, %v4465
    %v4467 = vpop.f32.mrb[0].mxu0
    %v4468 = vadd.f32 %v4392, %v4467
    %4469 = vdwg.mxu0
    %v4470 = vand.u32 %v4146, 4294901760
    %v4471 = vsub.f32 %v4146, %v4470
    %v4472 = vand.u32 %v4471, 4294901760
    %4473 = vmatprep.subr.mxu0 %v4472
    %v4474 = vand.u32 %v4145, 4294901760
    %v4475 = vsub.f32 %v4145, %v4474
    %v4476 = vand.u32 %v4475, 4294901760
    %4477 = vmatpush1.msra.mxu0 %v4476
    %4478 = vmatprep.subr.mxu0 0.0
    %4479 = vmatpush1.msra.mxu0 0.0
    %4480 = vmatprep.subr.mxu0 0.0
    %4481 = vmatpush1.msra.mxu0 0.0
    %4482 = vmatprep.subr.mxu0 0.0
    %4483 = vmatpush1.msra.mxu0 0.0
    %4484 = vmatprep.subr.mxu0 0.0
    %4485 = vmatpush1.msra.mxu0 0.0
    %4486 = vmatprep.subr.mxu0 0.0
    %4487 = vmatpush1.msra.mxu0 0.0
    %4488 = vmatprep.subr.mxu0 0.0
    %4489 = vmatpush1.msra.mxu0 0.0
    %4490 = vmatprep.subr.mxu0 0.0
    %4491 = vmatpush1.msra.mxu0 0.0
    %4492 = vmatprep.subr.mxu0 0.0
    %4493 = vmatpush1.msra.mxu0 0.0
    %4494 = vmatprep.subr.mxu0 0.0
    %4495 = vmatpush1.msra.mxu0 0.0
    %4496 = vmatprep.subr.mxu0 0.0
    %4497 = vmatpush1.msra.mxu0 0.0
    %4498 = vmatprep.subr.mxu0 0.0
    %4499 = vmatpush1.msra.mxu0 0.0
    %4500 = vmatprep.subr.mxu0 0.0
    %4501 = vmatpush1.msra.mxu0 0.0
    %4502 = vmatprep.subr.mxu0 0.0
    %4503 = vmatpush1.msra.mxu0 0.0
    %4504 = vmatprep.subr.mxu0 0.0
    %4505 = vmatpush1.msra.mxu0 0.0
    %4506 = vmatprep.subr.mxu0 0.0
    %4507 = vmatpush1.msra.mxu0 0.0
    %4508 = vmatprep.subr.mxu0 0.0
    %4509 = vmatpush1.msra.mxu0 0.0
    %4510 = vmatprep.subr.mxu0 0.0
    %4511 = vmatpush1.msra.mxu0 0.0
    %4512 = vmatprep.subr.mxu0 0.0
    %4513 = vmatpush1.msra.mxu0 0.0
    %4514 = vmatprep.subr.mxu0 0.0
    %4515 = vmatpush1.msra.mxu0 0.0
    %4516 = vmatprep.subr.mxu0 0.0
    %4517 = vmatpush1.msra.mxu0 0.0
    %4518 = vmatprep.subr.mxu0 0.0
    %4519 = vmatpush1.msra.mxu0 0.0
    %4520 = vmatprep.subr.mxu0 0.0
    %4521 = vmatpush1.msra.mxu0 0.0
    %4522 = vmatprep.subr.mxu0 0.0
    %4523 = vmatpush1.msra.mxu0 0.0
    %4524 = vmatprep.subr.mxu0 0.0
    %4525 = vmatpush1.msra.mxu0 0.0
    %4526 = vmatprep.subr.mxu0 0.0
    %4527 = vmatpush1.msra.mxu0 0.0
    %4528 = vmatprep.subr.mxu0 0.0
    %4529 = vmatpush1.msra.mxu0 0.0
    %4530 = vmatprep.subr.mxu0 0.0
    %4531 = vmatpush1.msra.mxu0 0.0
    %4532 = vmatprep.subr.mxu0 0.0
    %4533 = vmatpush1.msra.mxu0 0.0
    %4534 = vmatprep.subr.mxu0 0.0
    %4535 = vmatpush1.msra.mxu0 0.0
    %4536 = vmatprep.subr.mxu0 0.0
    %4537 = vmatpush1.msra.mxu0 0.0
    %4538 = vmatprep.subr.mxu0 0.0
    %4539 = vmatpush1.msra.mxu0 0.0
    %4540 = vmatprep.mubr.f32.mxu0 0.0
    %v4541 = vand.u32 %v4155, 4294901760
    %4542 = vmatmul.mubr.f32.gmra.mrb[0].mxu0 %v4541
    %v4543 = vpop.f32.mrb[0].mxu0
    %v4544 = vadd.f32 %v4466, %v4543
    %v4545 = vpop.f32.mrb[0].mxu0
    %v4546 = vadd.f32 %v4468, %v4545
    %4547 = vdwg.mxu0
    %v4548 = vand.u32 %v4146, 4294901760
    %4549 = vmatprep.subr.mxu0 %v4548
    %v4550 = vand.u32 %v4145, 4294901760
    %4551 = vmatpush1.msra.mxu0 %v4550
    %4552 = vmatprep.subr.mxu0 0.0
    %4553 = vmatpush1.msra.mxu0 0.0
    %4554 = vmatprep.subr.mxu0 0.0
    %4555 = vmatpush1.msra.mxu0 0.0
    %4556 = vmatprep.subr.mxu0 0.0
    %4557 = vmatpush1.msra.mxu0 0.0
    %4558 = vmatprep.subr.mxu0 0.0
    %4559 = vmatpush1.msra.mxu0 0.0
    %4560 = vmatprep.subr.mxu0 0.0
    %4561 = vmatpush1.msra.mxu0 0.0
    %4562 = vmatprep.subr.mxu0 0.0
    %4563 = vmatpush1.msra.mxu0 0.0
    %4564 = vmatprep.subr.mxu0 0.0
    %4565 = vmatpush1.msra.mxu0 0.0
    %4566 = vmatprep.subr.mxu0 0.0
    %4567 = vmatpush1.msra.mxu0 0.0
    %4568 = vmatprep.subr.mxu0 0.0
    %4569 = vmatpush1.msra.mxu0 0.0
    %4570 = vmatprep.subr.mxu0 0.0
    %4571 = vmatpush1.msra.mxu0 0.0
    %4572 = vmatprep.subr.mxu0 0.0
    %4573 = vmatpush1.msra.mxu0 0.0
    %4574 = vmatprep.subr.mxu0 0.0
    %4575 = vmatpush1.msra.mxu0 0.0
    %4576 = vmatprep.subr.mxu0 0.0
    %4577 = vmatpush1.msra.mxu0 0.0
    %4578 = vmatprep.subr.mxu0 0.0
    %4579 = vmatpush1.msra.mxu0 0.0
    %4580 = vmatprep.subr.mxu0 0.0
    %4581 = vmatpush1.msra.mxu0 0.0
    %4582 = vmatprep.subr.mxu0 0.0
    %4583 = vmatpush1.msra.mxu0 0.0
    %4584 = vmatprep.subr.mxu0 0.0
    %4585 = vmatpush1.msra.mxu0 0.0
    %4586 = vmatprep.subr.mxu0 0.0
    %4587 = vmatpush1.msra.mxu0 0.0
    %4588 = vmatprep.subr.mxu0 0.0
    %4589 = vmatpush1.msra.mxu0 0.0
    %4590 = vmatprep.subr.mxu0 0.0
    %4591 = vmatpush1.msra.mxu0 0.0
    %4592 = vmatprep.subr.mxu0 0.0
    %4593 = vmatpush1.msra.mxu0 0.0
    %4594 = vmatprep.subr.mxu0 0.0
    %4595 = vmatpush1.msra.mxu0 0.0
    %4596 = vmatprep.subr.mxu0 0.0
    %4597 = vmatpush1.msra.mxu0 0.0
    %4598 = vmatprep.subr.mxu0 0.0
    %4599 = vmatpush1.msra.mxu0 0.0
    %4600 = vmatprep.subr.mxu0 0.0
    %4601 = vmatpush1.msra.mxu0 0.0
    %4602 = vmatprep.subr.mxu0 0.0
    %4603 = vmatpush1.msra.mxu0 0.0
    %4604 = vmatprep.subr.mxu0 0.0
    %4605 = vmatpush1.msra.mxu0 0.0
    %4606 = vmatprep.subr.mxu0 0.0
    %4607 = vmatpush1.msra.mxu0 0.0
    %4608 = vmatprep.subr.mxu0 0.0
    %4609 = vmatpush1.msra.mxu0 0.0
    %4610 = vmatprep.subr.mxu0 0.0
    %4611 = vmatpush1.msra.mxu0 0.0
    %4612 = vmatprep.subr.mxu0 0.0
    %4613 = vmatpush1.msra.mxu0 0.0
    %4614 = vmatprep.mubr.f32.mxu0 0.0
    %v4615 = vand.u32 %v4155, 4294901760
    %4616 = vmatmul.mubr.f32.gmra.mrb[0].mxu0 %v4615
    %v4617 = vpop.f32.mrb[0].mxu0
    %v4618 = vadd.f32 %v4544, %v4617
    %v4619 = vpop.f32.mrb[0].mxu0
    %v4620 = vadd.f32 %v4546, %v4619
    %4621 = vdwg.mxu0
    %4622 = vst [vmem:[#allocation2] sm:$0xff] %v4618
    %4623 = vst [vmem:[#allocation2 + $0x8] sm:$0xff] %v4620
    // Predicated region
    $region42: #{tpu_custom_call.1} parent=1 // pred_check
      _
    $region43: #{tpu_custom_call.1} parent=1 // pred_check_branch
      %4625 = sbr.rel (0) target = $region45
    $region44: #{tpu_custom_call.1} parent=1 // pred_region
      %s4627 = ssub.s32 256, 256
      %4628 = vsyncadd [#allocation3], %s4627
      %s4630 = sshll.u32 [#allocation2], 4
      %s4631 = int_to_ptr.vmem [resolvable:$true] %s4630
      %4633 = dma.vmem_to_hbm [thread:$0]  %s4631, 256, %s10, [#allocation3]
    $region45: #{tpu_custom_call.1} parent=1 // pred_fallthru
      _
    // Predicated region
    $region46: #{tpu_custom_call.1} parent=1 // pred_check
      _
    $region47: #{tpu_custom_call.1} parent=1 // pred_check_branch
      %4635 = sbr.rel (0) target = $region49
    $region48: #{tpu_custom_call.1} parent=1 // pred_region
      %4636 = dma.done [#allocation3], 256
    $region49: #{tpu_custom_call.1} parent=1 // pred_fallthru
      _
    %4637 = vsyncpa [#allocation3], 1

</llo_original>
